<compile_context>
chip_gen: v7x
topology: tpu7x:2x2x1
jax: 0.10.0
libtpu: 0.0.40
codegen_flags: <defaults>
</compile_context>

<pallas_src>
import functools

import jax
import jax.numpy as jnp
from jax.experimental import pallas as pl
from jax.experimental.pallas import tpu as pltpu

_LANES = 128
_MATMUL_DTYPE = jnp.float32  # jnp.bfloat16 recommended on v6e/v7x


def _round_up(x, m):
    return (x + m - 1) // m * m


def _densenet_kernel(x_ref, mask_ref, w_ref, b_ref, o_ref, *, W):
    """One batch element through the whole DenseNet, entirely in VMEM.

    x_ref:    (Mimg, C_pad)       spatially zero-padded input, flattened row-major
                                  over (H+2, W+2); channels top-aligned at lane C_pad.
    mask_ref: (Mimg, 1)  f32      1.0 at interior pixels, 0.0 at the halo ring.
    w_ref:    (L, 9*C_pad, C_pad) per-layer im2col weights (tap-major K), zero padded
                                  and pre-placed at the layer's input/output lanes.
    b_ref:    (L, 1, C_pad)       per-layer bias, placed at the layer's output lanes.
    o_ref:    (Mext, C_pad)       working buffer = output: G guard rows on each side,
                                  rows [G, G+Mimg) hold the padded activations.
    """
    Wp = W + 2
    Mimg = x_ref.shape[0]
    G = Wp + 1                      # guard rows so every tap window stays in bounds
    num_layers = w_ref.shape[0]

    # Zero guards + not-yet-produced channel lanes, then drop in the input.
    o_ref[...] = jnp.zeros_like(o_ref)
    o_ref[pl.ds(G, Mimg), :] = x_ref[...]
    mask = mask_ref[...]            # (Mimg, 1)

    for l in range(num_layers):     # static unroll over layers
        # 3x3 conv as a single matmul: build the im2col patch by concatenating
        # the nine spatially shifted views of the flat buffer.  Each view is a
        # full-lane-width contiguous row window at a static offset -> no
        # cross-tile reshapes.
        taps = []
        for dy in range(3):
            for dx in range(3):
                off = (dy - 1) * Wp + (dx - 1)
                taps.append(o_ref[pl.ds(G + off, Mimg), :])
        patch = jnp.concatenate(taps, axis=-1)                 # (Mimg, 9*C_pad)

        acc = jnp.dot(patch.astype(_MATMUL_DTYPE),
                      w_ref[l].astype(_MATMUL_DTYPE),
                      preferred_element_type=jnp.float32)      # (Mimg, C_pad)
        acc = acc + b_ref[l]                                   # bias pre-placed
        act = jnp.where(acc >= 0, acc, 0.1 * acc)              # LeakyReLU(0.1), f32

        # The layer's output lanes are still zero in o_ref, so the dense concat
        # is a full-lane-width read-modify-write add; the mask keeps the halo
        # ring (and guard rows are never touched) at exactly zero.
        o_ref[pl.ds(G, Mimg), :] = o_ref[pl.ds(G, Mimg), :] + act * mask


def _pack_params(params, c_in, c_pad):
    """Pad/place per-layer weights and biases for the fused kernel.

    Channel placement (top-aligned at lane c_pad) reproduces PyTorch's
    `cat((layer(x), x), 1)` ordering: layer l reads lanes [c_pad - cin_l, c_pad)
    and writes its output to lanes [c_pad - cin_l - oc_l, c_pad - cin_l).
    K is tap-major: row t*c_pad + lane, with tap t = dy*3 + dx.
    """
    w_all, b_all = [], []
    cin = c_in
    for (w, b) in params:                         # w: (3, 3, cin, oc), b: (oc,)
        oc = w.shape[-1]
        src_lo = c_pad - cin
        dst_lo = c_pad - cin - oc
        w_pad = jnp.zeros((9 * c_pad, c_pad), jnp.float32)
        for dy in range(3):
            for dx in range(3):
                t = dy * 3 + dx
                w_pad = w_pad.at[t * c_pad + src_lo:t * c_pad + src_lo + cin,
                                 dst_lo:dst_lo + oc].set(w[dy, dx])
        b_pad = jnp.zeros((1, c_pad), jnp.float32).at[0, dst_lo:dst_lo + oc].set(b)
        w_all.append(w_pad)
        b_all.append(b_pad)
        cin += oc
    return jnp.stack(w_all), jnp.stack(b_all)     # (L, 9*c_pad, c_pad), (L, 1, c_pad)


@jax.jit
def densenet_forward(x_nchw, params):
    """Matches DenseNet.forward: for each layer, x = cat(layer(x), x, dim=C)."""
    N, C_in, H, W = x_nchw.shape
    out_channels = [w.shape[-1] for (w, _) in params]
    L = len(out_channels)
    C_total = C_in + sum(out_channels)
    C_pad = _round_up(C_total, _LANES)
    Hp, Wp = H + 2, W + 2
    Mimg = Hp * Wp
    G = Wp + 1
    Mext = Mimg + 2 * G

    # NCHW -> NHWC, zero-pad the spatial halo and channel-pad so the dense
    # channel block is top-aligned at lane C_pad; flatten spatial per image.
    x = jnp.transpose(x_nchw, (0, 2, 3, 1)).astype(jnp.float32)
    x = jnp.pad(x, ((0, 0), (1, 1), (1, 1), (C_pad - C_in, 0)))
    x = x.reshape(N, Mimg, C_pad)

    # Interior (non-halo) mask over the flat padded image, computed host-side.
    yy, xx = jnp.meshgrid(jnp.arange(Hp), jnp.arange(Wp), indexing="ij")
    mask = ((yy >= 1) & (yy <= H) & (xx >= 1) & (xx <= W))
    mask = mask.astype(jnp.float32).reshape(Mimg, 1)

    w_all, b_all = _pack_params(params, C_in, C_pad)

    kernel = functools.partial(_densenet_kernel, W=W)
    out = pl.pallas_call(
        kernel,
        out_shape=jax.ShapeDtypeStruct((N, Mext, C_pad), jnp.float32),
        grid_spec=pltpu.PrefetchScalarGridSpec(
            num_scalar_prefetch=0,
            grid=(N,),
            in_specs=[
                pl.BlockSpec((None, Mimg, C_pad), lambda n: (n, 0, 0)),
                pl.BlockSpec((Mimg, 1), lambda n: (0, 0)),
                pl.BlockSpec((L, 9 * C_pad, C_pad), lambda n: (0, 0, 0)),
                pl.BlockSpec((L, 1, C_pad), lambda n: (0, 0, 0)),
            ],
            out_specs=pl.BlockSpec((None, Mext, C_pad), lambda n: (n, 0, 0)),
        ),
        compiler_params=pltpu.CompilerParams(
            dimension_semantics=("parallel",)),
    )(x, mask, w_all, b_all)

    # Strip guard rows, un-flatten, crop the halo, take the occupied lanes
    # (already in PyTorch concat order: newest layer first), back to NCHW.
    out = out[:, G:G + Mimg, :].reshape(N, Hp, Wp, C_pad)
    out = out[:, 1:H + 1, 1:W + 1, C_pad - C_total:]
    return jnp.transpose(out, (0, 3, 1, 2))


def init_densenet_params(key, in_channels, out_channels):
    """Deterministic init. Weight layout (3,3,Cin,Cout), bias (Cout,)."""
    # Note: the reference module's `init_weights` is not defined in the spec, so
    # a deterministic He-style init is used; forward semantics are unaffected.
    params = []
    n_in = in_channels
    for i, oc in enumerate(out_channels):
        kw, kb = jax.random.split(jax.random.fold_in(key, i))
        fan_in = 3 * 3 * n_in
        scale = (2.0 / fan_in) ** 0.5
        w = scale * jax.random.normal(kw, (3, 3, n_in, oc), jnp.float32)
        b = 0.01 * jax.random.normal(kb, (oc,), jnp.float32)
        params.append((w, b))
        n_in += oc  # dense connectivity: next layer sees concat(out, x)
    return params


def _reference_forward(x_nchw, params):
    """Pure-JAX reference (lax conv) for a correctness sanity check."""
    x = x_nchw
    for (w, b) in params:
        w_oihw = jnp.transpose(w, (3, 2, 0, 1))
        y = jax.lax.conv_general_dilated(
            x, w_oihw, window_strides=(1, 1), padding=((1, 1), (1, 1)),
            dimension_numbers=("NCHW", "OIHW", "NCHW"))
        y = y + b.reshape(1, -1, 1, 1)
        y = jnp.where(y >= 0, y, 0.1 * y)
        x = jnp.concatenate([y, x], axis=1)
    return x


if __name__ == "__main__":
    key = jax.random.PRNGKey(0)
    k_x, k_p = jax.random.split(key)

    # Small shapes consistent with the module: batch=2, in_channels=4, 16x16 spatial.
    N, C, H, W = 2, 4, 16, 16
    out_channels = [8, 8]

    x = jax.random.normal(k_x, (N, C, H, W), jnp.float32)
    params = init_densenet_params(k_p, C, out_channels)

    out = jax.block_until_ready(densenet_forward(x, params))

    expected_c = C + sum(out_channels)
    assert out.shape == (N, expected_c, H, W), out.shape

    ref = jax.block_until_ready(_reference_forward(x, params))
    err = float(jnp.max(jnp.abs(out - ref)))
    assert jnp.allclose(out, ref, atol=1e-3, rtol=1e-3), err

    print("KERNEL_OK")
</pallas_src>

<mosaic_0001>
module attributes {stable_mosaic.version = 11 : i64} {
  func.func @_densenet_kernel(%arg0: i32, %arg1: memref<1x324x128xf32, #tpu.memory_space<vmem>>, %arg2: memref<324x1xf32, #tpu.memory_space<vmem>>, %arg3: memref<2x1152x128xf32, #tpu.memory_space<vmem>>, %arg4: memref<2x1x128xf32, #tpu.memory_space<vmem>>, %arg5: memref<1x362x128xf32, #tpu.memory_space<vmem>>) attributes {dimension_semantics = [#tpu.dimension_semantics<parallel>], iteration_bounds = array<i64: 2>, scalar_prefetch = 0 : i64, scratch_operands = 0 : i64, tpu.core_type = #tpu.core_type<tc>, window_params = [{transform_indices = @transform_0, window_bounds = array<i64: 1, 324, 128>}, {pipeline_mode = #tpu.pipeline_mode<synchronous>, transform_indices = @transform_1, window_bounds = array<i64: 324, 1>}, {pipeline_mode = #tpu.pipeline_mode<synchronous>, transform_indices = @transform_2, window_bounds = array<i64: 2, 1152, 128>}, {pipeline_mode = #tpu.pipeline_mode<synchronous>, transform_indices = @transform_3, window_bounds = array<i64: 2, 1, 128>}, {transform_indices = @transform_4, window_bounds = array<i64: 1, 362, 128>}]} {
    %cst = arith.constant 0.000000e+00 : f32
    %0 = vector.broadcast %cst : f32 to vector<362x128xf32>
    %c0 = arith.constant 0 : index
    %c0_0 = arith.constant 0 : index
    %c0_1 = arith.constant 0 : index
    %1 = vector.load %arg5[%c0, %c0_0, %c0_1] : memref<1x362x128xf32, #tpu.memory_space<vmem>>, vector<1x362x128xf32>
    %2 = vector.shape_cast %1 : vector<1x362x128xf32> to vector<362x128xf32>
    %3 = vector.shape_cast %0 : vector<362x128xf32> to vector<1x362x128xf32>
    tpu.vector_store %arg5[%c0, %c0_0, %c0_1], %3 {strides = array<i32>} : memref<1x362x128xf32, #tpu.memory_space<vmem>>, vector<1x362x128xf32>,
    %c0_2 = arith.constant 0 : index
    %c0_3 = arith.constant 0 : index
    %c0_4 = arith.constant 0 : index
    %4 = vector.load %arg1[%c0_2, %c0_3, %c0_4] : memref<1x324x128xf32, #tpu.memory_space<vmem>>, vector<1x324x128xf32>
    %5 = vector.shape_cast %4 : vector<1x324x128xf32> to vector<324x128xf32>
    %c0_5 = arith.constant 0 : index
    %c19 = arith.constant 19 : index
    %c0_6 = arith.constant 0 : index
    %6 = vector.load %arg5[%c0_5, %c19, %c0_6] : memref<1x362x128xf32, #tpu.memory_space<vmem>>, vector<1x324x128xf32>
    %7 = vector.shape_cast %6 : vector<1x324x128xf32> to vector<324x128xf32>
    %8 = vector.shape_cast %5 : vector<324x128xf32> to vector<1x324x128xf32>
    tpu.vector_store %arg5[%c0_5, %c19, %c0_6], %8 {strides = array<i32>} : memref<1x362x128xf32, #tpu.memory_space<vmem>>, vector<1x324x128xf32>,
    %c0_7 = arith.constant 0 : index
    %c0_8 = arith.constant 0 : index
    %9 = vector.load %arg2[%c0_7, %c0_8] : memref<324x1xf32, #tpu.memory_space<vmem>>, vector<324x1xf32>
    %c0_9 = arith.constant 0 : index
    %c0_10 = arith.constant 0 : index
    %c0_11 = arith.constant 0 : index
    %10 = vector.load %arg5[%c0_9, %c0_10, %c0_11] : memref<1x362x128xf32, #tpu.memory_space<vmem>>, vector<1x324x128xf32>
    %11 = vector.shape_cast %10 : vector<1x324x128xf32> to vector<324x128xf32>
    %c0_12 = arith.constant 0 : index
    %c1 = arith.constant 1 : index
    %c0_13 = arith.constant 0 : index
    %12 = vector.load %arg5[%c0_12, %c1, %c0_13] : memref<1x362x128xf32, #tpu.memory_space<vmem>>, vector<1x324x128xf32>
    %13 = vector.shape_cast %12 : vector<1x324x128xf32> to vector<324x128xf32>
    %c0_14 = arith.constant 0 : index
    %c2 = arith.constant 2 : index
    %c0_15 = arith.constant 0 : index
    %14 = vector.load %arg5[%c0_14, %c2, %c0_15] : memref<1x362x128xf32, #tpu.memory_space<vmem>>, vector<1x324x128xf32>
    %15 = vector.shape_cast %14 : vector<1x324x128xf32> to vector<324x128xf32>
    %c0_16 = arith.constant 0 : index
    %c18 = arith.constant 18 : index
    %c0_17 = arith.constant 0 : index
    %16 = vector.load %arg5[%c0_16, %c18, %c0_17] : memref<1x362x128xf32, #tpu.memory_space<vmem>>, vector<1x324x128xf32>
    %17 = vector.shape_cast %16 : vector<1x324x128xf32> to vector<324x128xf32>
    %c0_18 = arith.constant 0 : index
    %c19_19 = arith.constant 19 : index
    %c0_20 = arith.constant 0 : index
    %18 = vector.load %arg5[%c0_18, %c19_19, %c0_20] : memref<1x362x128xf32, #tpu.memory_space<vmem>>, vector<1x324x128xf32>
    %19 = vector.shape_cast %18 : vector<1x324x128xf32> to vector<324x128xf32>
    %c0_21 = arith.constant 0 : index
    %c20 = arith.constant 20 : index
    %c0_22 = arith.constant 0 : index
    %20 = vector.load %arg5[%c0_21, %c20, %c0_22] : memref<1x362x128xf32, #tpu.memory_space<vmem>>, vector<1x324x128xf32>
    %21 = vector.shape_cast %20 : vector<1x324x128xf32> to vector<324x128xf32>
    %c0_23 = arith.constant 0 : index
    %c36 = arith.constant 36 : index
    %c0_24 = arith.constant 0 : index
    %22 = vector.load %arg5[%c0_23, %c36, %c0_24] : memref<1x362x128xf32, #tpu.memory_space<vmem>>, vector<1x324x128xf32>
    %23 = vector.shape_cast %22 : vector<1x324x128xf32> to vector<324x128xf32>
    %c0_25 = arith.constant 0 : index
    %c37 = arith.constant 37 : index
    %c0_26 = arith.constant 0 : index
    %24 = vector.load %arg5[%c0_25, %c37, %c0_26] : memref<1x362x128xf32, #tpu.memory_space<vmem>>, vector<1x324x128xf32>
    %25 = vector.shape_cast %24 : vector<1x324x128xf32> to vector<324x128xf32>
    %c0_27 = arith.constant 0 : index
    %c38 = arith.constant 38 : index
    %c0_28 = arith.constant 0 : index
    %26 = vector.load %arg5[%c0_27, %c38, %c0_28] : memref<1x362x128xf32, #tpu.memory_space<vmem>>, vector<1x324x128xf32>
    %27 = vector.shape_cast %26 : vector<1x324x128xf32> to vector<324x128xf32>
    %28 = tpu.concatenate %11, %13, %15, %17, %19, %21, %23, %25, %27 in 1 : vector<324x128xf32>, vector<324x128xf32>, vector<324x128xf32>, vector<324x128xf32>, vector<324x128xf32>, vector<324x128xf32>, vector<324x128xf32>, vector<324x128xf32>, vector<324x128xf32> -> vector<324x1152xf32>
    %c0_29 = arith.constant 0 : index
    %c0_30 = arith.constant 0 : index
    %c0_31 = arith.constant 0 : index
    %29 = vector.load %arg3[%c0_29, %c0_30, %c0_31] : memref<2x1152x128xf32, #tpu.memory_space<vmem>>, vector<1x1152x128xf32>
    %30 = vector.shape_cast %29 : vector<1x1152x128xf32> to vector<1152x128xf32>
    %cst_32 = arith.constant dense<0.000000e+00> : vector<324x128xf32>
    %31 = tpu.matmul %28, %30, %cst_32 {dimension_numbers = #tpu.dot_dimension_numbers<[1], [0], [0], [1], [0, 0, 1, 1], [], []>} : vector<324x1152xf32>, vector<1152x128xf32>, vector<324x128xf32> -> vector<324x128xf32>
    %c0_33 = arith.constant 0 : index
    %c0_34 = arith.constant 0 : index
    %c0_35 = arith.constant 0 : index
    %32 = vector.load %arg4[%c0_33, %c0_34, %c0_35] : memref<2x1x128xf32, #tpu.memory_space<vmem>>, vector<1x1x128xf32>
    %33 = vector.shape_cast %32 : vector<1x1x128xf32> to vector<1x128xf32>
    %34 = vector.broadcast %33 : vector<1x128xf32> to vector<324x128xf32>
    %35 = arith.addf %31, %34 : vector<324x128xf32>
    %cst_36 = arith.constant 0.000000e+00 : f32
    %36 = vector.broadcast %cst_36 : f32 to vector<324x128xf32>
    %37 = arith.cmpf oge, %35, %36 : vector<324x128xf32>
    %cst_37 = arith.constant 1.000000e-01 : f32
    %38 = vector.broadcast %cst_37 : f32 to vector<324x128xf32>
    %39 = arith.mulf %38, %35 : vector<324x128xf32>
    %40 = arith.select %37, %35, %39 : vector<324x128xi1>, vector<324x128xf32>
    %c0_38 = arith.constant 0 : index
    %c19_39 = arith.constant 19 : index
    %c0_40 = arith.constant 0 : index
    %41 = vector.load %arg5[%c0_38, %c19_39, %c0_40] : memref<1x362x128xf32, #tpu.memory_space<vmem>>, vector<1x324x128xf32>
    %42 = vector.shape_cast %41 : vector<1x324x128xf32> to vector<324x128xf32>
    %43 = vector.broadcast %9 : vector<324x1xf32> to vector<324x128xf32>
    %44 = arith.mulf %40, %43 : vector<324x128xf32>
    %45 = arith.addf %42, %44 : vector<324x128xf32>
    %c0_41 = arith.constant 0 : index
    %c19_42 = arith.constant 19 : index
    %c0_43 = arith.constant 0 : index
    %46 = vector.load %arg5[%c0_41, %c19_42, %c0_43] : memref<1x362x128xf32, #tpu.memory_space<vmem>>, vector<1x324x128xf32>
    %47 = vector.shape_cast %46 : vector<1x324x128xf32> to vector<324x128xf32>
    %48 = vector.shape_cast %45 : vector<324x128xf32> to vector<1x324x128xf32>
    tpu.vector_store %arg5[%c0_41, %c19_42, %c0_43], %48 {strides = array<i32>} : memref<1x362x128xf32, #tpu.memory_space<vmem>>, vector<1x324x128xf32>,
    %c0_44 = arith.constant 0 : index
    %c0_45 = arith.constant 0 : index
    %c0_46 = arith.constant 0 : index
    %49 = vector.load %arg5[%c0_44, %c0_45, %c0_46] : memref<1x362x128xf32, #tpu.memory_space<vmem>>, vector<1x324x128xf32>
    %50 = vector.shape_cast %49 : vector<1x324x128xf32> to vector<324x128xf32>
    %c0_47 = arith.constant 0 : index
    %c1_48 = arith.constant 1 : index
    %c0_49 = arith.constant 0 : index
    %51 = vector.load %arg5[%c0_47, %c1_48, %c0_49] : memref<1x362x128xf32, #tpu.memory_space<vmem>>, vector<1x324x128xf32>
    %52 = vector.shape_cast %51 : vector<1x324x128xf32> to vector<324x128xf32>
    %c0_50 = arith.constant 0 : index
    %c2_51 = arith.constant 2 : index
    %c0_52 = arith.constant 0 : index
    %53 = vector.load %arg5[%c0_50, %c2_51, %c0_52] : memref<1x362x128xf32, #tpu.memory_space<vmem>>, vector<1x324x128xf32>
    %54 = vector.shape_cast %53 : vector<1x324x128xf32> to vector<324x128xf32>
    %c0_53 = arith.constant 0 : index
    %c18_54 = arith.constant 18 : index
    %c0_55 = arith.constant 0 : index
    %55 = vector.load %arg5[%c0_53, %c18_54, %c0_55] : memref<1x362x128xf32, #tpu.memory_space<vmem>>, vector<1x324x128xf32>
    %56 = vector.shape_cast %55 : vector<1x324x128xf32> to vector<324x128xf32>
    %c0_56 = arith.constant 0 : index
    %c19_57 = arith.constant 19 : index
    %c0_58 = arith.constant 0 : index
    %57 = vector.load %arg5[%c0_56, %c19_57, %c0_58] : memref<1x362x128xf32, #tpu.memory_space<vmem>>, vector<1x324x128xf32>
    %58 = vector.shape_cast %57 : vector<1x324x128xf32> to vector<324x128xf32>
    %c0_59 = arith.constant 0 : index
    %c20_60 = arith.constant 20 : index
    %c0_61 = arith.constant 0 : index
    %59 = vector.load %arg5[%c0_59, %c20_60, %c0_61] : memref<1x362x128xf32, #tpu.memory_space<vmem>>, vector<1x324x128xf32>
    %60 = vector.shape_cast %59 : vector<1x324x128xf32> to vector<324x128xf32>
    %c0_62 = arith.constant 0 : index
    %c36_63 = arith.constant 36 : index
    %c0_64 = arith.constant 0 : index
    %61 = vector.load %arg5[%c0_62, %c36_63, %c0_64] : memref<1x362x128xf32, #tpu.memory_space<vmem>>, vector<1x324x128xf32>
    %62 = vector.shape_cast %61 : vector<1x324x128xf32> to vector<324x128xf32>
    %c0_65 = arith.constant 0 : index
    %c37_66 = arith.constant 37 : index
    %c0_67 = arith.constant 0 : index
    %63 = vector.load %arg5[%c0_65, %c37_66, %c0_67] : memref<1x362x128xf32, #tpu.memory_space<vmem>>, vector<1x324x128xf32>
    %64 = vector.shape_cast %63 : vector<1x324x128xf32> to vector<324x128xf32>
    %c0_68 = arith.constant 0 : index
    %c38_69 = arith.constant 38 : index
    %c0_70 = arith.constant 0 : index
    %65 = vector.load %arg5[%c0_68, %c38_69, %c0_70] : memref<1x362x128xf32, #tpu.memory_space<vmem>>, vector<1x324x128xf32>
    %66 = vector.shape_cast %65 : vector<1x324x128xf32> to vector<324x128xf32>
    %67 = tpu.concatenate %50, %52, %54, %56, %58, %60, %62, %64, %66 in 1 : vector<324x128xf32>, vector<324x128xf32>, vector<324x128xf32>, vector<324x128xf32>, vector<324x128xf32>, vector<324x128xf32>, vector<324x128xf32>, vector<324x128xf32>, vector<324x128xf32> -> vector<324x1152xf32>
    %c1_71 = arith.constant 1 : index
    %c0_72 = arith.constant 0 : index
    %c0_73 = arith.constant 0 : index
    %68 = vector.load %arg3[%c1_71, %c0_72, %c0_73] : memref<2x1152x128xf32, #tpu.memory_space<vmem>>, vector<1x1152x128xf32>
    %69 = vector.shape_cast %68 : vector<1x1152x128xf32> to vector<1152x128xf32>
    %cst_74 = arith.constant dense<0.000000e+00> : vector<324x128xf32>
    %70 = tpu.matmul %67, %69, %cst_74 {dimension_numbers = #tpu.dot_dimension_numbers<[1], [0], [0], [1], [0, 0, 1, 1], [], []>} : vector<324x1152xf32>, vector<1152x128xf32>, vector<324x128xf32> -> vector<324x128xf32>
    %c1_75 = arith.constant 1 : index
    %c0_76 = arith.constant 0 : index
    %c0_77 = arith.constant 0 : index
    %71 = vector.load %arg4[%c1_75, %c0_76, %c0_77] : memref<2x1x128xf32, #tpu.memory_space<vmem>>, vector<1x1x128xf32>
    %72 = vector.shape_cast %71 : vector<1x1x128xf32> to vector<1x128xf32>
    %73 = vector.broadcast %72 : vector<1x128xf32> to vector<324x128xf32>
    %74 = arith.addf %70, %73 : vector<324x128xf32>
    %cst_78 = arith.constant 0.000000e+00 : f32
    %75 = vector.broadcast %cst_78 : f32 to vector<324x128xf32>
    %76 = arith.cmpf oge, %74, %75 : vector<324x128xf32>
    %cst_79 = arith.constant 1.000000e-01 : f32
    %77 = vector.broadcast %cst_79 : f32 to vector<324x128xf32>
    %78 = arith.mulf %77, %74 : vector<324x128xf32>
    %79 = arith.select %76, %74, %78 : vector<324x128xi1>, vector<324x128xf32>
    %c0_80 = arith.constant 0 : index
    %c19_81 = arith.constant 19 : index
    %c0_82 = arith.constant 0 : index
    %80 = vector.load %arg5[%c0_80, %c19_81, %c0_82] : memref<1x362x128xf32, #tpu.memory_space<vmem>>, vector<1x324x128xf32>
    %81 = vector.shape_cast %80 : vector<1x324x128xf32> to vector<324x128xf32>
    %82 = vector.broadcast %9 : vector<324x1xf32> to vector<324x128xf32>
    %83 = arith.mulf %79, %82 : vector<324x128xf32>
    %84 = arith.addf %81, %83 : vector<324x128xf32>
    %c0_83 = arith.constant 0 : index
    %c19_84 = arith.constant 19 : index
    %c0_85 = arith.constant 0 : index
    %85 = vector.load %arg5[%c0_83, %c19_84, %c0_85] : memref<1x362x128xf32, #tpu.memory_space<vmem>>, vector<1x324x128xf32>
    %86 = vector.shape_cast %85 : vector<1x324x128xf32> to vector<324x128xf32>
    %87 = vector.shape_cast %84 : vector<324x128xf32> to vector<1x324x128xf32>
    tpu.vector_store %arg5[%c0_83, %c19_84, %c0_85], %87 {strides = array<i32>} : memref<1x362x128xf32, #tpu.memory_space<vmem>>, vector<1x324x128xf32>,
    return
  }
  func.func @transform_0(%arg0: i32) -> (i32, i32, i32) {
    %c0_i32 = arith.constant 0 : i32
    %c0_i32_0 = arith.constant 0 : i32
    %c0_i32_1 = arith.constant 0 : i32
    return %arg0, %c0_i32, %c0_i32_0 : i32, i32, i32
  }
  func.func @transform_1(%arg0: i32) -> (i32, i32) {
    %c0_i32 = arith.constant 0 : i32
    %c0_i32_0 = arith.constant 0 : i32
    %c0_i32_1 = arith.constant 0 : i32
    return %c0_i32, %c0_i32_0 : i32, i32
  }
  func.func @transform_2(%arg0: i32) -> (i32, i32, i32) {
    %c0_i32 = arith.constant 0 : i32
    %c0_i32_0 = arith.constant 0 : i32
    %c0_i32_1 = arith.constant 0 : i32
    %c0_i32_2 = arith.constant 0 : i32
    return %c0_i32, %c0_i32_0, %c0_i32_1 : i32, i32, i32
  }
  func.func @transform_3(%arg0: i32) -> (i32, i32, i32) {
    %c0_i32 = arith.constant 0 : i32
    %c0_i32_0 = arith.constant 0 : i32
    %c0_i32_1 = arith.constant 0 : i32
    %c0_i32_2 = arith.constant 0 : i32
    return %c0_i32, %c0_i32_0, %c0_i32_1 : i32, i32, i32
  }
  func.func @transform_4(%arg0: i32) -> (i32, i32, i32) {
    %c0_i32 = arith.constant 0 : i32
    %c0_i32_0 = arith.constant 0 : i32
    %c0_i32_1 = arith.constant 0 : i32
    return %arg0, %c0_i32, %c0_i32_0 : i32, i32, i32
  }
}

</mosaic_0001>

<llo_original>
// kernel: densenet_forward.1
$region0: #{densenet_forward.1}
  #allocation0 [shape = 'u32[]', space=smem, size = 0x4, offset = 0x4, fixed_abs, tag = 'smem constant byte address 0x4 - core index']
  #allocation1 [shape = 'u32[144,128]{1,0:T(1,128)}', space=vmem, size = 0x12000, scoped, tag = 'internal scratch']
  %s0 = inlined_call_operand.vmem [shape: f32[2,324,128], index: 0, kind: input, shape index: {}]
  %s1 = inlined_call_operand.vmem [shape: f32[324,1], index: 1, kind: input, shape index: {}]
  %s2 = inlined_call_operand.vmem [shape: f32[2,1152,128], index: 2, kind: input, shape index: {}]
  %s3 = inlined_call_operand.vmem [shape: f32[2,1,128], index: 3, kind: input, shape index: {}]
  %s4 = inlined_call_operand.vmem [shape: f32[2,362,128], index: 4, kind: output, shape index: {}]
  %s5 = sld [smem:[#allocation0]]
  $region49: #{densenet_forward.1} parent=0
    _
  %s7 = ssub.s32 1, %s5
  %s8 = scalar_select 0, %s7, %s5
  loop: start=0, step=1, limit=4
  $region2: #{densenet_forward.1} parent=0 // loop_pre_header
    _
  $region3: #{densenet_forward.1} parent=0 // loop_header
    %s10 = sphi 0, %s14
    %p11 = scmp.ge.s32.totalorder %s10, 4
    %s20 = sphi 0, %s22
    %s23 = sphi 0, %s20
    %s24 = sphi 0, %s23
    %s40 = sphi 0, %s24
    %s44 = sphi 0, %s44
    %s46 = sphi 0, %s44
    %s47 = sphi 0, %s46
    %s61 = sphi 0, %s47
    %s65 = sphi 0, %s65
    %s67 = sphi 0, %s65
    %s68 = sphi 0, %s67
    %s82 = sphi 0, %s68
    %s86 = sphi 0, %s86
    %s88 = sphi 0, %s86
    %s89 = sphi 0, %s88
    %s103 = sphi 0, %s89
    %s109 = sphi 0, %s111
    %s112 = sphi 0, %s109
    %s113 = sphi 0, %s112
    %s129 = sphi 0, %s113
  $region4: #{densenet_forward.1} parent=0 // loop_header_branch
    %13 = sbr.rel (%p11) target = $region8
  $region5: #{densenet_forward.1} parent=0 // loop_body
    %s15 = ssub.s32 %s10, 1
    %s16 = ssub.s32 %s10, 2
    %s17 = sadd.s32 %s10, 1
    %s18 = ssub.s32 %s10, %s17
    %p19 = scmp.eq.s32.totalorder %s18, 0
    %s21 = sadd.s32 %s20, 1
    %s22 = scalar_select %p19, %s20, %s21
    %p25 = pneg %p19
    %p26 = scmp.eq.s32.totalorder %s10, 1
    %p27 = por %p25, %p26
    %p28 = scmp.ne.s32.totalorder %s20, %s23
    %p29 = scmp.eq.s32.totalorder %s10, 0
    %p30 = por %p28, %p29
    %p31 = scmp.ne.s32.totalorder %s20, %s23
    %p32 = scmp.eq.s32.totalorder %s15, 1
    %p33 = por %p31, %p32
    %p34 = scmp.ne.s32.totalorder %s23, %s24
    %p35 = scmp.eq.s32.totalorder %s15, 0
    %p36 = por %p34, %p35
    %p37 = scmp.ne.s32.totalorder %s23, %s24
    %p38 = scmp.eq.s32.totalorder %s16, 1
    %p39 = por %p37, %p38
    %p41 = scmp.ne.s32.totalorder %s24, %s40
    %p42 = scmp.eq.s32.totalorder %s16, 0
    %p43 = por %p41, %p42
    %s45 = sadd.s32 %s44, 1
    %p48 = scmp.eq.s32.totalorder %s10, 1
    %p49 = scmp.ne.s32.totalorder %s44, %s46
    %p50 = scmp.eq.s32.totalorder %s10, 0
    %p51 = por %p49, %p50
    %p52 = scmp.ne.s32.totalorder %s44, %s46
    %p53 = scmp.eq.s32.totalorder %s15, 1
    %p54 = por %p52, %p53
    %p55 = scmp.ne.s32.totalorder %s46, %s47
    %p56 = scmp.eq.s32.totalorder %s15, 0
    %p57 = por %p55, %p56
    %p58 = scmp.ne.s32.totalorder %s46, %s47
    %p59 = scmp.eq.s32.totalorder %s16, 1
    %p60 = por %p58, %p59
    %p62 = scmp.ne.s32.totalorder %s47, %s61
    %p63 = scmp.eq.s32.totalorder %s16, 0
    %p64 = por %p62, %p63
    %s66 = sadd.s32 %s65, 1
    %p69 = scmp.eq.s32.totalorder %s10, 1
    %p70 = scmp.ne.s32.totalorder %s65, %s67
    %p71 = scmp.eq.s32.totalorder %s10, 0
    %p72 = por %p70, %p71
    %p73 = scmp.ne.s32.totalorder %s65, %s67
    %p74 = scmp.eq.s32.totalorder %s15, 1
    %p75 = por %p73, %p74
    %p76 = scmp.ne.s32.totalorder %s67, %s68
    %p77 = scmp.eq.s32.totalorder %s15, 0
    %p78 = por %p76, %p77
    %p79 = scmp.ne.s32.totalorder %s67, %s68
    %p80 = scmp.eq.s32.totalorder %s16, 1
    %p81 = por %p79, %p80
    %p83 = scmp.ne.s32.totalorder %s68, %s82
    %p84 = scmp.eq.s32.totalorder %s16, 0
    %p85 = por %p83, %p84
    %s87 = sadd.s32 %s86, 1
    %p90 = scmp.eq.s32.totalorder %s10, 1
    %p91 = scmp.ne.s32.totalorder %s86, %s88
    %p92 = scmp.eq.s32.totalorder %s10, 0
    %p93 = por %p91, %p92
    %p94 = scmp.ne.s32.totalorder %s86, %s88
    %p95 = scmp.eq.s32.totalorder %s15, 1
    %p96 = por %p94, %p95
    %p97 = scmp.ne.s32.totalorder %s88, %s89
    %p98 = scmp.eq.s32.totalorder %s15, 0
    %p99 = por %p97, %p98
    %p100 = scmp.ne.s32.totalorder %s88, %s89
    %p101 = scmp.eq.s32.totalorder %s16, 1
    %p102 = por %p100, %p101
    %p104 = scmp.ne.s32.totalorder %s89, %s103
    %p105 = scmp.eq.s32.totalorder %s16, 0
    %p106 = por %p104, %p105
    %s107 = ssub.s32 %s10, %s17
    %p108 = scmp.eq.s32.totalorder %s107, 0
    %s110 = sadd.s32 %s109, 1
    %s111 = scalar_select %p108, %s109, %s110
    %p114 = pneg %p108
    %p115 = scmp.eq.s32.totalorder %s10, 1
    %p116 = por %p114, %p115
    %p117 = scmp.ne.s32.totalorder %s109, %s112
    %p118 = scmp.eq.s32.totalorder %s10, 0
    %p119 = por %p117, %p118
    %p120 = scmp.ne.s32.totalorder %s109, %s112
    %p121 = scmp.eq.s32.totalorder %s15, 1
    %p122 = por %p120, %p121
    %p123 = scmp.ne.s32.totalorder %s112, %s113
    %p124 = scmp.eq.s32.totalorder %s15, 0
    %p125 = por %p123, %p124
    %p126 = scmp.ne.s32.totalorder %s112, %s113
    %p127 = scmp.eq.s32.totalorder %s16, 1
    %p128 = por %p126, %p127
    %p130 = scmp.ne.s32.totalorder %s113, %s129
    %p131 = scmp.eq.s32.totalorder %s16, 0
    %p132 = por %p130, %p131
    %p133 = scmp.le.s32.totalorder 1, %s10
    %p134 = scmp.lt.s32.totalorder %s10, 3
    %p135 = pnand %p133, %p134
    %p136 = pneg %p135
    // Predicated region
    $region9: #{densenet_forward.1} parent=5 // pred_check
      _
    $region10: #{densenet_forward.1} parent=5 // pred_check_branch
      %138 = sbr.rel (%p135) target = $region12
    $region11: #{densenet_forward.1} parent=5 // pred_region
      %s139 = ssub.s32 %s10, 1
      // Predicated region
      $region13: #{densenet_forward.1} parent=11 // pred_check
        %p140 = pneg %p57
      $region14: #{densenet_forward.1} parent=11 // pred_check_branch
        %142 = sbr.rel (%p140) target = $region16
      $region15: #{densenet_forward.1} parent=11 // pred_region
        _
      $region16: #{densenet_forward.1} parent=11 // pred_fallthru
        _
      // Predicated region
      $region17: #{densenet_forward.1} parent=11 // pred_check
        %p143 = pneg %p78
      $region18: #{densenet_forward.1} parent=11 // pred_check_branch
        %145 = sbr.rel (%p143) target = $region20
      $region19: #{densenet_forward.1} parent=11 // pred_region
        _
      $region20: #{densenet_forward.1} parent=11 // pred_fallthru
        _
      // Predicated region
      $region21: #{densenet_forward.1} parent=11 // pred_check
        %p146 = pneg %p99
      $region22: #{densenet_forward.1} parent=11 // pred_check_branch
        %148 = sbr.rel (%p146) target = $region24
      $region23: #{densenet_forward.1} parent=11 // pred_region
        _
      $region24: #{densenet_forward.1} parent=11 // pred_fallthru
        _
    $region12: #{densenet_forward.1} parent=5 // pred_fallthru
      _
    %p149 = scmp.lt.s32.totalorder %s10, 2
    // Predicated region
    $region25: #{densenet_forward.1} parent=5 // pred_check
      %p150 = pneg %p149
    $region26: #{densenet_forward.1} parent=5 // pred_check_branch
      %152 = sbr.rel (%p150) target = $region28
    $region27: #{densenet_forward.1} parent=5 // pred_region
      // Predicated region
      $region29: #{densenet_forward.1} parent=27 // pred_check
        %p153 = pneg %p30
      $region30: #{densenet_forward.1} parent=27 // pred_check_branch
        %155 = sbr.rel (%p153) target = $region32
      $region31: #{densenet_forward.1} parent=27 // pred_region
        %p156 = scmp.lt.s32.totalorder %s10, 1
        %s157 = scalar_select %p156, %s10, 1
        %s158 = smul.addr %s157, 41
        %s159 = smul.addr %s158, 8
        %s160 = scalar_lea.vmem %s0, %s159
      $region32: #{densenet_forward.1} parent=27 // pred_fallthru
        _
    $region28: #{densenet_forward.1} parent=5 // pred_fallthru
      _
    %p161 = scmp.le.s32.totalorder 1, %s10
    %p162 = scmp.lt.s32.totalorder %s10, 3
    %p163 = pnand %p161, %p162
    %p164 = pneg %p163
    // Predicated region
    $region33: #{densenet_forward.1} parent=5 // pred_check
      _
    $region34: #{densenet_forward.1} parent=5 // pred_check_branch
      %166 = sbr.rel (%p163) target = $region36
    $region35: #{densenet_forward.1} parent=5 // pred_region
      %s167 = ssub.s32 %s10, 1
      %p168 = scmp.lt.s32.totalorder %s15, 1
      %s169 = scalar_select %p168, %s15, 1
      %s170 = smul.addr %s169, 41
      %s171 = smul.addr %s170, 8
      %s172 = scalar_lea.vmem %s0, %s171
      %p173 = pneg %p36
      %p174 = pneg %p33
      %p175 = pneg %p57
      %p176 = pneg %p54
      %p177 = pneg %p78
      %p178 = pneg %p75
      %p179 = pneg %p99
      %p180 = pneg %p96
      %p181 = pneg %p125
      %p182 = pneg %p122
      %p183 = scmp.lt.s32.totalorder %s15, 1
      %s184 = scalar_select %p183, %s15, 1
      %s185 = smul.addr %s184, 46
      %s186 = smul.addr %s185, 8
      %s187 = scalar_lea.vmem %s4, %s186
      %p188 = scmp.lt.s32.totalorder %s15, 1
      %s189 = scalar_select %p188, %s15, 1
      %s190 = smul.addr %s189, 41
      %s191 = smul.addr %s190, 8
      %s192 = scalar_lea.vmem %s0, %s191
      %p193 = scmp.lt.s32.totalorder %s15, 1
      %s194 = scalar_select %p193, %s15, 1
      %s195 = smul.addr %s194, 46
      %s196 = smul.addr %s195, 8
      %s197 = scalar_lea.vmem %s4, %s196
      %198 = vst [vmem:[%s197] sm:$0xff] 0.0
      %199 = vst [vmem:[%s197 + $0x8] sm:$0xff] 0.0
      %200 = vst [vmem:[%s197 + $0x10] sm:$0xff] 0.0
      %201 = vst [vmem:[%s197 + $0x18] sm:$0xff] 0.0
      %202 = vst [vmem:[%s197 + $0x20] sm:$0xff] 0.0
      %203 = vst [vmem:[%s197 + $0x28] sm:$0xff] 0.0
      %204 = vst [vmem:[%s197 + $0x30] sm:$0xff] 0.0
      %205 = vst [vmem:[%s197 + $0x38] sm:$0xff] 0.0
      %206 = vst [vmem:[%s197 + $0x40] sm:$0xff] 0.0
      %207 = vst [vmem:[%s197 + $0x48] sm:$0xff] 0.0
      %208 = vst [vmem:[%s197 + $0x50] sm:$0xff] 0.0
      %209 = vst [vmem:[%s197 + $0x58] sm:$0xff] 0.0
      %210 = vst [vmem:[%s197 + $0x60] sm:$0xff] 0.0
      %211 = vst [vmem:[%s197 + $0x68] sm:$0xff] 0.0
      %212 = vst [vmem:[%s197 + $0x70] sm:$0xff] 0.0
      %213 = vst [vmem:[%s197 + $0x78] sm:$0xff] 0.0
      %214 = vst [vmem:[%s197 + $0x80] sm:$0xff] 0.0
      %215 = vst [vmem:[%s197 + $0x88] sm:$0xff] 0.0
      %216 = vst [vmem:[%s197 + $0x90] sm:$0xff] 0.0
      %217 = vst [vmem:[%s197 + $0x98] sm:$0xff] 0.0
      %218 = vst [vmem:[%s197 + $0xa0] sm:$0xff] 0.0
      %219 = vst [vmem:[%s197 + $0xa8] sm:$0xff] 0.0
      %220 = vst [vmem:[%s197 + $0xb0] sm:$0xff] 0.0
      %221 = vst [vmem:[%s197 + $0xb8] sm:$0xff] 0.0
      %222 = vst [vmem:[%s197 + $0xc0] sm:$0xff] 0.0
      %223 = vst [vmem:[%s197 + $0xc8] sm:$0xff] 0.0
      %224 = vst [vmem:[%s197 + $0xd0] sm:$0xff] 0.0
      %225 = vst [vmem:[%s197 + $0xd8] sm:$0xff] 0.0
      %226 = vst [vmem:[%s197 + $0xe0] sm:$0xff] 0.0
      %227 = vst [vmem:[%s197 + $0xe8] sm:$0xff] 0.0
      %228 = vst [vmem:[%s197 + $0xf0] sm:$0xff] 0.0
      %229 = vst [vmem:[%s197 + $0xf8] sm:$0xff] 0.0
      %230 = vst [vmem:[%s197 + $0x100] sm:$0xff] 0.0
      %231 = vst [vmem:[%s197 + $0x108] sm:$0xff] 0.0
      %232 = vst [vmem:[%s197 + $0x110] sm:$0xff] 0.0
      %233 = vst [vmem:[%s197 + $0x118] sm:$0xff] 0.0
      %234 = vst [vmem:[%s197 + $0x120] sm:$0xff] 0.0
      %235 = vst [vmem:[%s197 + $0x128] sm:$0xff] 0.0
      %236 = vst [vmem:[%s197 + $0x130] sm:$0xff] 0.0
      %237 = vst [vmem:[%s197 + $0x138] sm:$0xff] 0.0
      %238 = vst [vmem:[%s197 + $0x140] sm:$0xff] 0.0
      %239 = vst [vmem:[%s197 + $0x148] sm:$0xff] 0.0
      %240 = vst [vmem:[%s197 + $0x150] sm:$0xff] 0.0
      %241 = vst [vmem:[%s197 + $0x158] sm:$0xff] 0.0
      %242 = vst [vmem:[%s197 + $0x160] sm:$0xff] 0.0
      %243 = vst [vmem:[%s197 + $0x168] sm:$0x3] 0.0
      %v244 = vld [vmem:[%s192] sm:$0xff]
      %v245 = vld [vmem:[%s192 + $0x8] sm:$0xff]
      %v246 = vld [vmem:[%s192 + $0x10] sm:$0xff]
      %v247 = vld [vmem:[%s192 + $0x18] sm:$0xff]
      %v248 = vld [vmem:[%s192 + $0x20] sm:$0xff]
      %v249 = vld [vmem:[%s192 + $0x28] sm:$0xff]
      %v250 = vld [vmem:[%s192 + $0x30] sm:$0xff]
      %v251 = vld [vmem:[%s192 + $0x38] sm:$0xff]
      %v252 = vld [vmem:[%s192 + $0x40] sm:$0xff]
      %v253 = vld [vmem:[%s192 + $0x48] sm:$0xff]
      %v254 = vld [vmem:[%s192 + $0x50] sm:$0xff]
      %v255 = vld [vmem:[%s192 + $0x58] sm:$0xff]
      %v256 = vld [vmem:[%s192 + $0x60] sm:$0xff]
      %v257 = vld [vmem:[%s192 + $0x68] sm:$0xff]
      %v258 = vld [vmem:[%s192 + $0x70] sm:$0xff]
      %v259 = vld [vmem:[%s192 + $0x78] sm:$0xff]
      %v260 = vld [vmem:[%s192 + $0x80] sm:$0xff]
      %v261 = vld [vmem:[%s192 + $0x88] sm:$0xff]
      %v262 = vld [vmem:[%s192 + $0x90] sm:$0xff]
      %v263 = vld [vmem:[%s192 + $0x98] sm:$0xff]
      %v264 = vld [vmem:[%s192 + $0xa0] sm:$0xff]
      %v265 = vld [vmem:[%s192 + $0xa8] sm:$0xff]
      %v266 = vld [vmem:[%s192 + $0xb0] sm:$0xff]
      %v267 = vld [vmem:[%s192 + $0xb8] sm:$0xff]
      %v268 = vld [vmem:[%s192 + $0xc0] sm:$0xff]
      %v269 = vld [vmem:[%s192 + $0xc8] sm:$0xff]
      %v270 = vld [vmem:[%s192 + $0xd0] sm:$0xff]
      %v271 = vld [vmem:[%s192 + $0xd8] sm:$0xff]
      %v272 = vld [vmem:[%s192 + $0xe0] sm:$0xff]
      %v273 = vld [vmem:[%s192 + $0xe8] sm:$0xff]
      %v274 = vld [vmem:[%s192 + $0xf0] sm:$0xff]
      %v275 = vld [vmem:[%s192 + $0xf8] sm:$0xff]
      %v276 = vld [vmem:[%s192 + $0x100] sm:$0xff]
      %v277 = vld [vmem:[%s192 + $0x108] sm:$0xff]
      %v278 = vld [vmem:[%s192 + $0x110] sm:$0xff]
      %v279 = vld [vmem:[%s192 + $0x118] sm:$0xff]
      %v280 = vld [vmem:[%s192 + $0x120] sm:$0xff]
      %v281 = vld [vmem:[%s192 + $0x128] sm:$0xff]
      %v282 = vld [vmem:[%s192 + $0x130] sm:$0xff]
      %v283 = vld [vmem:[%s192 + $0x138] sm:$0xff]
      %v284 = vld [vmem:[%s192 + $0x140] sm:$0xf]
      %285 = vst [vmem:[%s197 + $0x13] sm:$0xff] %v244
      %286 = vst [vmem:[%s197 + $0x1b] sm:$0xff] %v245
      %287 = vst [vmem:[%s197 + $0x23] sm:$0xff] %v246
      %288 = vst [vmem:[%s197 + $0x2b] sm:$0xff] %v247
      %289 = vst [vmem:[%s197 + $0x33] sm:$0xff] %v248
      %290 = vst [vmem:[%s197 + $0x3b] sm:$0xff] %v249
      %291 = vst [vmem:[%s197 + $0x43] sm:$0xff] %v250
      %292 = vst [vmem:[%s197 + $0x4b] sm:$0xff] %v251
      %293 = vst [vmem:[%s197 + $0x53] sm:$0xff] %v252
      %294 = vst [vmem:[%s197 + $0x5b] sm:$0xff] %v253
      %295 = vst [vmem:[%s197 + $0x63] sm:$0xff] %v254
      %296 = vst [vmem:[%s197 + $0x6b] sm:$0xff] %v255
      %297 = vst [vmem:[%s197 + $0x73] sm:$0xff] %v256
      %298 = vst [vmem:[%s197 + $0x7b] sm:$0xff] %v257
      %299 = vst [vmem:[%s197 + $0x83] sm:$0xff] %v258
      %300 = vst [vmem:[%s197 + $0x8b] sm:$0xff] %v259
      %301 = vst [vmem:[%s197 + $0x93] sm:$0xff] %v260
      %302 = vst [vmem:[%s197 + $0x9b] sm:$0xff] %v261
      %303 = vst [vmem:[%s197 + $0xa3] sm:$0xff] %v262
      %304 = vst [vmem:[%s197 + $0xab] sm:$0xff] %v263
      %305 = vst [vmem:[%s197 + $0xb3] sm:$0xff] %v264
      %306 = vst [vmem:[%s197 + $0xbb] sm:$0xff] %v265
      %307 = vst [vmem:[%s197 + $0xc3] sm:$0xff] %v266
      %308 = vst [vmem:[%s197 + $0xcb] sm:$0xff] %v267
      %309 = vst [vmem:[%s197 + $0xd3] sm:$0xff] %v268
      %310 = vst [vmem:[%s197 + $0xdb] sm:$0xff] %v269
      %311 = vst [vmem:[%s197 + $0xe3] sm:$0xff] %v270
      %312 = vst [vmem:[%s197 + $0xeb] sm:$0xff] %v271
      %313 = vst [vmem:[%s197 + $0xf3] sm:$0xff] %v272
      %314 = vst [vmem:[%s197 + $0xfb] sm:$0xff] %v273
      %315 = vst [vmem:[%s197 + $0x103] sm:$0xff] %v274
      %316 = vst [vmem:[%s197 + $0x10b] sm:$0xff] %v275
      %317 = vst [vmem:[%s197 + $0x113] sm:$0xff] %v276
      %318 = vst [vmem:[%s197 + $0x11b] sm:$0xff] %v277
      %319 = vst [vmem:[%s197 + $0x123] sm:$0xff] %v278
      %320 = vst [vmem:[%s197 + $0x12b] sm:$0xff] %v279
      %321 = vst [vmem:[%s197 + $0x133] sm:$0xff] %v280
      %322 = vst [vmem:[%s197 + $0x13b] sm:$0xff] %v281
      %323 = vst [vmem:[%s197 + $0x143] sm:$0xff] %v282
      %324 = vst [vmem:[%s197 + $0x14b] sm:$0xff] %v283
      %325 = vst [vmem:[%s197 + $0x153] sm:$0xf] %v284
      %v326 = vld [vmem:[%s1] sm:$0xff]
      %v327 = vld [vmem:[%s1 + $0x8] sm:$0xff]
      %v328 = vld [vmem:[%s1 + $0x10] sm:$0xff]
      %v329 = vld [vmem:[%s1 + $0x18] sm:$0xff]
      %v330 = vld [vmem:[%s1 + $0x20] sm:$0xff]
      %v331 = vld [vmem:[%s1 + $0x28] sm:$0xff]
      %v332 = vld [vmem:[%s1 + $0x30] sm:$0xff]
      %v333 = vld [vmem:[%s1 + $0x38] sm:$0xff]
      %v334 = vld [vmem:[%s1 + $0x40] sm:$0xff]
      %v335 = vld [vmem:[%s1 + $0x48] sm:$0xff]
      %v336 = vld [vmem:[%s1 + $0x50] sm:$0xff]
      %v337 = vld [vmem:[%s1 + $0x58] sm:$0xff]
      %v338 = vld [vmem:[%s1 + $0x60] sm:$0xff]
      %v339 = vld [vmem:[%s1 + $0x68] sm:$0xff]
      %v340 = vld [vmem:[%s1 + $0x70] sm:$0xff]
      %v341 = vld [vmem:[%s1 + $0x78] sm:$0xff]
      %v342 = vld [vmem:[%s1 + $0x80] sm:$0xff]
      %v343 = vld [vmem:[%s1 + $0x88] sm:$0xff]
      %v344 = vld [vmem:[%s1 + $0x90] sm:$0xff]
      %v345 = vld [vmem:[%s1 + $0x98] sm:$0xff]
      %v346 = vld [vmem:[%s1 + $0xa0] sm:$0xff]
      %v347 = vld [vmem:[%s1 + $0xa8] sm:$0xff]
      %v348 = vld [vmem:[%s1 + $0xb0] sm:$0xff]
      %v349 = vld [vmem:[%s1 + $0xb8] sm:$0xff]
      %v350 = vld [vmem:[%s1 + $0xc0] sm:$0xff]
      %v351 = vld [vmem:[%s1 + $0xc8] sm:$0xff]
      %v352 = vld [vmem:[%s1 + $0xd0] sm:$0xff]
      %v353 = vld [vmem:[%s1 + $0xd8] sm:$0xff]
      %v354 = vld [vmem:[%s1 + $0xe0] sm:$0xff]
      %v355 = vld [vmem:[%s1 + $0xe8] sm:$0xff]
      %v356 = vld [vmem:[%s1 + $0xf0] sm:$0xff]
      %v357 = vld [vmem:[%s1 + $0xf8] sm:$0xff]
      %v358 = vld [vmem:[%s1 + $0x100] sm:$0xff]
      %v359 = vld [vmem:[%s1 + $0x108] sm:$0xff]
      %v360 = vld [vmem:[%s1 + $0x110] sm:$0xff]
      %v361 = vld [vmem:[%s1 + $0x118] sm:$0xff]
      %v362 = vld [vmem:[%s1 + $0x120] sm:$0xff]
      %v363 = vld [vmem:[%s1 + $0x128] sm:$0xff]
      %v364 = vld [vmem:[%s1 + $0x130] sm:$0xff]
      %v365 = vld [vmem:[%s1 + $0x138] sm:$0xff]
      %v366 = vld [vmem:[%s1 + $0x140] sm:$0xf]
      %v367 = vld [vmem:[%s197] sm:$0xff]
      %v368 = vld [vmem:[%s197 + $0x8] sm:$0xff]
      %v369 = vld [vmem:[%s197 + $0x10] sm:$0xff]
      %v370 = vld [vmem:[%s197 + $0x18] sm:$0xff]
      %v371 = vld [vmem:[%s197 + $0x20] sm:$0xff]
      %v372 = vld [vmem:[%s197 + $0x28] sm:$0xff]
      %v373 = vld [vmem:[%s197 + $0x30] sm:$0xff]
      %v374 = vld [vmem:[%s197 + $0x38] sm:$0xff]
      %v375 = vld [vmem:[%s197 + $0x40] sm:$0xff]
      %v376 = vld [vmem:[%s197 + $0x48] sm:$0xff]
      %v377 = vld [vmem:[%s197 + $0x50] sm:$0xff]
      %v378 = vld [vmem:[%s197 + $0x58] sm:$0xff]
      %v379 = vld [vmem:[%s197 + $0x60] sm:$0xff]
      %v380 = vld [vmem:[%s197 + $0x68] sm:$0xff]
      %v381 = vld [vmem:[%s197 + $0x70] sm:$0xff]
      %v382 = vld [vmem:[%s197 + $0x78] sm:$0xff]
      %v383 = vld [vmem:[%s197 + $0x80] sm:$0xff]
      %v384 = vld [vmem:[%s197 + $0x88] sm:$0xff]
      %v385 = vld [vmem:[%s197 + $0x90] sm:$0xff]
      %v386 = vld [vmem:[%s197 + $0x98] sm:$0xff]
      %v387 = vld [vmem:[%s197 + $0xa0] sm:$0xff]
      %v388 = vld [vmem:[%s197 + $0xa8] sm:$0xff]
      %v389 = vld [vmem:[%s197 + $0xb0] sm:$0xff]
      %v390 = vld [vmem:[%s197 + $0xb8] sm:$0xff]
      %v391 = vld [vmem:[%s197 + $0xc0] sm:$0xff]
      %v392 = vld [vmem:[%s197 + $0xc8] sm:$0xff]
      %v393 = vld [vmem:[%s197 + $0xd0] sm:$0xff]
      %v394 = vld [vmem:[%s197 + $0xd8] sm:$0xff]
      %v395 = vld [vmem:[%s197 + $0xe0] sm:$0xff]
      %v396 = vld [vmem:[%s197 + $0xe8] sm:$0xff]
      %v397 = vld [vmem:[%s197 + $0xf0] sm:$0xff]
      %v398 = vld [vmem:[%s197 + $0xf8] sm:$0xff]
      %v399 = vld [vmem:[%s197 + $0x100] sm:$0xff]
      %v400 = vld [vmem:[%s197 + $0x108] sm:$0xff]
      %v401 = vld [vmem:[%s197 + $0x110] sm:$0xff]
      %v402 = vld [vmem:[%s197 + $0x118] sm:$0xff]
      %v403 = vld [vmem:[%s197 + $0x120] sm:$0xff]
      %v404 = vld [vmem:[%s197 + $0x128] sm:$0xff]
      %v405 = vld [vmem:[%s197 + $0x130] sm:$0xff]
      %v406 = vld [vmem:[%s197 + $0x138] sm:$0xff]
      %v407 = vld [vmem:[%s197 + $0x140] sm:$0xf]
      %v408 = vld [vmem:[%s197 + $0x1] sm:$0xff]
      %v409 = vld [vmem:[%s197 + $0x9] sm:$0xff]
      %v410 = vld [vmem:[%s197 + $0x11] sm:$0xff]
      %v411 = vld [vmem:[%s197 + $0x19] sm:$0xff]
      %v412 = vld [vmem:[%s197 + $0x21] sm:$0xff]
      %v413 = vld [vmem:[%s197 + $0x29] sm:$0xff]
      %v414 = vld [vmem:[%s197 + $0x31] sm:$0xff]
      %v415 = vld [vmem:[%s197 + $0x39] sm:$0xff]
      %v416 = vld [vmem:[%s197 + $0x41] sm:$0xff]
      %v417 = vld [vmem:[%s197 + $0x49] sm:$0xff]
      %v418 = vld [vmem:[%s197 + $0x51] sm:$0xff]
      %v419 = vld [vmem:[%s197 + $0x59] sm:$0xff]
      %v420 = vld [vmem:[%s197 + $0x61] sm:$0xff]
      %v421 = vld [vmem:[%s197 + $0x69] sm:$0xff]
      %v422 = vld [vmem:[%s197 + $0x71] sm:$0xff]
      %v423 = vld [vmem:[%s197 + $0x79] sm:$0xff]
      %v424 = vld [vmem:[%s197 + $0x81] sm:$0xff]
      %v425 = vld [vmem:[%s197 + $0x89] sm:$0xff]
      %v426 = vld [vmem:[%s197 + $0x91] sm:$0xff]
      %v427 = vld [vmem:[%s197 + $0x99] sm:$0xff]
      %v428 = vld [vmem:[%s197 + $0xa1] sm:$0xff]
      %v429 = vld [vmem:[%s197 + $0xa9] sm:$0xff]
      %v430 = vld [vmem:[%s197 + $0xb1] sm:$0xff]
      %v431 = vld [vmem:[%s197 + $0xb9] sm:$0xff]
      %v432 = vld [vmem:[%s197 + $0xc1] sm:$0xff]
      %v433 = vld [vmem:[%s197 + $0xc9] sm:$0xff]
      %v434 = vld [vmem:[%s197 + $0xd1] sm:$0xff]
      %v435 = vld [vmem:[%s197 + $0xd9] sm:$0xff]
      %v436 = vld [vmem:[%s197 + $0xe1] sm:$0xff]
      %v437 = vld [vmem:[%s197 + $0xe9] sm:$0xff]
      %v438 = vld [vmem:[%s197 + $0xf1] sm:$0xff]
      %v439 = vld [vmem:[%s197 + $0xf9] sm:$0xff]
      %v440 = vld [vmem:[%s197 + $0x101] sm:$0xff]
      %v441 = vld [vmem:[%s197 + $0x109] sm:$0xff]
      %v442 = vld [vmem:[%s197 + $0x111] sm:$0xff]
      %v443 = vld [vmem:[%s197 + $0x119] sm:$0xff]
      %v444 = vld [vmem:[%s197 + $0x121] sm:$0xff]
      %v445 = vld [vmem:[%s197 + $0x129] sm:$0xff]
      %v446 = vld [vmem:[%s197 + $0x131] sm:$0xff]
      %v447 = vld [vmem:[%s197 + $0x139] sm:$0xff]
      %v448 = vld [vmem:[%s197 + $0x141] sm:$0xf]
      %v449 = vld [vmem:[%s197 + $0x2] sm:$0xff]
      %v450 = vld [vmem:[%s197 + $0xa] sm:$0xff]
      %v451 = vld [vmem:[%s197 + $0x12] sm:$0xff]
      %v452 = vld [vmem:[%s197 + $0x1a] sm:$0xff]
      %v453 = vld [vmem:[%s197 + $0x22] sm:$0xff]
      %v454 = vld [vmem:[%s197 + $0x2a] sm:$0xff]
      %v455 = vld [vmem:[%s197 + $0x32] sm:$0xff]
      %v456 = vld [vmem:[%s197 + $0x3a] sm:$0xff]
      %v457 = vld [vmem:[%s197 + $0x42] sm:$0xff]
      %v458 = vld [vmem:[%s197 + $0x4a] sm:$0xff]
      %v459 = vld [vmem:[%s197 + $0x52] sm:$0xff]
      %v460 = vld [vmem:[%s197 + $0x5a] sm:$0xff]
      %v461 = vld [vmem:[%s197 + $0x62] sm:$0xff]
      %v462 = vld [vmem:[%s197 + $0x6a] sm:$0xff]
      %v463 = vld [vmem:[%s197 + $0x72] sm:$0xff]
      %v464 = vld [vmem:[%s197 + $0x7a] sm:$0xff]
      %v465 = vld [vmem:[%s197 + $0x82] sm:$0xff]
      %v466 = vld [vmem:[%s197 + $0x8a] sm:$0xff]
      %v467 = vld [vmem:[%s197 + $0x92] sm:$0xff]
      %v468 = vld [vmem:[%s197 + $0x9a] sm:$0xff]
      %v469 = vld [vmem:[%s197 + $0xa2] sm:$0xff]
      %v470 = vld [vmem:[%s197 + $0xaa] sm:$0xff]
      %v471 = vld [vmem:[%s197 + $0xb2] sm:$0xff]
      %v472 = vld [vmem:[%s197 + $0xba] sm:$0xff]
      %v473 = vld [vmem:[%s197 + $0xc2] sm:$0xff]
      %v474 = vld [vmem:[%s197 + $0xca] sm:$0xff]
      %v475 = vld [vmem:[%s197 + $0xd2] sm:$0xff]
      %v476 = vld [vmem:[%s197 + $0xda] sm:$0xff]
      %v477 = vld [vmem:[%s197 + $0xe2] sm:$0xff]
      %v478 = vld [vmem:[%s197 + $0xea] sm:$0xff]
      %v479 = vld [vmem:[%s197 + $0xf2] sm:$0xff]
      %v480 = vld [vmem:[%s197 + $0xfa] sm:$0xff]
      %v481 = vld [vmem:[%s197 + $0x102] sm:$0xff]
      %v482 = vld [vmem:[%s197 + $0x10a] sm:$0xff]
      %v483 = vld [vmem:[%s197 + $0x112] sm:$0xff]
      %v484 = vld [vmem:[%s197 + $0x11a] sm:$0xff]
      %v485 = vld [vmem:[%s197 + $0x122] sm:$0xff]
      %v486 = vld [vmem:[%s197 + $0x12a] sm:$0xff]
      %v487 = vld [vmem:[%s197 + $0x132] sm:$0xff]
      %v488 = vld [vmem:[%s197 + $0x13a] sm:$0xff]
      %v489 = vld [vmem:[%s197 + $0x142] sm:$0xf]
      %v490 = vld [vmem:[%s197 + $0x142] sm:$0xff]
      %v491 = vld [vmem:[%s197 + $0x14a] sm:$0xff]
      %v492 = vld [vmem:[%s197 + $0x152] sm:$0xf]
      %v493 = vld [vmem:[%s197 + $0x13] sm:$0xff]
      %v494 = vld [vmem:[%s197 + $0x1b] sm:$0xff]
      %v495 = vld [vmem:[%s197 + $0x23] sm:$0xff]
      %v496 = vld [vmem:[%s197 + $0x2b] sm:$0xff]
      %v497 = vld [vmem:[%s197 + $0x33] sm:$0xff]
      %v498 = vld [vmem:[%s197 + $0x3b] sm:$0xff]
      %v499 = vld [vmem:[%s197 + $0x43] sm:$0xff]
      %v500 = vld [vmem:[%s197 + $0x4b] sm:$0xff]
      %v501 = vld [vmem:[%s197 + $0x53] sm:$0xff]
      %v502 = vld [vmem:[%s197 + $0x5b] sm:$0xff]
      %v503 = vld [vmem:[%s197 + $0x63] sm:$0xff]
      %v504 = vld [vmem:[%s197 + $0x6b] sm:$0xff]
      %v505 = vld [vmem:[%s197 + $0x73] sm:$0xff]
      %v506 = vld [vmem:[%s197 + $0x7b] sm:$0xff]
      %v507 = vld [vmem:[%s197 + $0x83] sm:$0xff]
      %v508 = vld [vmem:[%s197 + $0x8b] sm:$0xff]
      %v509 = vld [vmem:[%s197 + $0x93] sm:$0xff]
      %v510 = vld [vmem:[%s197 + $0x9b] sm:$0xff]
      %v511 = vld [vmem:[%s197 + $0xa3] sm:$0xff]
      %v512 = vld [vmem:[%s197 + $0xab] sm:$0xff]
      %v513 = vld [vmem:[%s197 + $0xb3] sm:$0xff]
      %v514 = vld [vmem:[%s197 + $0xbb] sm:$0xff]
      %v515 = vld [vmem:[%s197 + $0xc3] sm:$0xff]
      %v516 = vld [vmem:[%s197 + $0xcb] sm:$0xff]
      %v517 = vld [vmem:[%s197 + $0xd3] sm:$0xff]
      %v518 = vld [vmem:[%s197 + $0xdb] sm:$0xff]
      %v519 = vld [vmem:[%s197 + $0xe3] sm:$0xff]
      %v520 = vld [vmem:[%s197 + $0xeb] sm:$0xff]
      %v521 = vld [vmem:[%s197 + $0xf3] sm:$0xff]
      %v522 = vld [vmem:[%s197 + $0xfb] sm:$0xff]
      %v523 = vld [vmem:[%s197 + $0x103] sm:$0xff]
      %v524 = vld [vmem:[%s197 + $0x10b] sm:$0xff]
      %v525 = vld [vmem:[%s197 + $0x113] sm:$0xff]
      %v526 = vld [vmem:[%s197 + $0x11b] sm:$0xff]
      %v527 = vld [vmem:[%s197 + $0x123] sm:$0xff]
      %v528 = vld [vmem:[%s197 + $0x12b] sm:$0xff]
      %v529 = vld [vmem:[%s197 + $0x133] sm:$0xff]
      %v530 = vld [vmem:[%s197 + $0x13b] sm:$0xff]
      %v531 = vld [vmem:[%s197 + $0x143] sm:$0xff]
      %v532 = vld [vmem:[%s197 + $0x14b] sm:$0xff]
      %v533 = vld [vmem:[%s197 + $0x153] sm:$0xf]
      %v534 = vld [vmem:[%s197 + $0x14] sm:$0xff]
      %v535 = vld [vmem:[%s197 + $0x1c] sm:$0xff]
      %v536 = vld [vmem:[%s197 + $0x24] sm:$0xff]
      %v537 = vld [vmem:[%s197 + $0x2c] sm:$0xff]
      %v538 = vld [vmem:[%s197 + $0x34] sm:$0xff]
      %v539 = vld [vmem:[%s197 + $0x3c] sm:$0xff]
      %v540 = vld [vmem:[%s197 + $0x44] sm:$0xff]
      %v541 = vld [vmem:[%s197 + $0x4c] sm:$0xff]
      %v542 = vld [vmem:[%s197 + $0x54] sm:$0xff]
      %v543 = vld [vmem:[%s197 + $0x5c] sm:$0xff]
      %v544 = vld [vmem:[%s197 + $0x64] sm:$0xff]
      %v545 = vld [vmem:[%s197 + $0x6c] sm:$0xff]
      %v546 = vld [vmem:[%s197 + $0x74] sm:$0xff]
      %v547 = vld [vmem:[%s197 + $0x7c] sm:$0xff]
      %v548 = vld [vmem:[%s197 + $0x84] sm:$0xff]
      %v549 = vld [vmem:[%s197 + $0x8c] sm:$0xff]
      %v550 = vld [vmem:[%s197 + $0x94] sm:$0xff]
      %v551 = vld [vmem:[%s197 + $0x9c] sm:$0xff]
      %v552 = vld [vmem:[%s197 + $0xa4] sm:$0xff]
      %v553 = vld [vmem:[%s197 + $0xac] sm:$0xff]
      %v554 = vld [vmem:[%s197 + $0xb4] sm:$0xff]
      %v555 = vld [vmem:[%s197 + $0xbc] sm:$0xff]
      %v556 = vld [vmem:[%s197 + $0xc4] sm:$0xff]
      %v557 = vld [vmem:[%s197 + $0xcc] sm:$0xff]
      %v558 = vld [vmem:[%s197 + $0xd4] sm:$0xff]
      %v559 = vld [vmem:[%s197 + $0xdc] sm:$0xff]
      %v560 = vld [vmem:[%s197 + $0xe4] sm:$0xff]
      %v561 = vld [vmem:[%s197 + $0xec] sm:$0xff]
      %v562 = vld [vmem:[%s197 + $0xf4] sm:$0xff]
      %v563 = vld [vmem:[%s197 + $0xfc] sm:$0xff]
      %v564 = vld [vmem:[%s197 + $0x104] sm:$0xff]
      %v565 = vld [vmem:[%s197 + $0x10c] sm:$0xff]
      %v566 = vld [vmem:[%s197 + $0x114] sm:$0xff]
      %v567 = vld [vmem:[%s197 + $0x11c] sm:$0xff]
      %v568 = vld [vmem:[%s197 + $0x124] sm:$0xff]
      %v569 = vld [vmem:[%s197 + $0x12c] sm:$0xff]
      %v570 = vld [vmem:[%s197 + $0x134] sm:$0xff]
      %v571 = vld [vmem:[%s197 + $0x13c] sm:$0xff]
      %v572 = vld [vmem:[%s197 + $0x144] sm:$0xff]
      %v573 = vld [vmem:[%s197 + $0x14c] sm:$0xff]
      %v574 = vld [vmem:[%s197 + $0x154] sm:$0xf]
      %v575 = vld [vmem:[%s197 + $0x154] sm:$0xff]
      %v576 = vld [vmem:[%s197 + $0x15c] sm:$0xff]
      %v577 = vld [vmem:[%s197 + $0x164] sm:$0xf]
      %v578 = vld [vmem:[%s197 + $0x25] sm:$0xff]
      %v579 = vld [vmem:[%s197 + $0x2d] sm:$0xff]
      %v580 = vld [vmem:[%s197 + $0x35] sm:$0xff]
      %v581 = vld [vmem:[%s197 + $0x3d] sm:$0xff]
      %v582 = vld [vmem:[%s197 + $0x45] sm:$0xff]
      %v583 = vld [vmem:[%s197 + $0x4d] sm:$0xff]
      %v584 = vld [vmem:[%s197 + $0x55] sm:$0xff]
      %v585 = vld [vmem:[%s197 + $0x5d] sm:$0xff]
      %v586 = vld [vmem:[%s197 + $0x65] sm:$0xff]
      %v587 = vld [vmem:[%s197 + $0x6d] sm:$0xff]
      %v588 = vld [vmem:[%s197 + $0x75] sm:$0xff]
      %v589 = vld [vmem:[%s197 + $0x7d] sm:$0xff]
      %v590 = vld [vmem:[%s197 + $0x85] sm:$0xff]
      %v591 = vld [vmem:[%s197 + $0x8d] sm:$0xff]
      %v592 = vld [vmem:[%s197 + $0x95] sm:$0xff]
      %v593 = vld [vmem:[%s197 + $0x9d] sm:$0xff]
      %v594 = vld [vmem:[%s197 + $0xa5] sm:$0xff]
      %v595 = vld [vmem:[%s197 + $0xad] sm:$0xff]
      %v596 = vld [vmem:[%s197 + $0xb5] sm:$0xff]
      %v597 = vld [vmem:[%s197 + $0xbd] sm:$0xff]
      %v598 = vld [vmem:[%s197 + $0xc5] sm:$0xff]
      %v599 = vld [vmem:[%s197 + $0xcd] sm:$0xff]
      %v600 = vld [vmem:[%s197 + $0xd5] sm:$0xff]
      %v601 = vld [vmem:[%s197 + $0xdd] sm:$0xff]
      %v602 = vld [vmem:[%s197 + $0xe5] sm:$0xff]
      %v603 = vld [vmem:[%s197 + $0xed] sm:$0xff]
      %v604 = vld [vmem:[%s197 + $0xf5] sm:$0xff]
      %v605 = vld [vmem:[%s197 + $0xfd] sm:$0xff]
      %v606 = vld [vmem:[%s197 + $0x105] sm:$0xff]
      %v607 = vld [vmem:[%s197 + $0x10d] sm:$0xff]
      %v608 = vld [vmem:[%s197 + $0x115] sm:$0xff]
      %v609 = vld [vmem:[%s197 + $0x11d] sm:$0xff]
      %v610 = vld [vmem:[%s197 + $0x125] sm:$0xff]
      %v611 = vld [vmem:[%s197 + $0x12d] sm:$0xff]
      %v612 = vld [vmem:[%s197 + $0x135] sm:$0xff]
      %v613 = vld [vmem:[%s197 + $0x13d] sm:$0xff]
      %v614 = vld [vmem:[%s197 + $0x145] sm:$0xff]
      %v615 = vld [vmem:[%s197 + $0x14d] sm:$0xff]
      %v616 = vld [vmem:[%s197 + $0x155] sm:$0xff]
      %v617 = vld [vmem:[%s197 + $0x15d] sm:$0xff]
      %v618 = vld [vmem:[%s197 + $0x165] sm:$0xf]
      %v619 = vld [vmem:[%s197 + $0x26] sm:$0xff]
      %v620 = vld [vmem:[%s197 + $0x2e] sm:$0xff]
      %v621 = vld [vmem:[%s197 + $0x36] sm:$0xff]
      %v622 = vld [vmem:[%s197 + $0x3e] sm:$0xff]
      %v623 = vld [vmem:[%s197 + $0x46] sm:$0xff]
      %v624 = vld [vmem:[%s197 + $0x4e] sm:$0xff]
      %v625 = vld [vmem:[%s197 + $0x56] sm:$0xff]
      %v626 = vld [vmem:[%s197 + $0x5e] sm:$0xff]
      %v627 = vld [vmem:[%s197 + $0x66] sm:$0xff]
      %v628 = vld [vmem:[%s197 + $0x6e] sm:$0xff]
      %v629 = vld [vmem:[%s197 + $0x76] sm:$0xff]
      %v630 = vld [vmem:[%s197 + $0x7e] sm:$0xff]
      %v631 = vld [vmem:[%s197 + $0x86] sm:$0xff]
      %v632 = vld [vmem:[%s197 + $0x8e] sm:$0xff]
      %v633 = vld [vmem:[%s197 + $0x96] sm:$0xff]
      %v634 = vld [vmem:[%s197 + $0x9e] sm:$0xff]
      %v635 = vld [vmem:[%s197 + $0xa6] sm:$0xff]
      %v636 = vld [vmem:[%s197 + $0xae] sm:$0xff]
      %v637 = vld [vmem:[%s197 + $0xb6] sm:$0xff]
      %v638 = vld [vmem:[%s197 + $0xbe] sm:$0xff]
      %v639 = vld [vmem:[%s197 + $0xc6] sm:$0xff]
      %v640 = vld [vmem:[%s197 + $0xce] sm:$0xff]
      %v641 = vld [vmem:[%s197 + $0xd6] sm:$0xff]
      %v642 = vld [vmem:[%s197 + $0xde] sm:$0xff]
      %v643 = vld [vmem:[%s197 + $0xe6] sm:$0xff]
      %v644 = vld [vmem:[%s197 + $0xee] sm:$0xff]
      %v645 = vld [vmem:[%s197 + $0xf6] sm:$0xff]
      %v646 = vld [vmem:[%s197 + $0xfe] sm:$0xff]
      %v647 = vld [vmem:[%s197 + $0x106] sm:$0xff]
      %v648 = vld [vmem:[%s197 + $0x10e] sm:$0xff]
      %v649 = vld [vmem:[%s197 + $0x116] sm:$0xff]
      %v650 = vld [vmem:[%s197 + $0x11e] sm:$0xff]
      %v651 = vld [vmem:[%s197 + $0x126] sm:$0xff]
      %v652 = vld [vmem:[%s197 + $0x12e] sm:$0xff]
      %v653 = vld [vmem:[%s197 + $0x136] sm:$0xff]
      %v654 = vld [vmem:[%s197 + $0x13e] sm:$0xff]
      %v655 = vld [vmem:[%s197 + $0x146] sm:$0xff]
      %v656 = vld [vmem:[%s197 + $0x14e] sm:$0xff]
      %v657 = vld [vmem:[%s197 + $0x156] sm:$0xff]
      %v658 = vld [vmem:[%s197 + $0x15e] sm:$0xff]
      %v659 = vld [vmem:[%s197 + $0x166] sm:$0xf]
      %v660 = vld [vmem:[%s2] sm:$0xff]
      %v661 = vld [vmem:[%s2 + $0x8] sm:$0xff]
      %v662 = vld [vmem:[%s2 + $0x10] sm:$0xff]
      %v663 = vld [vmem:[%s2 + $0x18] sm:$0xff]
      %v664 = vld [vmem:[%s2 + $0x20] sm:$0xff]
      %v665 = vld [vmem:[%s2 + $0x28] sm:$0xff]
      %v666 = vld [vmem:[%s2 + $0x30] sm:$0xff]
      %v667 = vld [vmem:[%s2 + $0x38] sm:$0xff]
      %v668 = vld [vmem:[%s2 + $0x40] sm:$0xff]
      %v669 = vld [vmem:[%s2 + $0x48] sm:$0xff]
      %v670 = vld [vmem:[%s2 + $0x50] sm:$0xff]
      %v671 = vld [vmem:[%s2 + $0x58] sm:$0xff]
      %v672 = vld [vmem:[%s2 + $0x60] sm:$0xff]
      %v673 = vld [vmem:[%s2 + $0x68] sm:$0xff]
      %v674 = vld [vmem:[%s2 + $0x70] sm:$0xff]
      %v675 = vld [vmem:[%s2 + $0x78] sm:$0xff]
      %v676 = vld [vmem:[%s2 + $0x80] sm:$0xff]
      %v677 = vld [vmem:[%s2 + $0x88] sm:$0xff]
      %v678 = vld [vmem:[%s2 + $0x90] sm:$0xff]
      %v679 = vld [vmem:[%s2 + $0x98] sm:$0xff]
      %v680 = vld [vmem:[%s2 + $0xa0] sm:$0xff]
      %v681 = vld [vmem:[%s2 + $0xa8] sm:$0xff]
      %v682 = vld [vmem:[%s2 + $0xb0] sm:$0xff]
      %v683 = vld [vmem:[%s2 + $0xb8] sm:$0xff]
      %v684 = vld [vmem:[%s2 + $0xc0] sm:$0xff]
      %v685 = vld [vmem:[%s2 + $0xc8] sm:$0xff]
      %v686 = vld [vmem:[%s2 + $0xd0] sm:$0xff]
      %v687 = vld [vmem:[%s2 + $0xd8] sm:$0xff]
      %v688 = vld [vmem:[%s2 + $0xe0] sm:$0xff]
      %v689 = vld [vmem:[%s2 + $0xe8] sm:$0xff]
      %v690 = vld [vmem:[%s2 + $0xf0] sm:$0xff]
      %v691 = vld [vmem:[%s2 + $0xf8] sm:$0xff]
      %v692 = vld [vmem:[%s2 + $0x100] sm:$0xff]
      %v693 = vld [vmem:[%s2 + $0x108] sm:$0xff]
      %v694 = vld [vmem:[%s2 + $0x110] sm:$0xff]
      %v695 = vld [vmem:[%s2 + $0x118] sm:$0xff]
      %v696 = vld [vmem:[%s2 + $0x120] sm:$0xff]
      %v697 = vld [vmem:[%s2 + $0x128] sm:$0xff]
      %v698 = vld [vmem:[%s2 + $0x130] sm:$0xff]
      %v699 = vld [vmem:[%s2 + $0x138] sm:$0xff]
      %v700 = vld [vmem:[%s2 + $0x140] sm:$0xff]
      %v701 = vld [vmem:[%s2 + $0x148] sm:$0xff]
      %v702 = vld [vmem:[%s2 + $0x150] sm:$0xff]
      %v703 = vld [vmem:[%s2 + $0x158] sm:$0xff]
      %v704 = vld [vmem:[%s2 + $0x160] sm:$0xff]
      %v705 = vld [vmem:[%s2 + $0x168] sm:$0xff]
      %v706 = vld [vmem:[%s2 + $0x170] sm:$0xff]
      %v707 = vld [vmem:[%s2 + $0x178] sm:$0xff]
      %v708 = vld [vmem:[%s2 + $0x180] sm:$0xff]
      %v709 = vld [vmem:[%s2 + $0x188] sm:$0xff]
      %v710 = vld [vmem:[%s2 + $0x190] sm:$0xff]
      %v711 = vld [vmem:[%s2 + $0x198] sm:$0xff]
      %v712 = vld [vmem:[%s2 + $0x1a0] sm:$0xff]
      %v713 = vld [vmem:[%s2 + $0x1a8] sm:$0xff]
      %v714 = vld [vmem:[%s2 + $0x1b0] sm:$0xff]
      %v715 = vld [vmem:[%s2 + $0x1b8] sm:$0xff]
      %v716 = vld [vmem:[%s2 + $0x1c0] sm:$0xff]
      %v717 = vld [vmem:[%s2 + $0x1c8] sm:$0xff]
      %v718 = vld [vmem:[%s2 + $0x1d0] sm:$0xff]
      %v719 = vld [vmem:[%s2 + $0x1d8] sm:$0xff]
      %v720 = vld [vmem:[%s2 + $0x1e0] sm:$0xff]
      %v721 = vld [vmem:[%s2 + $0x1e8] sm:$0xff]
      %v722 = vld [vmem:[%s2 + $0x1f0] sm:$0xff]
      %v723 = vld [vmem:[%s2 + $0x1f8] sm:$0xff]
      %v724 = vld [vmem:[%s2 + $0x200] sm:$0xff]
      %v725 = vld [vmem:[%s2 + $0x208] sm:$0xff]
      %v726 = vld [vmem:[%s2 + $0x210] sm:$0xff]
      %v727 = vld [vmem:[%s2 + $0x218] sm:$0xff]
      %v728 = vld [vmem:[%s2 + $0x220] sm:$0xff]
      %v729 = vld [vmem:[%s2 + $0x228] sm:$0xff]
      %v730 = vld [vmem:[%s2 + $0x230] sm:$0xff]
      %v731 = vld [vmem:[%s2 + $0x238] sm:$0xff]
      %v732 = vld [vmem:[%s2 + $0x240] sm:$0xff]
      %v733 = vld [vmem:[%s2 + $0x248] sm:$0xff]
      %v734 = vld [vmem:[%s2 + $0x250] sm:$0xff]
      %v735 = vld [vmem:[%s2 + $0x258] sm:$0xff]
      %v736 = vld [vmem:[%s2 + $0x260] sm:$0xff]
      %v737 = vld [vmem:[%s2 + $0x268] sm:$0xff]
      %v738 = vld [vmem:[%s2 + $0x270] sm:$0xff]
      %v739 = vld [vmem:[%s2 + $0x278] sm:$0xff]
      %v740 = vld [vmem:[%s2 + $0x280] sm:$0xff]
      %v741 = vld [vmem:[%s2 + $0x288] sm:$0xff]
      %v742 = vld [vmem:[%s2 + $0x290] sm:$0xff]
      %v743 = vld [vmem:[%s2 + $0x298] sm:$0xff]
      %v744 = vld [vmem:[%s2 + $0x2a0] sm:$0xff]
      %v745 = vld [vmem:[%s2 + $0x2a8] sm:$0xff]
      %v746 = vld [vmem:[%s2 + $0x2b0] sm:$0xff]
      %v747 = vld [vmem:[%s2 + $0x2b8] sm:$0xff]
      %v748 = vld [vmem:[%s2 + $0x2c0] sm:$0xff]
      %v749 = vld [vmem:[%s2 + $0x2c8] sm:$0xff]
      %v750 = vld [vmem:[%s2 + $0x2d0] sm:$0xff]
      %v751 = vld [vmem:[%s2 + $0x2d8] sm:$0xff]
      %v752 = vld [vmem:[%s2 + $0x2e0] sm:$0xff]
      %v753 = vld [vmem:[%s2 + $0x2e8] sm:$0xff]
      %v754 = vld [vmem:[%s2 + $0x2f0] sm:$0xff]
      %v755 = vld [vmem:[%s2 + $0x2f8] sm:$0xff]
      %v756 = vld [vmem:[%s2 + $0x300] sm:$0xff]
      %v757 = vld [vmem:[%s2 + $0x308] sm:$0xff]
      %v758 = vld [vmem:[%s2 + $0x310] sm:$0xff]
      %v759 = vld [vmem:[%s2 + $0x318] sm:$0xff]
      %v760 = vld [vmem:[%s2 + $0x320] sm:$0xff]
      %v761 = vld [vmem:[%s2 + $0x328] sm:$0xff]
      %v762 = vld [vmem:[%s2 + $0x330] sm:$0xff]
      %v763 = vld [vmem:[%s2 + $0x338] sm:$0xff]
      %v764 = vld [vmem:[%s2 + $0x340] sm:$0xff]
      %v765 = vld [vmem:[%s2 + $0x348] sm:$0xff]
      %v766 = vld [vmem:[%s2 + $0x350] sm:$0xff]
      %v767 = vld [vmem:[%s2 + $0x358] sm:$0xff]
      %v768 = vld [vmem:[%s2 + $0x360] sm:$0xff]
      %v769 = vld [vmem:[%s2 + $0x368] sm:$0xff]
      %v770 = vld [vmem:[%s2 + $0x370] sm:$0xff]
      %v771 = vld [vmem:[%s2 + $0x378] sm:$0xff]
      %v772 = vld [vmem:[%s2 + $0x380] sm:$0xff]
      %v773 = vld [vmem:[%s2 + $0x388] sm:$0xff]
      %v774 = vld [vmem:[%s2 + $0x390] sm:$0xff]
      %v775 = vld [vmem:[%s2 + $0x398] sm:$0xff]
      %v776 = vld [vmem:[%s2 + $0x3a0] sm:$0xff]
      %v777 = vld [vmem:[%s2 + $0x3a8] sm:$0xff]
      %v778 = vld [vmem:[%s2 + $0x3b0] sm:$0xff]
      %v779 = vld [vmem:[%s2 + $0x3b8] sm:$0xff]
      %v780 = vld [vmem:[%s2 + $0x3c0] sm:$0xff]
      %v781 = vld [vmem:[%s2 + $0x3c8] sm:$0xff]
      %v782 = vld [vmem:[%s2 + $0x3d0] sm:$0xff]
      %v783 = vld [vmem:[%s2 + $0x3d8] sm:$0xff]
      %v784 = vld [vmem:[%s2 + $0x3e0] sm:$0xff]
      %v785 = vld [vmem:[%s2 + $0x3e8] sm:$0xff]
      %v786 = vld [vmem:[%s2 + $0x3f0] sm:$0xff]
      %v787 = vld [vmem:[%s2 + $0x3f8] sm:$0xff]
      %v788 = vld [vmem:[%s2 + $0x400] sm:$0xff]
      %v789 = vld [vmem:[%s2 + $0x408] sm:$0xff]
      %v790 = vld [vmem:[%s2 + $0x410] sm:$0xff]
      %v791 = vld [vmem:[%s2 + $0x418] sm:$0xff]
      %v792 = vld [vmem:[%s2 + $0x420] sm:$0xff]
      %v793 = vld [vmem:[%s2 + $0x428] sm:$0xff]
      %v794 = vld [vmem:[%s2 + $0x430] sm:$0xff]
      %v795 = vld [vmem:[%s2 + $0x438] sm:$0xff]
      %v796 = vld [vmem:[%s2 + $0x440] sm:$0xff]
      %v797 = vld [vmem:[%s2 + $0x448] sm:$0xff]
      %v798 = vld [vmem:[%s2 + $0x450] sm:$0xff]
      %v799 = vld [vmem:[%s2 + $0x458] sm:$0xff]
      %v800 = vld [vmem:[%s2 + $0x460] sm:$0xff]
      %v801 = vld [vmem:[%s2 + $0x468] sm:$0xff]
      %v802 = vld [vmem:[%s2 + $0x470] sm:$0xff]
      %v803 = vld [vmem:[%s2 + $0x478] sm:$0xff]
      %v804 = vld [vmem:[%s3] sm:$0x1]
      %v806 = vlaneseq
      %v807 = vshrl.u32 %v806, 7
      %v808 = vsub.s32 0, %v807
      %v809 = vrot.slane %v804, %v808
      %811 = vmatprep.subr.mxu0 0.0
      %812 = vmatpush1.msra.mxu0 %v660
      %813 = vmatprep.subr.mxu0 0.0
      %814 = vmatpush1.msra.mxu0 %v661
      %815 = vmatprep.subr.mxu0 0.0
      %816 = vmatpush1.msra.mxu0 %v662
      %817 = vmatprep.subr.mxu0 0.0
      %818 = vmatpush1.msra.mxu0 %v663
      %819 = vmatprep.subr.mxu0 0.0
      %820 = vmatpush1.msra.mxu0 %v664
      %821 = vmatprep.subr.mxu0 0.0
      %822 = vmatpush1.msra.mxu0 %v665
      %823 = vmatprep.subr.mxu0 0.0
      %824 = vmatpush1.msra.mxu0 %v666
      %825 = vmatprep.subr.mxu0 0.0
      %826 = vmatpush1.msra.mxu0 %v667
      %827 = vmatprep.subr.mxu0 0.0
      %828 = vmatpush1.msra.mxu0 %v668
      %829 = vmatprep.subr.mxu0 0.0
      %830 = vmatpush1.msra.mxu0 %v669
      %831 = vmatprep.subr.mxu0 0.0
      %832 = vmatpush1.msra.mxu0 %v670
      %833 = vmatprep.subr.mxu0 0.0
      %834 = vmatpush1.msra.mxu0 %v671
      %835 = vmatprep.subr.mxu0 0.0
      %836 = vmatpush1.msra.mxu0 %v672
      %837 = vmatprep.subr.mxu0 0.0
      %838 = vmatpush1.msra.mxu0 %v673
      %839 = vmatprep.subr.mxu0 0.0
      %840 = vmatpush1.msra.mxu0 %v674
      %841 = vmatprep.subr.mxu0 0.0
      %842 = vmatpush1.msra.mxu0 %v675
      %843 = vmatprep.subr.mxu0 0.0
      %844 = vmatpush1.msra.mxu0 %v676
      %845 = vmatprep.subr.mxu0 0.0
      %846 = vmatpush1.msra.mxu0 %v677
      %847 = vmatprep.subr.mxu0 0.0
      %848 = vmatpush1.msra.mxu0 %v678
      %849 = vmatprep.subr.mxu0 0.0
      %850 = vmatpush1.msra.mxu0 %v679
      %851 = vmatprep.subr.mxu0 0.0
      %852 = vmatpush1.msra.mxu0 %v680
      %853 = vmatprep.subr.mxu0 0.0
      %854 = vmatpush1.msra.mxu0 %v681
      %855 = vmatprep.subr.mxu0 0.0
      %856 = vmatpush1.msra.mxu0 %v682
      %857 = vmatprep.subr.mxu0 0.0
      %858 = vmatpush1.msra.mxu0 %v683
      %859 = vmatprep.subr.mxu0 0.0
      %860 = vmatpush1.msra.mxu0 %v684
      %861 = vmatprep.subr.mxu0 0.0
      %862 = vmatpush1.msra.mxu0 %v685
      %863 = vmatprep.subr.mxu0 0.0
      %864 = vmatpush1.msra.mxu0 %v686
      %865 = vmatprep.subr.mxu0 0.0
      %866 = vmatpush1.msra.mxu0 %v687
      %867 = vmatprep.subr.mxu0 0.0
      %868 = vmatpush1.msra.mxu0 %v688
      %869 = vmatprep.subr.mxu0 0.0
      %870 = vmatpush1.msra.mxu0 %v689
      %871 = vmatprep.subr.mxu0 0.0
      %872 = vmatpush1.msra.mxu0 %v690
      %873 = vmatprep.subr.mxu0 0.0
      %874 = vmatpush1.msra.mxu0 %v691
      %875 = vmatprep.mubr.f32.mxu0 %v408
      %876 = vmatmul.mubr.f32.gmra.mrb[0].mxu0 %v367
      %v877 = vpop.f32.mrb[0].mxu0
      %v878 = vadd.f32 %v809, %v877
      %v879 = vpop.f32.mrb[0].mxu0
      %880 = vmatprep.mubr.f32.mxu0 %v409
      %881 = vmatmul.mubr.f32.gmra.mrb[0].mxu0 %v368
      %v882 = vpop.f32.mrb[0].mxu0
      %v883 = vadd.f32 %v809, %v882
      %v884 = vpop.f32.mrb[0].mxu0
      %885 = vmatprep.mubr.f32.mxu0 %v410
      %886 = vmatmul.mubr.f32.gmra.mrb[0].mxu0 %v369
      %v887 = vpop.f32.mrb[0].mxu0
      %v888 = vadd.f32 %v809, %v887
      %v889 = vpop.f32.mrb[0].mxu0
      %890 = vmatprep.mubr.f32.mxu0 %v411
      %891 = vmatmul.mubr.f32.gmra.mrb[0].mxu0 %v370
      %v892 = vpop.f32.mrb[0].mxu0
      %v893 = vadd.f32 %v809, %v892
      %v894 = vpop.f32.mrb[0].mxu0
      %895 = vmatprep.mubr.f32.mxu0 %v412
      %896 = vmatmul.mubr.f32.gmra.mrb[0].mxu0 %v371
      %v897 = vpop.f32.mrb[0].mxu0
      %v898 = vadd.f32 %v809, %v897
      %v899 = vpop.f32.mrb[0].mxu0
      %900 = vmatprep.mubr.f32.mxu0 %v413
      %901 = vmatmul.mubr.f32.gmra.mrb[0].mxu0 %v372
      %v902 = vpop.f32.mrb[0].mxu0
      %v903 = vadd.f32 %v809, %v902
      %v904 = vpop.f32.mrb[0].mxu0
      %905 = vmatprep.mubr.f32.mxu0 %v414
      %906 = vmatmul.mubr.f32.gmra.mrb[0].mxu0 %v373
      %v907 = vpop.f32.mrb[0].mxu0
      %v908 = vadd.f32 %v809, %v907
      %v909 = vpop.f32.mrb[0].mxu0
      %910 = vmatprep.mubr.f32.mxu0 %v415
      %911 = vmatmul.mubr.f32.gmra.mrb[0].mxu0 %v374
      %v912 = vpop.f32.mrb[0].mxu0
      %v913 = vadd.f32 %v809, %v912
      %v914 = vpop.f32.mrb[0].mxu0
      %915 = vmatprep.mubr.f32.mxu0 %v416
      %916 = vmatmul.mubr.f32.gmra.mrb[0].mxu0 %v375
      %v917 = vpop.f32.mrb[0].mxu0
      %v918 = vadd.f32 %v809, %v917
      %v919 = vpop.f32.mrb[0].mxu0
      %920 = vmatprep.mubr.f32.mxu0 %v417
      %921 = vmatmul.mubr.f32.gmra.mrb[0].mxu0 %v376
      %v922 = vpop.f32.mrb[0].mxu0
      %v923 = vadd.f32 %v809, %v922
      %v924 = vpop.f32.mrb[0].mxu0
      %925 = vmatprep.mubr.f32.mxu0 %v418
      %926 = vmatmul.mubr.f32.gmra.mrb[0].mxu0 %v377
      %v927 = vpop.f32.mrb[0].mxu0
      %v928 = vadd.f32 %v809, %v927
      %v929 = vpop.f32.mrb[0].mxu0
      %930 = vmatprep.mubr.f32.mxu0 %v419
      %931 = vmatmul.mubr.f32.gmra.mrb[0].mxu0 %v378
      %v932 = vpop.f32.mrb[0].mxu0
      %v933 = vadd.f32 %v809, %v932
      %v934 = vpop.f32.mrb[0].mxu0
      %935 = vmatprep.mubr.f32.mxu0 %v420
      %936 = vmatmul.mubr.f32.gmra.mrb[0].mxu0 %v379
      %v937 = vpop.f32.mrb[0].mxu0
      %v938 = vadd.f32 %v809, %v937
      %v939 = vpop.f32.mrb[0].mxu0
      %940 = vmatprep.mubr.f32.mxu0 %v421
      %941 = vmatmul.mubr.f32.gmra.mrb[0].mxu0 %v380
      %v942 = vpop.f32.mrb[0].mxu0
      %v943 = vadd.f32 %v809, %v942
      %v944 = vpop.f32.mrb[0].mxu0
      %945 = vmatprep.mubr.f32.mxu0 %v422
      %946 = vmatmul.mubr.f32.gmra.mrb[0].mxu0 %v381
      %v947 = vpop.f32.mrb[0].mxu0
      %v948 = vadd.f32 %v809, %v947
      %v949 = vpop.f32.mrb[0].mxu0
      %950 = vmatprep.mubr.f32.mxu0 %v423
      %951 = vmatmul.mubr.f32.gmra.mrb[0].mxu0 %v382
      %v952 = vpop.f32.mrb[0].mxu0
      %v953 = vadd.f32 %v809, %v952
      %v954 = vpop.f32.mrb[0].mxu0
      %955 = vmatprep.mubr.f32.mxu0 %v424
      %956 = vmatmul.mubr.f32.gmra.mrb[0].mxu0 %v383
      %v957 = vpop.f32.mrb[0].mxu0
      %v958 = vadd.f32 %v809, %v957
      %v959 = vpop.f32.mrb[0].mxu0
      %960 = vmatprep.mubr.f32.mxu0 %v425
      %961 = vmatmul.mubr.f32.gmra.mrb[0].mxu0 %v384
      %v962 = vpop.f32.mrb[0].mxu0
      %v963 = vadd.f32 %v809, %v962
      %v964 = vpop.f32.mrb[0].mxu0
      %965 = vmatprep.mubr.f32.mxu0 %v426
      %966 = vmatmul.mubr.f32.gmra.mrb[0].mxu0 %v385
      %v967 = vpop.f32.mrb[0].mxu0
      %v968 = vadd.f32 %v809, %v967
      %v969 = vpop.f32.mrb[0].mxu0
      %970 = vmatprep.mubr.f32.mxu0 %v427
      %971 = vmatmul.mubr.f32.gmra.mrb[0].mxu0 %v386
      %v972 = vpop.f32.mrb[0].mxu0
      %v973 = vadd.f32 %v809, %v972
      %v974 = vpop.f32.mrb[0].mxu0
      %975 = vmatprep.mubr.f32.mxu0 %v428
      %976 = vmatmul.mubr.f32.gmra.mrb[0].mxu0 %v387
      %v977 = vpop.f32.mrb[0].mxu0
      %v978 = vadd.f32 %v809, %v977
      %v979 = vpop.f32.mrb[0].mxu0
      %980 = vmatprep.mubr.f32.mxu0 %v429
      %981 = vmatmul.mubr.f32.gmra.mrb[0].mxu0 %v388
      %v982 = vpop.f32.mrb[0].mxu0
      %v983 = vadd.f32 %v809, %v982
      %v984 = vpop.f32.mrb[0].mxu0
      %985 = vmatprep.mubr.f32.mxu0 %v430
      %986 = vmatmul.mubr.f32.gmra.mrb[0].mxu0 %v389
      %v987 = vpop.f32.mrb[0].mxu0
      %v988 = vadd.f32 %v809, %v987
      %v989 = vpop.f32.mrb[0].mxu0
      %990 = vmatprep.mubr.f32.mxu0 %v431
      %991 = vmatmul.mubr.f32.gmra.mrb[0].mxu0 %v390
      %v992 = vpop.f32.mrb[0].mxu0
      %v993 = vadd.f32 %v809, %v992
      %v994 = vpop.f32.mrb[0].mxu0
      %995 = vmatprep.mubr.f32.mxu0 %v432
      %996 = vmatmul.mubr.f32.gmra.mrb[0].mxu0 %v391
      %v997 = vpop.f32.mrb[0].mxu0
      %v998 = vadd.f32 %v809, %v997
      %v999 = vpop.f32.mrb[0].mxu0
      %1000 = vmatprep.mubr.f32.mxu0 %v433
      %1001 = vmatmul.mubr.f32.gmra.mrb[0].mxu0 %v392
      %v1002 = vpop.f32.mrb[0].mxu0
      %v1003 = vadd.f32 %v809, %v1002
      %v1004 = vpop.f32.mrb[0].mxu0
      %1005 = vmatprep.mubr.f32.mxu0 %v434
      %1006 = vmatmul.mubr.f32.gmra.mrb[0].mxu0 %v393
      %v1007 = vpop.f32.mrb[0].mxu0
      %v1008 = vadd.f32 %v809, %v1007
      %v1009 = vpop.f32.mrb[0].mxu0
      %1010 = vmatprep.mubr.f32.mxu0 %v435
      %1011 = vmatmul.mubr.f32.gmra.mrb[0].mxu0 %v394
      %v1012 = vpop.f32.mrb[0].mxu0
      %v1013 = vadd.f32 %v809, %v1012
      %v1014 = vpop.f32.mrb[0].mxu0
      %1015 = vmatprep.mubr.f32.mxu0 %v436
      %1016 = vmatmul.mubr.f32.gmra.mrb[0].mxu0 %v395
      %v1017 = vpop.f32.mrb[0].mxu0
      %v1018 = vadd.f32 %v809, %v1017
      %v1019 = vpop.f32.mrb[0].mxu0
      %1020 = vmatprep.mubr.f32.mxu0 %v437
      %1021 = vmatmul.mubr.f32.gmra.mrb[0].mxu0 %v396
      %v1022 = vpop.f32.mrb[0].mxu0
      %v1023 = vadd.f32 %v809, %v1022
      %v1024 = vpop.f32.mrb[0].mxu0
      %1025 = vmatprep.mubr.f32.mxu0 %v438
      %1026 = vmatmul.mubr.f32.gmra.mrb[0].mxu0 %v397
      %v1027 = vpop.f32.mrb[0].mxu0
      %v1028 = vadd.f32 %v809, %v1027
      %v1029 = vpop.f32.mrb[0].mxu0
      %1030 = vmatprep.mubr.f32.mxu0 %v439
      %1031 = vmatmul.mubr.f32.gmra.mrb[0].mxu0 %v398
      %v1032 = vpop.f32.mrb[0].mxu0
      %v1033 = vadd.f32 %v809, %v1032
      %v1034 = vpop.f32.mrb[0].mxu0
      %1035 = vmatprep.mubr.f32.mxu0 %v440
      %1036 = vmatmul.mubr.f32.gmra.mrb[0].mxu0 %v399
      %v1037 = vpop.f32.mrb[0].mxu0
      %v1038 = vadd.f32 %v809, %v1037
      %v1039 = vpop.f32.mrb[0].mxu0
      %1040 = vmatprep.mubr.f32.mxu0 %v441
      %1041 = vmatmul.mubr.f32.gmra.mrb[0].mxu0 %v400
      %v1042 = vpop.f32.mrb[0].mxu0
      %v1043 = vadd.f32 %v809, %v1042
      %v1044 = vpop.f32.mrb[0].mxu0
      %1045 = vmatprep.mubr.f32.mxu0 %v442
      %1046 = vmatmul.mubr.f32.gmra.mrb[0].mxu0 %v401
      %v1047 = vpop.f32.mrb[0].mxu0
      %v1048 = vadd.f32 %v809, %v1047
      %v1049 = vpop.f32.mrb[0].mxu0
      %1050 = vmatprep.mubr.f32.mxu0 %v443
      %1051 = vmatmul.mubr.f32.gmra.mrb[0].mxu0 %v402
      %v1052 = vpop.f32.mrb[0].mxu0
      %v1053 = vadd.f32 %v809, %v1052
      %v1054 = vpop.f32.mrb[0].mxu0
      %1055 = vmatprep.mubr.f32.mxu0 %v444
      %1056 = vmatmul.mubr.f32.gmra.mrb[0].mxu0 %v403
      %v1057 = vpop.f32.mrb[0].mxu0
      %v1058 = vadd.f32 %v809, %v1057
      %v1059 = vpop.f32.mrb[0].mxu0
      %1060 = vmatprep.mubr.f32.mxu0 %v445
      %1061 = vmatmul.mubr.f32.gmra.mrb[0].mxu0 %v404
      %v1062 = vpop.f32.mrb[0].mxu0
      %v1063 = vadd.f32 %v809, %v1062
      %v1064 = vpop.f32.mrb[0].mxu0
      %1065 = vmatprep.mubr.f32.mxu0 %v446
      %1066 = vmatmul.mubr.f32.gmra.mrb[0].mxu0 %v405
      %v1067 = vpop.f32.mrb[0].mxu0
      %v1068 = vadd.f32 %v809, %v1067
      %v1069 = vpop.f32.mrb[0].mxu0
      %1070 = vmatprep.mubr.f32.mxu0 %v447
      %1071 = vmatmul.mubr.f32.gmra.mrb[0].mxu0 %v406
      %v1072 = vpop.f32.mrb[0].mxu0
      %v1073 = vadd.f32 %v809, %v1072
      %v1074 = vpop.f32.mrb[0].mxu0
      %1075 = vmatprep.mubr.f32.mxu0 %v448
      %1076 = vmatmul.mubr.f32.gmra.mrb[0].mxu0 %v407
      %v1077 = vpop.f32.mrb[0].mxu0
      %v1078 = vadd.f32 %v809, %v1077
      %v1079 = vpop.f32.mrb[0].mxu0
      %1080 = vdwg.mxu0
      %1081 = vmatprep.subr.mxu0 0.0
      %1082 = vmatpush1.msra.mxu0 %v692
      %1083 = vmatprep.subr.mxu0 0.0
      %1084 = vmatpush1.msra.mxu0 %v693
      %1085 = vmatprep.subr.mxu0 0.0
      %1086 = vmatpush1.msra.mxu0 %v694
      %1087 = vmatprep.subr.mxu0 0.0
      %1088 = vmatpush1.msra.mxu0 %v695
      %1089 = vmatprep.subr.mxu0 0.0
      %1090 = vmatpush1.msra.mxu0 %v696
      %1091 = vmatprep.subr.mxu0 0.0
      %1092 = vmatpush1.msra.mxu0 %v697
      %1093 = vmatprep.subr.mxu0 0.0
      %1094 = vmatpush1.msra.mxu0 %v698
      %1095 = vmatprep.subr.mxu0 0.0
      %1096 = vmatpush1.msra.mxu0 %v699
      %1097 = vmatprep.subr.mxu0 0.0
      %1098 = vmatpush1.msra.mxu0 %v700
      %1099 = vmatprep.subr.mxu0 0.0
      %1100 = vmatpush1.msra.mxu0 %v701
      %1101 = vmatprep.subr.mxu0 0.0
      %1102 = vmatpush1.msra.mxu0 %v702
      %1103 = vmatprep.subr.mxu0 0.0
      %1104 = vmatpush1.msra.mxu0 %v703
      %1105 = vmatprep.subr.mxu0 0.0
      %1106 = vmatpush1.msra.mxu0 %v704
      %1107 = vmatprep.subr.mxu0 0.0
      %1108 = vmatpush1.msra.mxu0 %v705
      %1109 = vmatprep.subr.mxu0 0.0
      %1110 = vmatpush1.msra.mxu0 %v706
      %1111 = vmatprep.subr.mxu0 0.0
      %1112 = vmatpush1.msra.mxu0 %v707
      %1113 = vmatprep.subr.mxu0 0.0
      %1114 = vmatpush1.msra.mxu0 %v708
      %1115 = vmatprep.subr.mxu0 0.0
      %1116 = vmatpush1.msra.mxu0 %v709
      %1117 = vmatprep.subr.mxu0 0.0
      %1118 = vmatpush1.msra.mxu0 %v710
      %1119 = vmatprep.subr.mxu0 0.0
      %1120 = vmatpush1.msra.mxu0 %v711
      %1121 = vmatprep.subr.mxu0 0.0
      %1122 = vmatpush1.msra.mxu0 %v712
      %1123 = vmatprep.subr.mxu0 0.0
      %1124 = vmatpush1.msra.mxu0 %v713
      %1125 = vmatprep.subr.mxu0 0.0
      %1126 = vmatpush1.msra.mxu0 %v714
      %1127 = vmatprep.subr.mxu0 0.0
      %1128 = vmatpush1.msra.mxu0 %v715
      %1129 = vmatprep.subr.mxu0 0.0
      %1130 = vmatpush1.msra.mxu0 %v716
      %1131 = vmatprep.subr.mxu0 0.0
      %1132 = vmatpush1.msra.mxu0 %v717
      %1133 = vmatprep.subr.mxu0 0.0
      %1134 = vmatpush1.msra.mxu0 %v718
      %1135 = vmatprep.subr.mxu0 0.0
      %1136 = vmatpush1.msra.mxu0 %v719
      %1137 = vmatprep.subr.mxu0 0.0
      %1138 = vmatpush1.msra.mxu0 %v720
      %1139 = vmatprep.subr.mxu0 0.0
      %1140 = vmatpush1.msra.mxu0 %v721
      %1141 = vmatprep.subr.mxu0 0.0
      %1142 = vmatpush1.msra.mxu0 %v722
      %1143 = vmatprep.subr.mxu0 0.0
      %1144 = vmatpush1.msra.mxu0 %v723
      %1145 = vmatprep.mubr.f32.mxu0 %v451
      %1146 = vmatmul.mubr.f32.gmra.mrb[0].mxu0 %v449
      %v1147 = vpop.f32.mrb[0].mxu0
      %v1148 = vadd.f32 %v878, %v1147
      %v1149 = vpop.f32.mrb[0].mxu0
      %1150 = vmatprep.mubr.f32.mxu0 %v452
      %1151 = vmatmul.mubr.f32.gmra.mrb[0].mxu0 %v450
      %v1152 = vpop.f32.mrb[0].mxu0
      %v1153 = vadd.f32 %v883, %v1152
      %v1154 = vpop.f32.mrb[0].mxu0
      %1155 = vmatprep.mubr.f32.mxu0 %v453
      %1156 = vmatmul.mubr.f32.gmra.mrb[0].mxu0 %v451
      %v1157 = vpop.f32.mrb[0].mxu0
      %v1158 = vadd.f32 %v888, %v1157
      %v1159 = vpop.f32.mrb[0].mxu0
      %1160 = vmatprep.mubr.f32.mxu0 %v454
      %1161 = vmatmul.mubr.f32.gmra.mrb[0].mxu0 %v452
      %v1162 = vpop.f32.mrb[0].mxu0
      %v1163 = vadd.f32 %v893, %v1162
      %v1164 = vpop.f32.mrb[0].mxu0
      %1165 = vmatprep.mubr.f32.mxu0 %v455
      %1166 = vmatmul.mubr.f32.gmra.mrb[0].mxu0 %v453
      %v1167 = vpop.f32.mrb[0].mxu0
      %v1168 = vadd.f32 %v898, %v1167
      %v1169 = vpop.f32.mrb[0].mxu0
      %1170 = vmatprep.mubr.f32.mxu0 %v456
      %1171 = vmatmul.mubr.f32.gmra.mrb[0].mxu0 %v454
      %v1172 = vpop.f32.mrb[0].mxu0
      %v1173 = vadd.f32 %v903, %v1172
      %v1174 = vpop.f32.mrb[0].mxu0
      %1175 = vmatprep.mubr.f32.mxu0 %v457
      %1176 = vmatmul.mubr.f32.gmra.mrb[0].mxu0 %v455
      %v1177 = vpop.f32.mrb[0].mxu0
      %v1178 = vadd.f32 %v908, %v1177
      %v1179 = vpop.f32.mrb[0].mxu0
      %1180 = vmatprep.mubr.f32.mxu0 %v458
      %1181 = vmatmul.mubr.f32.gmra.mrb[0].mxu0 %v456
      %v1182 = vpop.f32.mrb[0].mxu0
      %v1183 = vadd.f32 %v913, %v1182
      %v1184 = vpop.f32.mrb[0].mxu0
      %1185 = vmatprep.mubr.f32.mxu0 %v459
      %1186 = vmatmul.mubr.f32.gmra.mrb[0].mxu0 %v457
      %v1187 = vpop.f32.mrb[0].mxu0
      %v1188 = vadd.f32 %v918, %v1187
      %v1189 = vpop.f32.mrb[0].mxu0
      %1190 = vmatprep.mubr.f32.mxu0 %v460
      %1191 = vmatmul.mubr.f32.gmra.mrb[0].mxu0 %v458
      %v1192 = vpop.f32.mrb[0].mxu0
      %v1193 = vadd.f32 %v923, %v1192
      %v1194 = vpop.f32.mrb[0].mxu0
      %1195 = vmatprep.mubr.f32.mxu0 %v461
      %1196 = vmatmul.mubr.f32.gmra.mrb[0].mxu0 %v459
      %v1197 = vpop.f32.mrb[0].mxu0
      %v1198 = vadd.f32 %v928, %v1197
      %v1199 = vpop.f32.mrb[0].mxu0
      %1200 = vmatprep.mubr.f32.mxu0 %v462
      %1201 = vmatmul.mubr.f32.gmra.mrb[0].mxu0 %v460
      %v1202 = vpop.f32.mrb[0].mxu0
      %v1203 = vadd.f32 %v933, %v1202
      %v1204 = vpop.f32.mrb[0].mxu0
      %1205 = vmatprep.mubr.f32.mxu0 %v463
      %1206 = vmatmul.mubr.f32.gmra.mrb[0].mxu0 %v461
      %v1207 = vpop.f32.mrb[0].mxu0
      %v1208 = vadd.f32 %v938, %v1207
      %v1209 = vpop.f32.mrb[0].mxu0
      %1210 = vmatprep.mubr.f32.mxu0 %v464
      %1211 = vmatmul.mubr.f32.gmra.mrb[0].mxu0 %v462
      %v1212 = vpop.f32.mrb[0].mxu0
      %v1213 = vadd.f32 %v943, %v1212
      %v1214 = vpop.f32.mrb[0].mxu0
      %1215 = vmatprep.mubr.f32.mxu0 %v465
      %1216 = vmatmul.mubr.f32.gmra.mrb[0].mxu0 %v463
      %v1217 = vpop.f32.mrb[0].mxu0
      %v1218 = vadd.f32 %v948, %v1217
      %v1219 = vpop.f32.mrb[0].mxu0
      %1220 = vmatprep.mubr.f32.mxu0 %v466
      %1221 = vmatmul.mubr.f32.gmra.mrb[0].mxu0 %v464
      %v1222 = vpop.f32.mrb[0].mxu0
      %v1223 = vadd.f32 %v953, %v1222
      %v1224 = vpop.f32.mrb[0].mxu0
      %1225 = vmatprep.mubr.f32.mxu0 %v467
      %1226 = vmatmul.mubr.f32.gmra.mrb[0].mxu0 %v465
      %v1227 = vpop.f32.mrb[0].mxu0
      %v1228 = vadd.f32 %v958, %v1227
      %v1229 = vpop.f32.mrb[0].mxu0
      %1230 = vmatprep.mubr.f32.mxu0 %v468
      %1231 = vmatmul.mubr.f32.gmra.mrb[0].mxu0 %v466
      %v1232 = vpop.f32.mrb[0].mxu0
      %v1233 = vadd.f32 %v963, %v1232
      %v1234 = vpop.f32.mrb[0].mxu0
      %1235 = vmatprep.mubr.f32.mxu0 %v469
      %1236 = vmatmul.mubr.f32.gmra.mrb[0].mxu0 %v467
      %v1237 = vpop.f32.mrb[0].mxu0
      %v1238 = vadd.f32 %v968, %v1237
      %v1239 = vpop.f32.mrb[0].mxu0
      %1240 = vmatprep.mubr.f32.mxu0 %v470
      %1241 = vmatmul.mubr.f32.gmra.mrb[0].mxu0 %v468
      %v1242 = vpop.f32.mrb[0].mxu0
      %v1243 = vadd.f32 %v973, %v1242
      %v1244 = vpop.f32.mrb[0].mxu0
      %1245 = vmatprep.mubr.f32.mxu0 %v471
      %1246 = vmatmul.mubr.f32.gmra.mrb[0].mxu0 %v469
      %v1247 = vpop.f32.mrb[0].mxu0
      %v1248 = vadd.f32 %v978, %v1247
      %v1249 = vpop.f32.mrb[0].mxu0
      %1250 = vmatprep.mubr.f32.mxu0 %v472
      %1251 = vmatmul.mubr.f32.gmra.mrb[0].mxu0 %v470
      %v1252 = vpop.f32.mrb[0].mxu0
      %v1253 = vadd.f32 %v983, %v1252
      %v1254 = vpop.f32.mrb[0].mxu0
      %1255 = vmatprep.mubr.f32.mxu0 %v473
      %1256 = vmatmul.mubr.f32.gmra.mrb[0].mxu0 %v471
      %v1257 = vpop.f32.mrb[0].mxu0
      %v1258 = vadd.f32 %v988, %v1257
      %v1259 = vpop.f32.mrb[0].mxu0
      %1260 = vmatprep.mubr.f32.mxu0 %v474
      %1261 = vmatmul.mubr.f32.gmra.mrb[0].mxu0 %v472
      %v1262 = vpop.f32.mrb[0].mxu0
      %v1263 = vadd.f32 %v993, %v1262
      %v1264 = vpop.f32.mrb[0].mxu0
      %1265 = vmatprep.mubr.f32.mxu0 %v475
      %1266 = vmatmul.mubr.f32.gmra.mrb[0].mxu0 %v473
      %v1267 = vpop.f32.mrb[0].mxu0
      %v1268 = vadd.f32 %v998, %v1267
      %v1269 = vpop.f32.mrb[0].mxu0
      %1270 = vmatprep.mubr.f32.mxu0 %v476
      %1271 = vmatmul.mubr.f32.gmra.mrb[0].mxu0 %v474
      %v1272 = vpop.f32.mrb[0].mxu0
      %v1273 = vadd.f32 %v1003, %v1272
      %v1274 = vpop.f32.mrb[0].mxu0
      %1275 = vmatprep.mubr.f32.mxu0 %v477
      %1276 = vmatmul.mubr.f32.gmra.mrb[0].mxu0 %v475
      %v1277 = vpop.f32.mrb[0].mxu0
      %v1278 = vadd.f32 %v1008, %v1277
      %v1279 = vpop.f32.mrb[0].mxu0
      %1280 = vmatprep.mubr.f32.mxu0 %v478
      %1281 = vmatmul.mubr.f32.gmra.mrb[0].mxu0 %v476
      %v1282 = vpop.f32.mrb[0].mxu0
      %v1283 = vadd.f32 %v1013, %v1282
      %v1284 = vpop.f32.mrb[0].mxu0
      %1285 = vmatprep.mubr.f32.mxu0 %v479
      %1286 = vmatmul.mubr.f32.gmra.mrb[0].mxu0 %v477
      %v1287 = vpop.f32.mrb[0].mxu0
      %v1288 = vadd.f32 %v1018, %v1287
      %v1289 = vpop.f32.mrb[0].mxu0
      %1290 = vmatprep.mubr.f32.mxu0 %v480
      %1291 = vmatmul.mubr.f32.gmra.mrb[0].mxu0 %v478
      %v1292 = vpop.f32.mrb[0].mxu0
      %v1293 = vadd.f32 %v1023, %v1292
      %v1294 = vpop.f32.mrb[0].mxu0
      %1295 = vmatprep.mubr.f32.mxu0 %v481
      %1296 = vmatmul.mubr.f32.gmra.mrb[0].mxu0 %v479
      %v1297 = vpop.f32.mrb[0].mxu0
      %v1298 = vadd.f32 %v1028, %v1297
      %v1299 = vpop.f32.mrb[0].mxu0
      %1300 = vmatprep.mubr.f32.mxu0 %v482
      %1301 = vmatmul.mubr.f32.gmra.mrb[0].mxu0 %v480
      %v1302 = vpop.f32.mrb[0].mxu0
      %v1303 = vadd.f32 %v1033, %v1302
      %v1304 = vpop.f32.mrb[0].mxu0
      %1305 = vmatprep.mubr.f32.mxu0 %v483
      %1306 = vmatmul.mubr.f32.gmra.mrb[0].mxu0 %v481
      %v1307 = vpop.f32.mrb[0].mxu0
      %v1308 = vadd.f32 %v1038, %v1307
      %v1309 = vpop.f32.mrb[0].mxu0
      %1310 = vmatprep.mubr.f32.mxu0 %v484
      %1311 = vmatmul.mubr.f32.gmra.mrb[0].mxu0 %v482
      %v1312 = vpop.f32.mrb[0].mxu0
      %v1313 = vadd.f32 %v1043, %v1312
      %v1314 = vpop.f32.mrb[0].mxu0
      %1315 = vmatprep.mubr.f32.mxu0 %v485
      %1316 = vmatmul.mubr.f32.gmra.mrb[0].mxu0 %v483
      %v1317 = vpop.f32.mrb[0].mxu0
      %v1318 = vadd.f32 %v1048, %v1317
      %v1319 = vpop.f32.mrb[0].mxu0
      %1320 = vmatprep.mubr.f32.mxu0 %v486
      %1321 = vmatmul.mubr.f32.gmra.mrb[0].mxu0 %v484
      %v1322 = vpop.f32.mrb[0].mxu0
      %v1323 = vadd.f32 %v1053, %v1322
      %v1324 = vpop.f32.mrb[0].mxu0
      %1325 = vmatprep.mubr.f32.mxu0 %v487
      %1326 = vmatmul.mubr.f32.gmra.mrb[0].mxu0 %v485
      %v1327 = vpop.f32.mrb[0].mxu0
      %v1328 = vadd.f32 %v1058, %v1327
      %v1329 = vpop.f32.mrb[0].mxu0
      %1330 = vmatprep.mubr.f32.mxu0 %v488
      %1331 = vmatmul.mubr.f32.gmra.mrb[0].mxu0 %v486
      %v1332 = vpop.f32.mrb[0].mxu0
      %v1333 = vadd.f32 %v1063, %v1332
      %v1334 = vpop.f32.mrb[0].mxu0
      %1335 = vmatprep.mubr.f32.mxu0 %v490
      %1336 = vmatmul.mubr.f32.gmra.mrb[0].mxu0 %v487
      %v1337 = vpop.f32.mrb[0].mxu0
      %v1338 = vadd.f32 %v1068, %v1337
      %v1339 = vpop.f32.mrb[0].mxu0
      %1340 = vmatprep.mubr.f32.mxu0 %v491
      %1341 = vmatmul.mubr.f32.gmra.mrb[0].mxu0 %v488
      %v1342 = vpop.f32.mrb[0].mxu0
      %v1343 = vadd.f32 %v1073, %v1342
      %v1344 = vpop.f32.mrb[0].mxu0
      %1345 = vmatprep.mubr.f32.mxu0 %v492
      %1346 = vmatmul.mubr.f32.gmra.mrb[0].mxu0 %v489
      %v1347 = vpop.f32.mrb[0].mxu0
      %v1348 = vadd.f32 %v1078, %v1347
      %v1349 = vpop.f32.mrb[0].mxu0
      %1350 = vdwg.mxu0
      %1351 = vmatprep.subr.mxu0 0.0
      %1352 = vmatpush1.msra.mxu0 %v724
      %1353 = vmatprep.subr.mxu0 0.0
      %1354 = vmatpush1.msra.mxu0 %v725
      %1355 = vmatprep.subr.mxu0 0.0
      %1356 = vmatpush1.msra.mxu0 %v726
      %1357 = vmatprep.subr.mxu0 0.0
      %1358 = vmatpush1.msra.mxu0 %v727
      %1359 = vmatprep.subr.mxu0 0.0
      %1360 = vmatpush1.msra.mxu0 %v728
      %1361 = vmatprep.subr.mxu0 0.0
      %1362 = vmatpush1.msra.mxu0 %v729
      %1363 = vmatprep.subr.mxu0 0.0
      %1364 = vmatpush1.msra.mxu0 %v730
      %1365 = vmatprep.subr.mxu0 0.0
      %1366 = vmatpush1.msra.mxu0 %v731
      %1367 = vmatprep.subr.mxu0 0.0
      %1368 = vmatpush1.msra.mxu0 %v732
      %1369 = vmatprep.subr.mxu0 0.0
      %1370 = vmatpush1.msra.mxu0 %v733
      %1371 = vmatprep.subr.mxu0 0.0
      %1372 = vmatpush1.msra.mxu0 %v734
      %1373 = vmatprep.subr.mxu0 0.0
      %1374 = vmatpush1.msra.mxu0 %v735
      %1375 = vmatprep.subr.mxu0 0.0
      %1376 = vmatpush1.msra.mxu0 %v736
      %1377 = vmatprep.subr.mxu0 0.0
      %1378 = vmatpush1.msra.mxu0 %v737
      %1379 = vmatprep.subr.mxu0 0.0
      %1380 = vmatpush1.msra.mxu0 %v738
      %1381 = vmatprep.subr.mxu0 0.0
      %1382 = vmatpush1.msra.mxu0 %v739
      %1383 = vmatprep.subr.mxu0 0.0
      %1384 = vmatpush1.msra.mxu0 %v740
      %1385 = vmatprep.subr.mxu0 0.0
      %1386 = vmatpush1.msra.mxu0 %v741
      %1387 = vmatprep.subr.mxu0 0.0
      %1388 = vmatpush1.msra.mxu0 %v742
      %1389 = vmatprep.subr.mxu0 0.0
      %1390 = vmatpush1.msra.mxu0 %v743
      %1391 = vmatprep.subr.mxu0 0.0
      %1392 = vmatpush1.msra.mxu0 %v744
      %1393 = vmatprep.subr.mxu0 0.0
      %1394 = vmatpush1.msra.mxu0 %v745
      %1395 = vmatprep.subr.mxu0 0.0
      %1396 = vmatpush1.msra.mxu0 %v746
      %1397 = vmatprep.subr.mxu0 0.0
      %1398 = vmatpush1.msra.mxu0 %v747
      %1399 = vmatprep.subr.mxu0 0.0
      %1400 = vmatpush1.msra.mxu0 %v748
      %1401 = vmatprep.subr.mxu0 0.0
      %1402 = vmatpush1.msra.mxu0 %v749
      %1403 = vmatprep.subr.mxu0 0.0
      %1404 = vmatpush1.msra.mxu0 %v750
      %1405 = vmatprep.subr.mxu0 0.0
      %1406 = vmatpush1.msra.mxu0 %v751
      %1407 = vmatprep.subr.mxu0 0.0
      %1408 = vmatpush1.msra.mxu0 %v752
      %1409 = vmatprep.subr.mxu0 0.0
      %1410 = vmatpush1.msra.mxu0 %v753
      %1411 = vmatprep.subr.mxu0 0.0
      %1412 = vmatpush1.msra.mxu0 %v754
      %1413 = vmatprep.subr.mxu0 0.0
      %1414 = vmatpush1.msra.mxu0 %v755
      %1415 = vmatprep.mubr.f32.mxu0 %v534
      %1416 = vmatmul.mubr.f32.gmra.mrb[0].mxu0 %v493
      %v1417 = vpop.f32.mrb[0].mxu0
      %v1418 = vadd.f32 %v1148, %v1417
      %v1419 = vpop.f32.mrb[0].mxu0
      %1420 = vmatprep.mubr.f32.mxu0 %v535
      %1421 = vmatmul.mubr.f32.gmra.mrb[0].mxu0 %v494
      %v1422 = vpop.f32.mrb[0].mxu0
      %v1423 = vadd.f32 %v1153, %v1422
      %v1424 = vpop.f32.mrb[0].mxu0
      %1425 = vmatprep.mubr.f32.mxu0 %v536
      %1426 = vmatmul.mubr.f32.gmra.mrb[0].mxu0 %v495
      %v1427 = vpop.f32.mrb[0].mxu0
      %v1428 = vadd.f32 %v1158, %v1427
      %v1429 = vpop.f32.mrb[0].mxu0
      %1430 = vmatprep.mubr.f32.mxu0 %v537
      %1431 = vmatmul.mubr.f32.gmra.mrb[0].mxu0 %v496
      %v1432 = vpop.f32.mrb[0].mxu0
      %v1433 = vadd.f32 %v1163, %v1432
      %v1434 = vpop.f32.mrb[0].mxu0
      %1435 = vmatprep.mubr.f32.mxu0 %v538
      %1436 = vmatmul.mubr.f32.gmra.mrb[0].mxu0 %v497
      %v1437 = vpop.f32.mrb[0].mxu0
      %v1438 = vadd.f32 %v1168, %v1437
      %v1439 = vpop.f32.mrb[0].mxu0
      %1440 = vmatprep.mubr.f32.mxu0 %v539
      %1441 = vmatmul.mubr.f32.gmra.mrb[0].mxu0 %v498
      %v1442 = vpop.f32.mrb[0].mxu0
      %v1443 = vadd.f32 %v1173, %v1442
      %v1444 = vpop.f32.mrb[0].mxu0
      %1445 = vmatprep.mubr.f32.mxu0 %v540
      %1446 = vmatmul.mubr.f32.gmra.mrb[0].mxu0 %v499
      %v1447 = vpop.f32.mrb[0].mxu0
      %v1448 = vadd.f32 %v1178, %v1447
      %v1449 = vpop.f32.mrb[0].mxu0
      %1450 = vmatprep.mubr.f32.mxu0 %v541
      %1451 = vmatmul.mubr.f32.gmra.mrb[0].mxu0 %v500
      %v1452 = vpop.f32.mrb[0].mxu0
      %v1453 = vadd.f32 %v1183, %v1452
      %v1454 = vpop.f32.mrb[0].mxu0
      %1455 = vmatprep.mubr.f32.mxu0 %v542
      %1456 = vmatmul.mubr.f32.gmra.mrb[0].mxu0 %v501
      %v1457 = vpop.f32.mrb[0].mxu0
      %v1458 = vadd.f32 %v1188, %v1457
      %v1459 = vpop.f32.mrb[0].mxu0
      %1460 = vmatprep.mubr.f32.mxu0 %v543
      %1461 = vmatmul.mubr.f32.gmra.mrb[0].mxu0 %v502
      %v1462 = vpop.f32.mrb[0].mxu0
      %v1463 = vadd.f32 %v1193, %v1462
      %v1464 = vpop.f32.mrb[0].mxu0
      %1465 = vmatprep.mubr.f32.mxu0 %v544
      %1466 = vmatmul.mubr.f32.gmra.mrb[0].mxu0 %v503
      %v1467 = vpop.f32.mrb[0].mxu0
      %v1468 = vadd.f32 %v1198, %v1467
      %v1469 = vpop.f32.mrb[0].mxu0
      %1470 = vmatprep.mubr.f32.mxu0 %v545
      %1471 = vmatmul.mubr.f32.gmra.mrb[0].mxu0 %v504
      %v1472 = vpop.f32.mrb[0].mxu0
      %v1473 = vadd.f32 %v1203, %v1472
      %v1474 = vpop.f32.mrb[0].mxu0
      %1475 = vmatprep.mubr.f32.mxu0 %v546
      %1476 = vmatmul.mubr.f32.gmra.mrb[0].mxu0 %v505
      %v1477 = vpop.f32.mrb[0].mxu0
      %v1478 = vadd.f32 %v1208, %v1477
      %v1479 = vpop.f32.mrb[0].mxu0
      %1480 = vmatprep.mubr.f32.mxu0 %v547
      %1481 = vmatmul.mubr.f32.gmra.mrb[0].mxu0 %v506
      %v1482 = vpop.f32.mrb[0].mxu0
      %v1483 = vadd.f32 %v1213, %v1482
      %v1484 = vpop.f32.mrb[0].mxu0
      %1485 = vmatprep.mubr.f32.mxu0 %v548
      %1486 = vmatmul.mubr.f32.gmra.mrb[0].mxu0 %v507
      %v1487 = vpop.f32.mrb[0].mxu0
      %v1488 = vadd.f32 %v1218, %v1487
      %v1489 = vpop.f32.mrb[0].mxu0
      %1490 = vmatprep.mubr.f32.mxu0 %v549
      %1491 = vmatmul.mubr.f32.gmra.mrb[0].mxu0 %v508
      %v1492 = vpop.f32.mrb[0].mxu0
      %v1493 = vadd.f32 %v1223, %v1492
      %v1494 = vpop.f32.mrb[0].mxu0
      %1495 = vmatprep.mubr.f32.mxu0 %v550
      %1496 = vmatmul.mubr.f32.gmra.mrb[0].mxu0 %v509
      %v1497 = vpop.f32.mrb[0].mxu0
      %v1498 = vadd.f32 %v1228, %v1497
      %v1499 = vpop.f32.mrb[0].mxu0
      %1500 = vmatprep.mubr.f32.mxu0 %v551
      %1501 = vmatmul.mubr.f32.gmra.mrb[0].mxu0 %v510
      %v1502 = vpop.f32.mrb[0].mxu0
      %v1503 = vadd.f32 %v1233, %v1502
      %v1504 = vpop.f32.mrb[0].mxu0
      %1505 = vmatprep.mubr.f32.mxu0 %v552
      %1506 = vmatmul.mubr.f32.gmra.mrb[0].mxu0 %v511
      %v1507 = vpop.f32.mrb[0].mxu0
      %v1508 = vadd.f32 %v1238, %v1507
      %v1509 = vpop.f32.mrb[0].mxu0
      %1510 = vmatprep.mubr.f32.mxu0 %v553
      %1511 = vmatmul.mubr.f32.gmra.mrb[0].mxu0 %v512
      %v1512 = vpop.f32.mrb[0].mxu0
      %v1513 = vadd.f32 %v1243, %v1512
      %v1514 = vpop.f32.mrb[0].mxu0
      %1515 = vmatprep.mubr.f32.mxu0 %v554
      %1516 = vmatmul.mubr.f32.gmra.mrb[0].mxu0 %v513
      %v1517 = vpop.f32.mrb[0].mxu0
      %v1518 = vadd.f32 %v1248, %v1517
      %v1519 = vpop.f32.mrb[0].mxu0
      %1520 = vmatprep.mubr.f32.mxu0 %v555
      %1521 = vmatmul.mubr.f32.gmra.mrb[0].mxu0 %v514
      %v1522 = vpop.f32.mrb[0].mxu0
      %v1523 = vadd.f32 %v1253, %v1522
      %v1524 = vpop.f32.mrb[0].mxu0
      %1525 = vmatprep.mubr.f32.mxu0 %v556
      %1526 = vmatmul.mubr.f32.gmra.mrb[0].mxu0 %v515
      %v1527 = vpop.f32.mrb[0].mxu0
      %v1528 = vadd.f32 %v1258, %v1527
      %v1529 = vpop.f32.mrb[0].mxu0
      %1530 = vmatprep.mubr.f32.mxu0 %v557
      %1531 = vmatmul.mubr.f32.gmra.mrb[0].mxu0 %v516
      %v1532 = vpop.f32.mrb[0].mxu0
      %v1533 = vadd.f32 %v1263, %v1532
      %v1534 = vpop.f32.mrb[0].mxu0
      %1535 = vmatprep.mubr.f32.mxu0 %v558
      %1536 = vmatmul.mubr.f32.gmra.mrb[0].mxu0 %v517
      %v1537 = vpop.f32.mrb[0].mxu0
      %v1538 = vadd.f32 %v1268, %v1537
      %v1539 = vpop.f32.mrb[0].mxu0
      %1540 = vmatprep.mubr.f32.mxu0 %v559
      %1541 = vmatmul.mubr.f32.gmra.mrb[0].mxu0 %v518
      %v1542 = vpop.f32.mrb[0].mxu0
      %v1543 = vadd.f32 %v1273, %v1542
      %v1544 = vpop.f32.mrb[0].mxu0
      %1545 = vmatprep.mubr.f32.mxu0 %v560
      %1546 = vmatmul.mubr.f32.gmra.mrb[0].mxu0 %v519
      %v1547 = vpop.f32.mrb[0].mxu0
      %v1548 = vadd.f32 %v1278, %v1547
      %v1549 = vpop.f32.mrb[0].mxu0
      %1550 = vmatprep.mubr.f32.mxu0 %v561
      %1551 = vmatmul.mubr.f32.gmra.mrb[0].mxu0 %v520
      %v1552 = vpop.f32.mrb[0].mxu0
      %v1553 = vadd.f32 %v1283, %v1552
      %v1554 = vpop.f32.mrb[0].mxu0
      %1555 = vmatprep.mubr.f32.mxu0 %v562
      %1556 = vmatmul.mubr.f32.gmra.mrb[0].mxu0 %v521
      %v1557 = vpop.f32.mrb[0].mxu0
      %v1558 = vadd.f32 %v1288, %v1557
      %v1559 = vpop.f32.mrb[0].mxu0
      %1560 = vmatprep.mubr.f32.mxu0 %v563
      %1561 = vmatmul.mubr.f32.gmra.mrb[0].mxu0 %v522
      %v1562 = vpop.f32.mrb[0].mxu0
      %v1563 = vadd.f32 %v1293, %v1562
      %v1564 = vpop.f32.mrb[0].mxu0
      %1565 = vmatprep.mubr.f32.mxu0 %v564
      %1566 = vmatmul.mubr.f32.gmra.mrb[0].mxu0 %v523
      %v1567 = vpop.f32.mrb[0].mxu0
      %v1568 = vadd.f32 %v1298, %v1567
      %v1569 = vpop.f32.mrb[0].mxu0
      %1570 = vmatprep.mubr.f32.mxu0 %v565
      %1571 = vmatmul.mubr.f32.gmra.mrb[0].mxu0 %v524
      %v1572 = vpop.f32.mrb[0].mxu0
      %v1573 = vadd.f32 %v1303, %v1572
      %v1574 = vpop.f32.mrb[0].mxu0
      %1575 = vmatprep.mubr.f32.mxu0 %v566
      %1576 = vmatmul.mubr.f32.gmra.mrb[0].mxu0 %v525
      %v1577 = vpop.f32.mrb[0].mxu0
      %v1578 = vadd.f32 %v1308, %v1577
      %v1579 = vpop.f32.mrb[0].mxu0
      %1580 = vmatprep.mubr.f32.mxu0 %v567
      %1581 = vmatmul.mubr.f32.gmra.mrb[0].mxu0 %v526
      %v1582 = vpop.f32.mrb[0].mxu0
      %v1583 = vadd.f32 %v1313, %v1582
      %v1584 = vpop.f32.mrb[0].mxu0
      %1585 = vmatprep.mubr.f32.mxu0 %v568
      %1586 = vmatmul.mubr.f32.gmra.mrb[0].mxu0 %v527
      %v1587 = vpop.f32.mrb[0].mxu0
      %v1588 = vadd.f32 %v1318, %v1587
      %v1589 = vpop.f32.mrb[0].mxu0
      %1590 = vmatprep.mubr.f32.mxu0 %v569
      %1591 = vmatmul.mubr.f32.gmra.mrb[0].mxu0 %v528
      %v1592 = vpop.f32.mrb[0].mxu0
      %v1593 = vadd.f32 %v1323, %v1592
      %v1594 = vpop.f32.mrb[0].mxu0
      %1595 = vmatprep.mubr.f32.mxu0 %v570
      %1596 = vmatmul.mubr.f32.gmra.mrb[0].mxu0 %v529
      %v1597 = vpop.f32.mrb[0].mxu0
      %v1598 = vadd.f32 %v1328, %v1597
      %v1599 = vpop.f32.mrb[0].mxu0
      %1600 = vmatprep.mubr.f32.mxu0 %v571
      %1601 = vmatmul.mubr.f32.gmra.mrb[0].mxu0 %v530
      %v1602 = vpop.f32.mrb[0].mxu0
      %v1603 = vadd.f32 %v1333, %v1602
      %v1604 = vpop.f32.mrb[0].mxu0
      %1605 = vmatprep.mubr.f32.mxu0 %v572
      %1606 = vmatmul.mubr.f32.gmra.mrb[0].mxu0 %v531
      %v1607 = vpop.f32.mrb[0].mxu0
      %v1608 = vadd.f32 %v1338, %v1607
      %v1609 = vpop.f32.mrb[0].mxu0
      %1610 = vmatprep.mubr.f32.mxu0 %v573
      %1611 = vmatmul.mubr.f32.gmra.mrb[0].mxu0 %v532
      %v1612 = vpop.f32.mrb[0].mxu0
      %v1613 = vadd.f32 %v1343, %v1612
      %v1614 = vpop.f32.mrb[0].mxu0
      %1615 = vmatprep.mubr.f32.mxu0 %v574
      %1616 = vmatmul.mubr.f32.gmra.mrb[0].mxu0 %v533
      %v1617 = vpop.f32.mrb[0].mxu0
      %v1618 = vadd.f32 %v1348, %v1617
      %v1619 = vpop.f32.mrb[0].mxu0
      %1620 = vdwg.mxu0
      %1621 = vmatprep.subr.mxu0 0.0
      %1622 = vmatpush1.msra.mxu0 %v756
      %1623 = vmatprep.subr.mxu0 0.0
      %1624 = vmatpush1.msra.mxu0 %v757
      %1625 = vmatprep.subr.mxu0 0.0
      %1626 = vmatpush1.msra.mxu0 %v758
      %1627 = vmatprep.subr.mxu0 0.0
      %1628 = vmatpush1.msra.mxu0 %v759
      %1629 = vmatprep.subr.mxu0 0.0
      %1630 = vmatpush1.msra.mxu0 %v760
      %1631 = vmatprep.subr.mxu0 0.0
      %1632 = vmatpush1.msra.mxu0 %v761
      %1633 = vmatprep.subr.mxu0 0.0
      %1634 = vmatpush1.msra.mxu0 %v762
      %1635 = vmatprep.subr.mxu0 0.0
      %1636 = vmatpush1.msra.mxu0 %v763
      %1637 = vmatprep.subr.mxu0 0.0
      %1638 = vmatpush1.msra.mxu0 %v764
      %1639 = vmatprep.subr.mxu0 0.0
      %1640 = vmatpush1.msra.mxu0 %v765
      %1641 = vmatprep.subr.mxu0 0.0
      %1642 = vmatpush1.msra.mxu0 %v766
      %1643 = vmatprep.subr.mxu0 0.0
      %1644 = vmatpush1.msra.mxu0 %v767
      %1645 = vmatprep.subr.mxu0 0.0
      %1646 = vmatpush1.msra.mxu0 %v768
      %1647 = vmatprep.subr.mxu0 0.0
      %1648 = vmatpush1.msra.mxu0 %v769
      %1649 = vmatprep.subr.mxu0 0.0
      %1650 = vmatpush1.msra.mxu0 %v770
      %1651 = vmatprep.subr.mxu0 0.0
      %1652 = vmatpush1.msra.mxu0 %v771
      %1653 = vmatprep.subr.mxu0 0.0
      %1654 = vmatpush1.msra.mxu0 %v772
      %1655 = vmatprep.subr.mxu0 0.0
      %1656 = vmatpush1.msra.mxu0 %v773
      %1657 = vmatprep.subr.mxu0 0.0
      %1658 = vmatpush1.msra.mxu0 %v774
      %1659 = vmatprep.subr.mxu0 0.0
      %1660 = vmatpush1.msra.mxu0 %v775
      %1661 = vmatprep.subr.mxu0 0.0
      %1662 = vmatpush1.msra.mxu0 %v776
      %1663 = vmatprep.subr.mxu0 0.0
      %1664 = vmatpush1.msra.mxu0 %v777
      %1665 = vmatprep.subr.mxu0 0.0
      %1666 = vmatpush1.msra.mxu0 %v778
      %1667 = vmatprep.subr.mxu0 0.0
      %1668 = vmatpush1.msra.mxu0 %v779
      %1669 = vmatprep.subr.mxu0 0.0
      %1670 = vmatpush1.msra.mxu0 %v780
      %1671 = vmatprep.subr.mxu0 0.0
      %1672 = vmatpush1.msra.mxu0 %v781
      %1673 = vmatprep.subr.mxu0 0.0
      %1674 = vmatpush1.msra.mxu0 %v782
      %1675 = vmatprep.subr.mxu0 0.0
      %1676 = vmatpush1.msra.mxu0 %v783
      %1677 = vmatprep.subr.mxu0 0.0
      %1678 = vmatpush1.msra.mxu0 %v784
      %1679 = vmatprep.subr.mxu0 0.0
      %1680 = vmatpush1.msra.mxu0 %v785
      %1681 = vmatprep.subr.mxu0 0.0
      %1682 = vmatpush1.msra.mxu0 %v786
      %1683 = vmatprep.subr.mxu0 0.0
      %1684 = vmatpush1.msra.mxu0 %v787
      %1685 = vmatprep.mubr.f32.mxu0 %v578
      %1686 = vmatmul.mubr.f32.gmra.mrb[0].mxu0 %v536
      %v1687 = vpop.f32.mrb[0].mxu0
      %v1688 = vadd.f32 %v1418, %v1687
      %v1689 = vpop.f32.mrb[0].mxu0
      %1690 = vmatprep.mubr.f32.mxu0 %v579
      %1691 = vmatmul.mubr.f32.gmra.mrb[0].mxu0 %v537
      %v1692 = vpop.f32.mrb[0].mxu0
      %v1693 = vadd.f32 %v1423, %v1692
      %v1694 = vpop.f32.mrb[0].mxu0
      %1695 = vmatprep.mubr.f32.mxu0 %v580
      %1696 = vmatmul.mubr.f32.gmra.mrb[0].mxu0 %v538
      %v1697 = vpop.f32.mrb[0].mxu0
      %v1698 = vadd.f32 %v1428, %v1697
      %v1699 = vpop.f32.mrb[0].mxu0
      %1700 = vmatprep.mubr.f32.mxu0 %v581
      %1701 = vmatmul.mubr.f32.gmra.mrb[0].mxu0 %v539
      %v1702 = vpop.f32.mrb[0].mxu0
      %v1703 = vadd.f32 %v1433, %v1702
      %v1704 = vpop.f32.mrb[0].mxu0
      %1705 = vmatprep.mubr.f32.mxu0 %v582
      %1706 = vmatmul.mubr.f32.gmra.mrb[0].mxu0 %v540
      %v1707 = vpop.f32.mrb[0].mxu0
      %v1708 = vadd.f32 %v1438, %v1707
      %v1709 = vpop.f32.mrb[0].mxu0
      %1710 = vmatprep.mubr.f32.mxu0 %v583
      %1711 = vmatmul.mubr.f32.gmra.mrb[0].mxu0 %v541
      %v1712 = vpop.f32.mrb[0].mxu0
      %v1713 = vadd.f32 %v1443, %v1712
      %v1714 = vpop.f32.mrb[0].mxu0
      %1715 = vmatprep.mubr.f32.mxu0 %v584
      %1716 = vmatmul.mubr.f32.gmra.mrb[0].mxu0 %v542
      %v1717 = vpop.f32.mrb[0].mxu0
      %v1718 = vadd.f32 %v1448, %v1717
      %v1719 = vpop.f32.mrb[0].mxu0
      %1720 = vmatprep.mubr.f32.mxu0 %v585
      %1721 = vmatmul.mubr.f32.gmra.mrb[0].mxu0 %v543
      %v1722 = vpop.f32.mrb[0].mxu0
      %v1723 = vadd.f32 %v1453, %v1722
      %v1724 = vpop.f32.mrb[0].mxu0
      %1725 = vmatprep.mubr.f32.mxu0 %v586
      %1726 = vmatmul.mubr.f32.gmra.mrb[0].mxu0 %v544
      %v1727 = vpop.f32.mrb[0].mxu0
      %v1728 = vadd.f32 %v1458, %v1727
      %v1729 = vpop.f32.mrb[0].mxu0
      %1730 = vmatprep.mubr.f32.mxu0 %v587
      %1731 = vmatmul.mubr.f32.gmra.mrb[0].mxu0 %v545
      %v1732 = vpop.f32.mrb[0].mxu0
      %v1733 = vadd.f32 %v1463, %v1732
      %v1734 = vpop.f32.mrb[0].mxu0
      %1735 = vmatprep.mubr.f32.mxu0 %v588
      %1736 = vmatmul.mubr.f32.gmra.mrb[0].mxu0 %v546
      %v1737 = vpop.f32.mrb[0].mxu0
      %v1738 = vadd.f32 %v1468, %v1737
      %v1739 = vpop.f32.mrb[0].mxu0
      %1740 = vmatprep.mubr.f32.mxu0 %v589
      %1741 = vmatmul.mubr.f32.gmra.mrb[0].mxu0 %v547
      %v1742 = vpop.f32.mrb[0].mxu0
      %v1743 = vadd.f32 %v1473, %v1742
      %v1744 = vpop.f32.mrb[0].mxu0
      %1745 = vmatprep.mubr.f32.mxu0 %v590
      %1746 = vmatmul.mubr.f32.gmra.mrb[0].mxu0 %v548
      %v1747 = vpop.f32.mrb[0].mxu0
      %v1748 = vadd.f32 %v1478, %v1747
      %v1749 = vpop.f32.mrb[0].mxu0
      %1750 = vmatprep.mubr.f32.mxu0 %v591
      %1751 = vmatmul.mubr.f32.gmra.mrb[0].mxu0 %v549
      %v1752 = vpop.f32.mrb[0].mxu0
      %v1753 = vadd.f32 %v1483, %v1752
      %v1754 = vpop.f32.mrb[0].mxu0
      %1755 = vmatprep.mubr.f32.mxu0 %v592
      %1756 = vmatmul.mubr.f32.gmra.mrb[0].mxu0 %v550
      %v1757 = vpop.f32.mrb[0].mxu0
      %v1758 = vadd.f32 %v1488, %v1757
      %v1759 = vpop.f32.mrb[0].mxu0
      %1760 = vmatprep.mubr.f32.mxu0 %v593
      %1761 = vmatmul.mubr.f32.gmra.mrb[0].mxu0 %v551
      %v1762 = vpop.f32.mrb[0].mxu0
      %v1763 = vadd.f32 %v1493, %v1762
      %v1764 = vpop.f32.mrb[0].mxu0
      %1765 = vmatprep.mubr.f32.mxu0 %v594
      %1766 = vmatmul.mubr.f32.gmra.mrb[0].mxu0 %v552
      %v1767 = vpop.f32.mrb[0].mxu0
      %v1768 = vadd.f32 %v1498, %v1767
      %v1769 = vpop.f32.mrb[0].mxu0
      %1770 = vmatprep.mubr.f32.mxu0 %v595
      %1771 = vmatmul.mubr.f32.gmra.mrb[0].mxu0 %v553
      %v1772 = vpop.f32.mrb[0].mxu0
      %v1773 = vadd.f32 %v1503, %v1772
      %v1774 = vpop.f32.mrb[0].mxu0
      %1775 = vmatprep.mubr.f32.mxu0 %v596
      %1776 = vmatmul.mubr.f32.gmra.mrb[0].mxu0 %v554
      %v1777 = vpop.f32.mrb[0].mxu0
      %v1778 = vadd.f32 %v1508, %v1777
      %v1779 = vpop.f32.mrb[0].mxu0
      %1780 = vmatprep.mubr.f32.mxu0 %v597
      %1781 = vmatmul.mubr.f32.gmra.mrb[0].mxu0 %v555
      %v1782 = vpop.f32.mrb[0].mxu0
      %v1783 = vadd.f32 %v1513, %v1782
      %v1784 = vpop.f32.mrb[0].mxu0
      %1785 = vmatprep.mubr.f32.mxu0 %v598
      %1786 = vmatmul.mubr.f32.gmra.mrb[0].mxu0 %v556
      %v1787 = vpop.f32.mrb[0].mxu0
      %v1788 = vadd.f32 %v1518, %v1787
      %v1789 = vpop.f32.mrb[0].mxu0
      %1790 = vmatprep.mubr.f32.mxu0 %v599
      %1791 = vmatmul.mubr.f32.gmra.mrb[0].mxu0 %v557
      %v1792 = vpop.f32.mrb[0].mxu0
      %v1793 = vadd.f32 %v1523, %v1792
      %v1794 = vpop.f32.mrb[0].mxu0
      %1795 = vmatprep.mubr.f32.mxu0 %v600
      %1796 = vmatmul.mubr.f32.gmra.mrb[0].mxu0 %v558
      %v1797 = vpop.f32.mrb[0].mxu0
      %v1798 = vadd.f32 %v1528, %v1797
      %v1799 = vpop.f32.mrb[0].mxu0
      %1800 = vmatprep.mubr.f32.mxu0 %v601
      %1801 = vmatmul.mubr.f32.gmra.mrb[0].mxu0 %v559
      %v1802 = vpop.f32.mrb[0].mxu0
      %v1803 = vadd.f32 %v1533, %v1802
      %v1804 = vpop.f32.mrb[0].mxu0
      %1805 = vmatprep.mubr.f32.mxu0 %v602
      %1806 = vmatmul.mubr.f32.gmra.mrb[0].mxu0 %v560
      %v1807 = vpop.f32.mrb[0].mxu0
      %v1808 = vadd.f32 %v1538, %v1807
      %v1809 = vpop.f32.mrb[0].mxu0
      %1810 = vmatprep.mubr.f32.mxu0 %v603
      %1811 = vmatmul.mubr.f32.gmra.mrb[0].mxu0 %v561
      %v1812 = vpop.f32.mrb[0].mxu0
      %v1813 = vadd.f32 %v1543, %v1812
      %v1814 = vpop.f32.mrb[0].mxu0
      %1815 = vmatprep.mubr.f32.mxu0 %v604
      %1816 = vmatmul.mubr.f32.gmra.mrb[0].mxu0 %v562
      %v1817 = vpop.f32.mrb[0].mxu0
      %v1818 = vadd.f32 %v1548, %v1817
      %v1819 = vpop.f32.mrb[0].mxu0
      %1820 = vmatprep.mubr.f32.mxu0 %v605
      %1821 = vmatmul.mubr.f32.gmra.mrb[0].mxu0 %v563
      %v1822 = vpop.f32.mrb[0].mxu0
      %v1823 = vadd.f32 %v1553, %v1822
      %v1824 = vpop.f32.mrb[0].mxu0
      %1825 = vmatprep.mubr.f32.mxu0 %v606
      %1826 = vmatmul.mubr.f32.gmra.mrb[0].mxu0 %v564
      %v1827 = vpop.f32.mrb[0].mxu0
      %v1828 = vadd.f32 %v1558, %v1827
      %v1829 = vpop.f32.mrb[0].mxu0
      %1830 = vmatprep.mubr.f32.mxu0 %v607
      %1831 = vmatmul.mubr.f32.gmra.mrb[0].mxu0 %v565
      %v1832 = vpop.f32.mrb[0].mxu0
      %v1833 = vadd.f32 %v1563, %v1832
      %v1834 = vpop.f32.mrb[0].mxu0
      %1835 = vmatprep.mubr.f32.mxu0 %v608
      %1836 = vmatmul.mubr.f32.gmra.mrb[0].mxu0 %v566
      %v1837 = vpop.f32.mrb[0].mxu0
      %v1838 = vadd.f32 %v1568, %v1837
      %v1839 = vpop.f32.mrb[0].mxu0
      %1840 = vmatprep.mubr.f32.mxu0 %v609
      %1841 = vmatmul.mubr.f32.gmra.mrb[0].mxu0 %v567
      %v1842 = vpop.f32.mrb[0].mxu0
      %v1843 = vadd.f32 %v1573, %v1842
      %v1844 = vpop.f32.mrb[0].mxu0
      %1845 = vmatprep.mubr.f32.mxu0 %v610
      %1846 = vmatmul.mubr.f32.gmra.mrb[0].mxu0 %v568
      %v1847 = vpop.f32.mrb[0].mxu0
      %v1848 = vadd.f32 %v1578, %v1847
      %v1849 = vpop.f32.mrb[0].mxu0
      %1850 = vmatprep.mubr.f32.mxu0 %v611
      %1851 = vmatmul.mubr.f32.gmra.mrb[0].mxu0 %v569
      %v1852 = vpop.f32.mrb[0].mxu0
      %v1853 = vadd.f32 %v1583, %v1852
      %v1854 = vpop.f32.mrb[0].mxu0
      %1855 = vmatprep.mubr.f32.mxu0 %v612
      %1856 = vmatmul.mubr.f32.gmra.mrb[0].mxu0 %v570
      %v1857 = vpop.f32.mrb[0].mxu0
      %v1858 = vadd.f32 %v1588, %v1857
      %v1859 = vpop.f32.mrb[0].mxu0
      %1860 = vmatprep.mubr.f32.mxu0 %v613
      %1861 = vmatmul.mubr.f32.gmra.mrb[0].mxu0 %v571
      %v1862 = vpop.f32.mrb[0].mxu0
      %v1863 = vadd.f32 %v1593, %v1862
      %v1864 = vpop.f32.mrb[0].mxu0
      %1865 = vmatprep.mubr.f32.mxu0 %v614
      %1866 = vmatmul.mubr.f32.gmra.mrb[0].mxu0 %v572
      %v1867 = vpop.f32.mrb[0].mxu0
      %v1868 = vadd.f32 %v1598, %v1867
      %v1869 = vpop.f32.mrb[0].mxu0
      %1870 = vmatprep.mubr.f32.mxu0 %v615
      %1871 = vmatmul.mubr.f32.gmra.mrb[0].mxu0 %v573
      %v1872 = vpop.f32.mrb[0].mxu0
      %v1873 = vadd.f32 %v1603, %v1872
      %v1874 = vpop.f32.mrb[0].mxu0
      %1875 = vmatprep.mubr.f32.mxu0 %v616
      %1876 = vmatmul.mubr.f32.gmra.mrb[0].mxu0 %v575
      %v1877 = vpop.f32.mrb[0].mxu0
      %v1878 = vadd.f32 %v1608, %v1877
      %v1879 = vpop.f32.mrb[0].mxu0
      %1880 = vmatprep.mubr.f32.mxu0 %v617
      %1881 = vmatmul.mubr.f32.gmra.mrb[0].mxu0 %v576
      %v1882 = vpop.f32.mrb[0].mxu0
      %v1883 = vadd.f32 %v1613, %v1882
      %v1884 = vpop.f32.mrb[0].mxu0
      %1885 = vmatprep.mubr.f32.mxu0 %v618
      %1886 = vmatmul.mubr.f32.gmra.mrb[0].mxu0 %v577
      %v1887 = vpop.f32.mrb[0].mxu0
      %v1888 = vadd.f32 %v1618, %v1887
      %v1889 = vpop.f32.mrb[0].mxu0
      %1890 = vdwg.mxu0
      %1891 = vmatprep.subr.mxu0 0.0
      %1892 = vmatpush1.msra.mxu0 %v788
      %1893 = vmatprep.subr.mxu0 0.0
      %1894 = vmatpush1.msra.mxu0 %v789
      %1895 = vmatprep.subr.mxu0 0.0
      %1896 = vmatpush1.msra.mxu0 %v790
      %1897 = vmatprep.subr.mxu0 0.0
      %1898 = vmatpush1.msra.mxu0 %v791
      %1899 = vmatprep.subr.mxu0 0.0
      %1900 = vmatpush1.msra.mxu0 %v792
      %1901 = vmatprep.subr.mxu0 0.0
      %1902 = vmatpush1.msra.mxu0 %v793
      %1903 = vmatprep.subr.mxu0 0.0
      %1904 = vmatpush1.msra.mxu0 %v794
      %1905 = vmatprep.subr.mxu0 0.0
      %1906 = vmatpush1.msra.mxu0 %v795
      %1907 = vmatprep.subr.mxu0 0.0
      %1908 = vmatpush1.msra.mxu0 %v796
      %1909 = vmatprep.subr.mxu0 0.0
      %1910 = vmatpush1.msra.mxu0 %v797
      %1911 = vmatprep.subr.mxu0 0.0
      %1912 = vmatpush1.msra.mxu0 %v798
      %1913 = vmatprep.subr.mxu0 0.0
      %1914 = vmatpush1.msra.mxu0 %v799
      %1915 = vmatprep.subr.mxu0 0.0
      %1916 = vmatpush1.msra.mxu0 %v800
      %1917 = vmatprep.subr.mxu0 0.0
      %1918 = vmatpush1.msra.mxu0 %v801
      %1919 = vmatprep.subr.mxu0 0.0
      %1920 = vmatpush1.msra.mxu0 %v802
      %1921 = vmatprep.subr.mxu0 0.0
      %1922 = vmatpush1.msra.mxu0 %v803
      %1923 = vmatprep.subr.mxu0 0.0
      %1924 = vmatpush1.msra.mxu0 0.0
      %1925 = vmatprep.subr.mxu0 0.0
      %1926 = vmatpush1.msra.mxu0 0.0
      %1927 = vmatprep.subr.mxu0 0.0
      %1928 = vmatpush1.msra.mxu0 0.0
      %1929 = vmatprep.subr.mxu0 0.0
      %1930 = vmatpush1.msra.mxu0 0.0
      %1931 = vmatprep.subr.mxu0 0.0
      %1932 = vmatpush1.msra.mxu0 0.0
      %1933 = vmatprep.subr.mxu0 0.0
      %1934 = vmatpush1.msra.mxu0 0.0
      %1935 = vmatprep.subr.mxu0 0.0
      %1936 = vmatpush1.msra.mxu0 0.0
      %1937 = vmatprep.subr.mxu0 0.0
      %1938 = vmatpush1.msra.mxu0 0.0
      %1939 = vmatprep.subr.mxu0 0.0
      %1940 = vmatpush1.msra.mxu0 0.0
      %1941 = vmatprep.subr.mxu0 0.0
      %1942 = vmatpush1.msra.mxu0 0.0
      %1943 = vmatprep.subr.mxu0 0.0
      %1944 = vmatpush1.msra.mxu0 0.0
      %1945 = vmatprep.subr.mxu0 0.0
      %1946 = vmatpush1.msra.mxu0 0.0
      %1947 = vmatprep.subr.mxu0 0.0
      %1948 = vmatpush1.msra.mxu0 0.0
      %1949 = vmatprep.subr.mxu0 0.0
      %1950 = vmatpush1.msra.mxu0 0.0
      %1951 = vmatprep.subr.mxu0 0.0
      %1952 = vmatpush1.msra.mxu0 0.0
      %1953 = vmatprep.subr.mxu0 0.0
      %1954 = vmatpush1.msra.mxu0 0.0
      %1955 = vmatprep.mubr.f32.mxu0 0.0
      %1956 = vmatmul.mubr.f32.gmra.mrb[0].mxu0 %v619
      %v1957 = vpop.f32.mrb[0].mxu0
      %v1958 = vadd.f32 %v1688, %v1957
      %v1959 = vpop.f32.mrb[0].mxu0
      %1960 = vmatprep.mubr.f32.mxu0 0.0
      %1961 = vmatmul.mubr.f32.gmra.mrb[0].mxu0 %v620
      %v1962 = vpop.f32.mrb[0].mxu0
      %v1963 = vadd.f32 %v1693, %v1962
      %v1964 = vpop.f32.mrb[0].mxu0
      %1965 = vmatprep.mubr.f32.mxu0 0.0
      %1966 = vmatmul.mubr.f32.gmra.mrb[0].mxu0 %v621
      %v1967 = vpop.f32.mrb[0].mxu0
      %v1968 = vadd.f32 %v1698, %v1967
      %v1969 = vpop.f32.mrb[0].mxu0
      %1970 = vmatprep.mubr.f32.mxu0 0.0
      %1971 = vmatmul.mubr.f32.gmra.mrb[0].mxu0 %v622
      %v1972 = vpop.f32.mrb[0].mxu0
      %v1973 = vadd.f32 %v1703, %v1972
      %v1974 = vpop.f32.mrb[0].mxu0
      %1975 = vmatprep.mubr.f32.mxu0 0.0
      %1976 = vmatmul.mubr.f32.gmra.mrb[0].mxu0 %v623
      %v1977 = vpop.f32.mrb[0].mxu0
      %v1978 = vadd.f32 %v1708, %v1977
      %v1979 = vpop.f32.mrb[0].mxu0
      %1980 = vmatprep.mubr.f32.mxu0 0.0
      %1981 = vmatmul.mubr.f32.gmra.mrb[0].mxu0 %v624
      %v1982 = vpop.f32.mrb[0].mxu0
      %v1983 = vadd.f32 %v1713, %v1982
      %v1984 = vpop.f32.mrb[0].mxu0
      %1985 = vmatprep.mubr.f32.mxu0 0.0
      %1986 = vmatmul.mubr.f32.gmra.mrb[0].mxu0 %v625
      %v1987 = vpop.f32.mrb[0].mxu0
      %v1988 = vadd.f32 %v1718, %v1987
      %v1989 = vpop.f32.mrb[0].mxu0
      %1990 = vmatprep.mubr.f32.mxu0 0.0
      %1991 = vmatmul.mubr.f32.gmra.mrb[0].mxu0 %v626
      %v1992 = vpop.f32.mrb[0].mxu0
      %v1993 = vadd.f32 %v1723, %v1992
      %v1994 = vpop.f32.mrb[0].mxu0
      %1995 = vmatprep.mubr.f32.mxu0 0.0
      %1996 = vmatmul.mubr.f32.gmra.mrb[0].mxu0 %v627
      %v1997 = vpop.f32.mrb[0].mxu0
      %v1998 = vadd.f32 %v1728, %v1997
      %v1999 = vpop.f32.mrb[0].mxu0
      %2000 = vmatprep.mubr.f32.mxu0 0.0
      %2001 = vmatmul.mubr.f32.gmra.mrb[0].mxu0 %v628
      %v2002 = vpop.f32.mrb[0].mxu0
      %v2003 = vadd.f32 %v1733, %v2002
      %v2004 = vpop.f32.mrb[0].mxu0
      %2005 = vmatprep.mubr.f32.mxu0 0.0
      %2006 = vmatmul.mubr.f32.gmra.mrb[0].mxu0 %v629
      %v2007 = vpop.f32.mrb[0].mxu0
      %v2008 = vadd.f32 %v1738, %v2007
      %v2009 = vpop.f32.mrb[0].mxu0
      %2010 = vmatprep.mubr.f32.mxu0 0.0
      %2011 = vmatmul.mubr.f32.gmra.mrb[0].mxu0 %v630
      %v2012 = vpop.f32.mrb[0].mxu0
      %v2013 = vadd.f32 %v1743, %v2012
      %v2014 = vpop.f32.mrb[0].mxu0
      %2015 = vmatprep.mubr.f32.mxu0 0.0
      %2016 = vmatmul.mubr.f32.gmra.mrb[0].mxu0 %v631
      %v2017 = vpop.f32.mrb[0].mxu0
      %v2018 = vadd.f32 %v1748, %v2017
      %v2019 = vpop.f32.mrb[0].mxu0
      %2020 = vmatprep.mubr.f32.mxu0 0.0
      %2021 = vmatmul.mubr.f32.gmra.mrb[0].mxu0 %v632
      %v2022 = vpop.f32.mrb[0].mxu0
      %v2023 = vadd.f32 %v1753, %v2022
      %v2024 = vpop.f32.mrb[0].mxu0
      %2025 = vmatprep.mubr.f32.mxu0 0.0
      %2026 = vmatmul.mubr.f32.gmra.mrb[0].mxu0 %v633
      %v2027 = vpop.f32.mrb[0].mxu0
      %v2028 = vadd.f32 %v1758, %v2027
      %v2029 = vpop.f32.mrb[0].mxu0
      %2030 = vmatprep.mubr.f32.mxu0 0.0
      %2031 = vmatmul.mubr.f32.gmra.mrb[0].mxu0 %v634
      %v2032 = vpop.f32.mrb[0].mxu0
      %v2033 = vadd.f32 %v1763, %v2032
      %v2034 = vpop.f32.mrb[0].mxu0
      %2035 = vmatprep.mubr.f32.mxu0 0.0
      %2036 = vmatmul.mubr.f32.gmra.mrb[0].mxu0 %v635
      %v2037 = vpop.f32.mrb[0].mxu0
      %v2038 = vadd.f32 %v1768, %v2037
      %v2039 = vpop.f32.mrb[0].mxu0
      %2040 = vmatprep.mubr.f32.mxu0 0.0
      %2041 = vmatmul.mubr.f32.gmra.mrb[0].mxu0 %v636
      %v2042 = vpop.f32.mrb[0].mxu0
      %v2043 = vadd.f32 %v1773, %v2042
      %v2044 = vpop.f32.mrb[0].mxu0
      %2045 = vmatprep.mubr.f32.mxu0 0.0
      %2046 = vmatmul.mubr.f32.gmra.mrb[0].mxu0 %v637
      %v2047 = vpop.f32.mrb[0].mxu0
      %v2048 = vadd.f32 %v1778, %v2047
      %v2049 = vpop.f32.mrb[0].mxu0
      %2050 = vmatprep.mubr.f32.mxu0 0.0
      %2051 = vmatmul.mubr.f32.gmra.mrb[0].mxu0 %v638
      %v2052 = vpop.f32.mrb[0].mxu0
      %v2053 = vadd.f32 %v1783, %v2052
      %v2054 = vpop.f32.mrb[0].mxu0
      %2055 = vmatprep.mubr.f32.mxu0 0.0
      %2056 = vmatmul.mubr.f32.gmra.mrb[0].mxu0 %v639
      %v2057 = vpop.f32.mrb[0].mxu0
      %v2058 = vadd.f32 %v1788, %v2057
      %v2059 = vpop.f32.mrb[0].mxu0
      %2060 = vmatprep.mubr.f32.mxu0 0.0
      %2061 = vmatmul.mubr.f32.gmra.mrb[0].mxu0 %v640
      %v2062 = vpop.f32.mrb[0].mxu0
      %v2063 = vadd.f32 %v1793, %v2062
      %v2064 = vpop.f32.mrb[0].mxu0
      %2065 = vmatprep.mubr.f32.mxu0 0.0
      %2066 = vmatmul.mubr.f32.gmra.mrb[0].mxu0 %v641
      %v2067 = vpop.f32.mrb[0].mxu0
      %v2068 = vadd.f32 %v1798, %v2067
      %v2069 = vpop.f32.mrb[0].mxu0
      %2070 = vmatprep.mubr.f32.mxu0 0.0
      %2071 = vmatmul.mubr.f32.gmra.mrb[0].mxu0 %v642
      %v2072 = vpop.f32.mrb[0].mxu0
      %v2073 = vadd.f32 %v1803, %v2072
      %v2074 = vpop.f32.mrb[0].mxu0
      %2075 = vmatprep.mubr.f32.mxu0 0.0
      %2076 = vmatmul.mubr.f32.gmra.mrb[0].mxu0 %v643
      %v2077 = vpop.f32.mrb[0].mxu0
      %v2078 = vadd.f32 %v1808, %v2077
      %v2079 = vpop.f32.mrb[0].mxu0
      %2080 = vmatprep.mubr.f32.mxu0 0.0
      %2081 = vmatmul.mubr.f32.gmra.mrb[0].mxu0 %v644
      %v2082 = vpop.f32.mrb[0].mxu0
      %v2083 = vadd.f32 %v1813, %v2082
      %v2084 = vpop.f32.mrb[0].mxu0
      %2085 = vmatprep.mubr.f32.mxu0 0.0
      %2086 = vmatmul.mubr.f32.gmra.mrb[0].mxu0 %v645
      %v2087 = vpop.f32.mrb[0].mxu0
      %v2088 = vadd.f32 %v1818, %v2087
      %v2089 = vpop.f32.mrb[0].mxu0
      %2090 = vmatprep.mubr.f32.mxu0 0.0
      %2091 = vmatmul.mubr.f32.gmra.mrb[0].mxu0 %v646
      %v2092 = vpop.f32.mrb[0].mxu0
      %v2093 = vadd.f32 %v1823, %v2092
      %v2094 = vpop.f32.mrb[0].mxu0
      %2095 = vmatprep.mubr.f32.mxu0 0.0
      %2096 = vmatmul.mubr.f32.gmra.mrb[0].mxu0 %v647
      %v2097 = vpop.f32.mrb[0].mxu0
      %v2098 = vadd.f32 %v1828, %v2097
      %v2099 = vpop.f32.mrb[0].mxu0
      %2100 = vmatprep.mubr.f32.mxu0 0.0
      %2101 = vmatmul.mubr.f32.gmra.mrb[0].mxu0 %v648
      %v2102 = vpop.f32.mrb[0].mxu0
      %v2103 = vadd.f32 %v1833, %v2102
      %v2104 = vpop.f32.mrb[0].mxu0
      %2105 = vmatprep.mubr.f32.mxu0 0.0
      %2106 = vmatmul.mubr.f32.gmra.mrb[0].mxu0 %v649
      %v2107 = vpop.f32.mrb[0].mxu0
      %v2108 = vadd.f32 %v1838, %v2107
      %v2109 = vpop.f32.mrb[0].mxu0
      %2110 = vmatprep.mubr.f32.mxu0 0.0
      %2111 = vmatmul.mubr.f32.gmra.mrb[0].mxu0 %v650
      %v2112 = vpop.f32.mrb[0].mxu0
      %v2113 = vadd.f32 %v1843, %v2112
      %v2114 = vpop.f32.mrb[0].mxu0
      %2115 = vmatprep.mubr.f32.mxu0 0.0
      %2116 = vmatmul.mubr.f32.gmra.mrb[0].mxu0 %v651
      %v2117 = vpop.f32.mrb[0].mxu0
      %v2118 = vadd.f32 %v1848, %v2117
      %v2119 = vpop.f32.mrb[0].mxu0
      %2120 = vmatprep.mubr.f32.mxu0 0.0
      %2121 = vmatmul.mubr.f32.gmra.mrb[0].mxu0 %v652
      %v2122 = vpop.f32.mrb[0].mxu0
      %v2123 = vadd.f32 %v1853, %v2122
      %v2124 = vpop.f32.mrb[0].mxu0
      %2125 = vmatprep.mubr.f32.mxu0 0.0
      %2126 = vmatmul.mubr.f32.gmra.mrb[0].mxu0 %v653
      %v2127 = vpop.f32.mrb[0].mxu0
      %v2128 = vadd.f32 %v1858, %v2127
      %v2129 = vpop.f32.mrb[0].mxu0
      %2130 = vmatprep.mubr.f32.mxu0 0.0
      %2131 = vmatmul.mubr.f32.gmra.mrb[0].mxu0 %v654
      %v2132 = vpop.f32.mrb[0].mxu0
      %v2133 = vadd.f32 %v1863, %v2132
      %v2134 = vpop.f32.mrb[0].mxu0
      %2135 = vmatprep.mubr.f32.mxu0 0.0
      %2136 = vmatmul.mubr.f32.gmra.mrb[0].mxu0 %v655
      %v2137 = vpop.f32.mrb[0].mxu0
      %v2138 = vadd.f32 %v1868, %v2137
      %v2139 = vpop.f32.mrb[0].mxu0
      %2140 = vmatprep.mubr.f32.mxu0 0.0
      %2141 = vmatmul.mubr.f32.gmra.mrb[0].mxu0 %v656
      %v2142 = vpop.f32.mrb[0].mxu0
      %v2143 = vadd.f32 %v1873, %v2142
      %v2144 = vpop.f32.mrb[0].mxu0
      %2145 = vmatprep.mubr.f32.mxu0 0.0
      %2146 = vmatmul.mubr.f32.gmra.mrb[0].mxu0 %v657
      %v2147 = vpop.f32.mrb[0].mxu0
      %v2148 = vadd.f32 %v1878, %v2147
      %v2149 = vpop.f32.mrb[0].mxu0
      %2150 = vmatprep.mubr.f32.mxu0 0.0
      %2151 = vmatmul.mubr.f32.gmra.mrb[0].mxu0 %v658
      %v2152 = vpop.f32.mrb[0].mxu0
      %v2153 = vadd.f32 %v1883, %v2152
      %v2154 = vpop.f32.mrb[0].mxu0
      %2155 = vmatprep.mubr.f32.mxu0 0.0
      %2156 = vmatmul.mubr.f32.gmra.mrb[0].mxu0 %v659
      %v2157 = vpop.f32.mrb[0].mxu0
      %v2158 = vadd.f32 %v1888, %v2157
      %v2159 = vpop.f32.mrb[0].mxu0
      %2160 = vdwg.mxu0
      %vm2161 = vcmp.ge.f32.partialorder %v1958, 0.0
      %vm2162 = vcmp.ge.f32.partialorder %v1963, 0.0
      %vm2163 = vcmp.ge.f32.partialorder %v1968, 0.0
      %vm2164 = vcmp.ge.f32.partialorder %v1973, 0.0
      %vm2165 = vcmp.ge.f32.partialorder %v1978, 0.0
      %vm2166 = vcmp.ge.f32.partialorder %v1983, 0.0
      %vm2167 = vcmp.ge.f32.partialorder %v1988, 0.0
      %vm2168 = vcmp.ge.f32.partialorder %v1993, 0.0
      %vm2169 = vcmp.ge.f32.partialorder %v1998, 0.0
      %vm2170 = vcmp.ge.f32.partialorder %v2003, 0.0
      %vm2171 = vcmp.ge.f32.partialorder %v2008, 0.0
      %vm2172 = vcmp.ge.f32.partialorder %v2013, 0.0
      %vm2173 = vcmp.ge.f32.partialorder %v2018, 0.0
      %vm2174 = vcmp.ge.f32.partialorder %v2023, 0.0
      %vm2175 = vcmp.ge.f32.partialorder %v2028, 0.0
      %vm2176 = vcmp.ge.f32.partialorder %v2033, 0.0
      %vm2177 = vcmp.ge.f32.partialorder %v2038, 0.0
      %vm2178 = vcmp.ge.f32.partialorder %v2043, 0.0
      %vm2179 = vcmp.ge.f32.partialorder %v2048, 0.0
      %vm2180 = vcmp.ge.f32.partialorder %v2053, 0.0
      %vm2181 = vcmp.ge.f32.partialorder %v2058, 0.0
      %vm2182 = vcmp.ge.f32.partialorder %v2063, 0.0
      %vm2183 = vcmp.ge.f32.partialorder %v2068, 0.0
      %vm2184 = vcmp.ge.f32.partialorder %v2073, 0.0
      %vm2185 = vcmp.ge.f32.partialorder %v2078, 0.0
      %vm2186 = vcmp.ge.f32.partialorder %v2083, 0.0
      %vm2187 = vcmp.ge.f32.partialorder %v2088, 0.0
      %vm2188 = vcmp.ge.f32.partialorder %v2093, 0.0
      %vm2189 = vcmp.ge.f32.partialorder %v2098, 0.0
      %vm2190 = vcmp.ge.f32.partialorder %v2103, 0.0
      %vm2191 = vcmp.ge.f32.partialorder %v2108, 0.0
      %vm2192 = vcmp.ge.f32.partialorder %v2113, 0.0
      %vm2193 = vcmp.ge.f32.partialorder %v2118, 0.0
      %vm2194 = vcmp.ge.f32.partialorder %v2123, 0.0
      %vm2195 = vcmp.ge.f32.partialorder %v2128, 0.0
      %vm2196 = vcmp.ge.f32.partialorder %v2133, 0.0
      %vm2197 = vcmp.ge.f32.partialorder %v2138, 0.0
      %vm2198 = vcmp.ge.f32.partialorder %v2143, 0.0
      %vm2199 = vcmp.ge.f32.partialorder %v2148, 0.0
      %vm2200 = vcmp.ge.f32.partialorder %v2153, 0.0
      %vm2201 = vcmp.ge.f32.partialorder %v2158, 0.0
      %v2202 = vmul.f32 %v1958, 0.1
      %v2203 = vmul.f32 %v1963, 0.1
      %v2204 = vmul.f32 %v1968, 0.1
      %v2205 = vmul.f32 %v1973, 0.1
      %v2206 = vmul.f32 %v1978, 0.1
      %v2207 = vmul.f32 %v1983, 0.1
      %v2208 = vmul.f32 %v1988, 0.1
      %v2209 = vmul.f32 %v1993, 0.1
      %v2210 = vmul.f32 %v1998, 0.1
      %v2211 = vmul.f32 %v2003, 0.1
      %v2212 = vmul.f32 %v2008, 0.1
      %v2213 = vmul.f32 %v2013, 0.1
      %v2214 = vmul.f32 %v2018, 0.1
      %v2215 = vmul.f32 %v2023, 0.1
      %v2216 = vmul.f32 %v2028, 0.1
      %v2217 = vmul.f32 %v2033, 0.1
      %v2218 = vmul.f32 %v2038, 0.1
      %v2219 = vmul.f32 %v2043, 0.1
      %v2220 = vmul.f32 %v2048, 0.1
      %v2221 = vmul.f32 %v2053, 0.1
      %v2222 = vmul.f32 %v2058, 0.1
      %v2223 = vmul.f32 %v2063, 0.1
      %v2224 = vmul.f32 %v2068, 0.1
      %v2225 = vmul.f32 %v2073, 0.1
      %v2226 = vmul.f32 %v2078, 0.1
      %v2227 = vmul.f32 %v2083, 0.1
      %v2228 = vmul.f32 %v2088, 0.1
      %v2229 = vmul.f32 %v2093, 0.1
      %v2230 = vmul.f32 %v2098, 0.1
      %v2231 = vmul.f32 %v2103, 0.1
      %v2232 = vmul.f32 %v2108, 0.1
      %v2233 = vmul.f32 %v2113, 0.1
      %v2234 = vmul.f32 %v2118, 0.1
      %v2235 = vmul.f32 %v2123, 0.1
      %v2236 = vmul.f32 %v2128, 0.1
      %v2237 = vmul.f32 %v2133, 0.1
      %v2238 = vmul.f32 %v2138, 0.1
      %v2239 = vmul.f32 %v2143, 0.1
      %v2240 = vmul.f32 %v2148, 0.1
      %v2241 = vmul.f32 %v2153, 0.1
      %v2242 = vmul.f32 %v2158, 0.1
      %v2243 = vsel %vm2161, %v1958, %v2202
      %v2244 = vsel %vm2162, %v1963, %v2203
      %v2245 = vsel %vm2163, %v1968, %v2204
      %v2246 = vsel %vm2164, %v1973, %v2205
      %v2247 = vsel %vm2165, %v1978, %v2206
      %v2248 = vsel %vm2166, %v1983, %v2207
      %v2249 = vsel %vm2167, %v1988, %v2208
      %v2250 = vsel %vm2168, %v1993, %v2209
      %v2251 = vsel %vm2169, %v1998, %v2210
      %v2252 = vsel %vm2170, %v2003, %v2211
      %v2253 = vsel %vm2171, %v2008, %v2212
      %v2254 = vsel %vm2172, %v2013, %v2213
      %v2255 = vsel %vm2173, %v2018, %v2214
      %v2256 = vsel %vm2174, %v2023, %v2215
      %v2257 = vsel %vm2175, %v2028, %v2216
      %v2258 = vsel %vm2176, %v2033, %v2217
      %v2259 = vsel %vm2177, %v2038, %v2218
      %v2260 = vsel %vm2178, %v2043, %v2219
      %v2261 = vsel %vm2179, %v2048, %v2220
      %v2262 = vsel %vm2180, %v2053, %v2221
      %v2263 = vsel %vm2181, %v2058, %v2222
      %v2264 = vsel %vm2182, %v2063, %v2223
      %v2265 = vsel %vm2183, %v2068, %v2224
      %v2266 = vsel %vm2184, %v2073, %v2225
      %v2267 = vsel %vm2185, %v2078, %v2226
      %v2268 = vsel %vm2186, %v2083, %v2227
      %v2269 = vsel %vm2187, %v2088, %v2228
      %v2270 = vsel %vm2188, %v2093, %v2229
      %v2271 = vsel %vm2189, %v2098, %v2230
      %v2272 = vsel %vm2190, %v2103, %v2231
      %v2273 = vsel %vm2191, %v2108, %v2232
      %v2274 = vsel %vm2192, %v2113, %v2233
      %v2275 = vsel %vm2193, %v2118, %v2234
      %v2276 = vsel %vm2194, %v2123, %v2235
      %v2277 = vsel %vm2195, %v2128, %v2236
      %v2278 = vsel %vm2196, %v2133, %v2237
      %v2279 = vsel %vm2197, %v2138, %v2238
      %v2280 = vsel %vm2198, %v2143, %v2239
      %v2281 = vsel %vm2199, %v2148, %v2240
      %v2282 = vsel %vm2200, %v2153, %v2241
      %v2283 = vsel %vm2201, %v2158, %v2242
      %2285 = vset.pattern.permute.xlu0 0
      %2286 = vperm.xlu0 %2285, %v326
      %v2287 = vpop.permute.xlu0 %2286
      %2290 = vset.pattern.permute.xlu0 0
      %2291 = vperm.xlu0 %2290, %v327
      %v2292 = vpop.permute.xlu0 %2291
      %2295 = vset.pattern.permute.xlu0 0
      %2296 = vperm.xlu0 %2295, %v328
      %v2297 = vpop.permute.xlu0 %2296
      %2300 = vset.pattern.permute.xlu0 0
      %2301 = vperm.xlu0 %2300, %v329
      %v2302 = vpop.permute.xlu0 %2301
      %2305 = vset.pattern.permute.xlu0 0
      %2306 = vperm.xlu0 %2305, %v330
      %v2307 = vpop.permute.xlu0 %2306
      %2310 = vset.pattern.permute.xlu0 0
      %2311 = vperm.xlu0 %2310, %v331
      %v2312 = vpop.permute.xlu0 %2311
      %2315 = vset.pattern.permute.xlu0 0
      %2316 = vperm.xlu0 %2315, %v332
      %v2317 = vpop.permute.xlu0 %2316
      %2320 = vset.pattern.permute.xlu0 0
      %2321 = vperm.xlu0 %2320, %v333
      %v2322 = vpop.permute.xlu0 %2321
      %2325 = vset.pattern.permute.xlu0 0
      %2326 = vperm.xlu0 %2325, %v334
      %v2327 = vpop.permute.xlu0 %2326
      %2330 = vset.pattern.permute.xlu0 0
      %2331 = vperm.xlu0 %2330, %v335
      %v2332 = vpop.permute.xlu0 %2331
      %2335 = vset.pattern.permute.xlu0 0
      %2336 = vperm.xlu0 %2335, %v336
      %v2337 = vpop.permute.xlu0 %2336
      %2340 = vset.pattern.permute.xlu0 0
      %2341 = vperm.xlu0 %2340, %v337
      %v2342 = vpop.permute.xlu0 %2341
      %2345 = vset.pattern.permute.xlu0 0
      %2346 = vperm.xlu0 %2345, %v338
      %v2347 = vpop.permute.xlu0 %2346
      %2350 = vset.pattern.permute.xlu0 0
      %2351 = vperm.xlu0 %2350, %v339
      %v2352 = vpop.permute.xlu0 %2351
      %2355 = vset.pattern.permute.xlu0 0
      %2356 = vperm.xlu0 %2355, %v340
      %v2357 = vpop.permute.xlu0 %2356
      %2360 = vset.pattern.permute.xlu0 0
      %2361 = vperm.xlu0 %2360, %v341
      %v2362 = vpop.permute.xlu0 %2361
      %2365 = vset.pattern.permute.xlu0 0
      %2366 = vperm.xlu0 %2365, %v342
      %v2367 = vpop.permute.xlu0 %2366
      %2370 = vset.pattern.permute.xlu0 0
      %2371 = vperm.xlu0 %2370, %v343
      %v2372 = vpop.permute.xlu0 %2371
      %2375 = vset.pattern.permute.xlu0 0
      %2376 = vperm.xlu0 %2375, %v344
      %v2377 = vpop.permute.xlu0 %2376
      %2380 = vset.pattern.permute.xlu0 0
      %2381 = vperm.xlu0 %2380, %v345
      %v2382 = vpop.permute.xlu0 %2381
      %2385 = vset.pattern.permute.xlu0 0
      %2386 = vperm.xlu0 %2385, %v346
      %v2387 = vpop.permute.xlu0 %2386
      %2390 = vset.pattern.permute.xlu0 0
      %2391 = vperm.xlu0 %2390, %v347
      %v2392 = vpop.permute.xlu0 %2391
      %2395 = vset.pattern.permute.xlu0 0
      %2396 = vperm.xlu0 %2395, %v348
      %v2397 = vpop.permute.xlu0 %2396
      %2400 = vset.pattern.permute.xlu0 0
      %2401 = vperm.xlu0 %2400, %v349
      %v2402 = vpop.permute.xlu0 %2401
      %2405 = vset.pattern.permute.xlu0 0
      %2406 = vperm.xlu0 %2405, %v350
      %v2407 = vpop.permute.xlu0 %2406
      %2410 = vset.pattern.permute.xlu0 0
      %2411 = vperm.xlu0 %2410, %v351
      %v2412 = vpop.permute.xlu0 %2411
      %2415 = vset.pattern.permute.xlu0 0
      %2416 = vperm.xlu0 %2415, %v352
      %v2417 = vpop.permute.xlu0 %2416
      %2420 = vset.pattern.permute.xlu0 0
      %2421 = vperm.xlu0 %2420, %v353
      %v2422 = vpop.permute.xlu0 %2421
      %2425 = vset.pattern.permute.xlu0 0
      %2426 = vperm.xlu0 %2425, %v354
      %v2427 = vpop.permute.xlu0 %2426
      %2430 = vset.pattern.permute.xlu0 0
      %2431 = vperm.xlu0 %2430, %v355
      %v2432 = vpop.permute.xlu0 %2431
      %2435 = vset.pattern.permute.xlu0 0
      %2436 = vperm.xlu0 %2435, %v356
      %v2437 = vpop.permute.xlu0 %2436
      %2440 = vset.pattern.permute.xlu0 0
      %2441 = vperm.xlu0 %2440, %v357
      %v2442 = vpop.permute.xlu0 %2441
      %2445 = vset.pattern.permute.xlu0 0
      %2446 = vperm.xlu0 %2445, %v358
      %v2447 = vpop.permute.xlu0 %2446
      %2450 = vset.pattern.permute.xlu0 0
      %2451 = vperm.xlu0 %2450, %v359
      %v2452 = vpop.permute.xlu0 %2451
      %2455 = vset.pattern.permute.xlu0 0
      %2456 = vperm.xlu0 %2455, %v360
      %v2457 = vpop.permute.xlu0 %2456
      %2460 = vset.pattern.permute.xlu0 0
      %2461 = vperm.xlu0 %2460, %v361
      %v2462 = vpop.permute.xlu0 %2461
      %2465 = vset.pattern.permute.xlu0 0
      %2466 = vperm.xlu0 %2465, %v362
      %v2467 = vpop.permute.xlu0 %2466
      %2470 = vset.pattern.permute.xlu0 0
      %2471 = vperm.xlu0 %2470, %v363
      %v2472 = vpop.permute.xlu0 %2471
      %2475 = vset.pattern.permute.xlu0 0
      %2476 = vperm.xlu0 %2475, %v364
      %v2477 = vpop.permute.xlu0 %2476
      %2480 = vset.pattern.permute.xlu0 0
      %2481 = vperm.xlu0 %2480, %v365
      %v2482 = vpop.permute.xlu0 %2481
      %2485 = vset.pattern.permute.xlu0 0
      %2486 = vperm.xlu0 %2485, %v366
      %v2487 = vpop.permute.xlu0 %2486
      %v2489 = vmul.f32 %v2243, %v2287
      %v2490 = vmul.f32 %v2244, %v2292
      %v2491 = vmul.f32 %v2245, %v2297
      %v2492 = vmul.f32 %v2246, %v2302
      %v2493 = vmul.f32 %v2247, %v2307
      %v2494 = vmul.f32 %v2248, %v2312
      %v2495 = vmul.f32 %v2249, %v2317
      %v2496 = vmul.f32 %v2250, %v2322
      %v2497 = vmul.f32 %v2251, %v2327
      %v2498 = vmul.f32 %v2252, %v2332
      %v2499 = vmul.f32 %v2253, %v2337
      %v2500 = vmul.f32 %v2254, %v2342
      %v2501 = vmul.f32 %v2255, %v2347
      %v2502 = vmul.f32 %v2256, %v2352
      %v2503 = vmul.f32 %v2257, %v2357
      %v2504 = vmul.f32 %v2258, %v2362
      %v2505 = vmul.f32 %v2259, %v2367
      %v2506 = vmul.f32 %v2260, %v2372
      %v2507 = vmul.f32 %v2261, %v2377
      %v2508 = vmul.f32 %v2262, %v2382
      %v2509 = vmul.f32 %v2263, %v2387
      %v2510 = vmul.f32 %v2264, %v2392
      %v2511 = vmul.f32 %v2265, %v2397
      %v2512 = vmul.f32 %v2266, %v2402
      %v2513 = vmul.f32 %v2267, %v2407
      %v2514 = vmul.f32 %v2268, %v2412
      %v2515 = vmul.f32 %v2269, %v2417
      %v2516 = vmul.f32 %v2270, %v2422
      %v2517 = vmul.f32 %v2271, %v2427
      %v2518 = vmul.f32 %v2272, %v2432
      %v2519 = vmul.f32 %v2273, %v2437
      %v2520 = vmul.f32 %v2274, %v2442
      %v2521 = vmul.f32 %v2275, %v2447
      %v2522 = vmul.f32 %v2276, %v2452
      %v2523 = vmul.f32 %v2277, %v2457
      %v2524 = vmul.f32 %v2278, %v2462
      %v2525 = vmul.f32 %v2279, %v2467
      %v2526 = vmul.f32 %v2280, %v2472
      %v2527 = vmul.f32 %v2281, %v2477
      %v2528 = vmul.f32 %v2282, %v2482
      %v2529 = vmul.f32 %v2283, %v2487
      %v2530 = vadd.f32 %v493, %v2489
      %v2531 = vadd.f32 %v494, %v2490
      %v2532 = vadd.f32 %v495, %v2491
      %v2533 = vadd.f32 %v496, %v2492
      %v2534 = vadd.f32 %v497, %v2493
      %v2535 = vadd.f32 %v498, %v2494
      %v2536 = vadd.f32 %v499, %v2495
      %v2537 = vadd.f32 %v500, %v2496
      %v2538 = vadd.f32 %v501, %v2497
      %v2539 = vadd.f32 %v502, %v2498
      %v2540 = vadd.f32 %v503, %v2499
      %v2541 = vadd.f32 %v504, %v2500
      %v2542 = vadd.f32 %v505, %v2501
      %v2543 = vadd.f32 %v506, %v2502
      %v2544 = vadd.f32 %v507, %v2503
      %v2545 = vadd.f32 %v508, %v2504
      %v2546 = vadd.f32 %v509, %v2505
      %v2547 = vadd.f32 %v510, %v2506
      %v2548 = vadd.f32 %v511, %v2507
      %v2549 = vadd.f32 %v512, %v2508
      %v2550 = vadd.f32 %v513, %v2509
      %v2551 = vadd.f32 %v514, %v2510
      %v2552 = vadd.f32 %v515, %v2511
      %v2553 = vadd.f32 %v516, %v2512
      %v2554 = vadd.f32 %v517, %v2513
      %v2555 = vadd.f32 %v518, %v2514
      %v2556 = vadd.f32 %v519, %v2515
      %v2557 = vadd.f32 %v520, %v2516
      %v2558 = vadd.f32 %v521, %v2517
      %v2559 = vadd.f32 %v522, %v2518
      %v2560 = vadd.f32 %v523, %v2519
      %v2561 = vadd.f32 %v524, %v2520
      %v2562 = vadd.f32 %v525, %v2521
      %v2563 = vadd.f32 %v526, %v2522
      %v2564 = vadd.f32 %v527, %v2523
      %v2565 = vadd.f32 %v528, %v2524
      %v2566 = vadd.f32 %v529, %v2525
      %v2567 = vadd.f32 %v530, %v2526
      %v2568 = vadd.f32 %v531, %v2527
      %v2569 = vadd.f32 %v532, %v2528
      %v2570 = vadd.f32 %v533, %v2529
      %2571 = vst [vmem:[%s197 + $0x13] sm:$0xff] %v2530
      %2572 = vst [vmem:[%s197 + $0x1b] sm:$0xff] %v2531
      %2573 = vst [vmem:[%s197 + $0x23] sm:$0xff] %v2532
      %2574 = vst [vmem:[%s197 + $0x2b] sm:$0xff] %v2533
      %2575 = vst [vmem:[%s197 + $0x33] sm:$0xff] %v2534
      %2576 = vst [vmem:[%s197 + $0x3b] sm:$0xff] %v2535
      %2577 = vst [vmem:[%s197 + $0x43] sm:$0xff] %v2536
      %2578 = vst [vmem:[%s197 + $0x4b] sm:$0xff] %v2537
      %2579 = vst [vmem:[%s197 + $0x53] sm:$0xff] %v2538
      %2580 = vst [vmem:[%s197 + $0x5b] sm:$0xff] %v2539
      %2581 = vst [vmem:[%s197 + $0x63] sm:$0xff] %v2540
      %2582 = vst [vmem:[%s197 + $0x6b] sm:$0xff] %v2541
      %2583 = vst [vmem:[%s197 + $0x73] sm:$0xff] %v2542
      %2584 = vst [vmem:[%s197 + $0x7b] sm:$0xff] %v2543
      %2585 = vst [vmem:[%s197 + $0x83] sm:$0xff] %v2544
      %2586 = vst [vmem:[%s197 + $0x8b] sm:$0xff] %v2545
      %2587 = vst [vmem:[%s197 + $0x93] sm:$0xff] %v2546
      %2588 = vst [vmem:[%s197 + $0x9b] sm:$0xff] %v2547
      %2589 = vst [vmem:[%s197 + $0xa3] sm:$0xff] %v2548
      %2590 = vst [vmem:[%s197 + $0xab] sm:$0xff] %v2549
      %2591 = vst [vmem:[%s197 + $0xb3] sm:$0xff] %v2550
      %2592 = vst [vmem:[%s197 + $0xbb] sm:$0xff] %v2551
      %2593 = vst [vmem:[%s197 + $0xc3] sm:$0xff] %v2552
      %2594 = vst [vmem:[%s197 + $0xcb] sm:$0xff] %v2553
      %2595 = vst [vmem:[%s197 + $0xd3] sm:$0xff] %v2554
      %2596 = vst [vmem:[%s197 + $0xdb] sm:$0xff] %v2555
      %2597 = vst [vmem:[%s197 + $0xe3] sm:$0xff] %v2556
      %2598 = vst [vmem:[%s197 + $0xeb] sm:$0xff] %v2557
      %2599 = vst [vmem:[%s197 + $0xf3] sm:$0xff] %v2558
      %2600 = vst [vmem:[%s197 + $0xfb] sm:$0xff] %v2559
      %2601 = vst [vmem:[%s197 + $0x103] sm:$0xff] %v2560
      %2602 = vst [vmem:[%s197 + $0x10b] sm:$0xff] %v2561
      %2603 = vst [vmem:[%s197 + $0x113] sm:$0xff] %v2562
      %2604 = vst [vmem:[%s197 + $0x11b] sm:$0xff] %v2563
      %2605 = vst [vmem:[%s197 + $0x123] sm:$0xff] %v2564
      %2606 = vst [vmem:[%s197 + $0x12b] sm:$0xff] %v2565
      %2607 = vst [vmem:[%s197 + $0x133] sm:$0xff] %v2566
      %2608 = vst [vmem:[%s197 + $0x13b] sm:$0xff] %v2567
      %2609 = vst [vmem:[%s197 + $0x143] sm:$0xff] %v2568
      %2610 = vst [vmem:[%s197 + $0x14b] sm:$0xff] %v2569
      %2611 = vst [vmem:[%s197 + $0x153] sm:$0xf] %v2570
      %v2612 = vld [vmem:[%s197] sm:$0xff]
      %v2613 = vld [vmem:[%s197 + $0x8] sm:$0xff]
      %v2614 = vld [vmem:[%s197 + $0x10] sm:$0xff]
      %v2615 = vld [vmem:[%s197 + $0x18] sm:$0xff]
      %v2616 = vld [vmem:[%s197 + $0x20] sm:$0xff]
      %v2617 = vld [vmem:[%s197 + $0x28] sm:$0xff]
      %v2618 = vld [vmem:[%s197 + $0x30] sm:$0xff]
      %v2619 = vld [vmem:[%s197 + $0x38] sm:$0xff]
      %v2620 = vld [vmem:[%s197 + $0x40] sm:$0xff]
      %v2621 = vld [vmem:[%s197 + $0x48] sm:$0xff]
      %v2622 = vld [vmem:[%s197 + $0x50] sm:$0xff]
      %v2623 = vld [vmem:[%s197 + $0x58] sm:$0xff]
      %v2624 = vld [vmem:[%s197 + $0x60] sm:$0xff]
      %v2625 = vld [vmem:[%s197 + $0x68] sm:$0xff]
      %v2626 = vld [vmem:[%s197 + $0x70] sm:$0xff]
      %v2627 = vld [vmem:[%s197 + $0x78] sm:$0xff]
      %v2628 = vld [vmem:[%s197 + $0x80] sm:$0xff]
      %v2629 = vld [vmem:[%s197 + $0x88] sm:$0xff]
      %v2630 = vld [vmem:[%s197 + $0x90] sm:$0xff]
      %v2631 = vld [vmem:[%s197 + $0x98] sm:$0xff]
      %v2632 = vld [vmem:[%s197 + $0xa0] sm:$0xff]
      %v2633 = vld [vmem:[%s197 + $0xa8] sm:$0xff]
      %v2634 = vld [vmem:[%s197 + $0xb0] sm:$0xff]
      %v2635 = vld [vmem:[%s197 + $0xb8] sm:$0xff]
      %v2636 = vld [vmem:[%s197 + $0xc0] sm:$0xff]
      %v2637 = vld [vmem:[%s197 + $0xc8] sm:$0xff]
      %v2638 = vld [vmem:[%s197 + $0xd0] sm:$0xff]
      %v2639 = vld [vmem:[%s197 + $0xd8] sm:$0xff]
      %v2640 = vld [vmem:[%s197 + $0xe0] sm:$0xff]
      %v2641 = vld [vmem:[%s197 + $0xe8] sm:$0xff]
      %v2642 = vld [vmem:[%s197 + $0xf0] sm:$0xff]
      %v2643 = vld [vmem:[%s197 + $0xf8] sm:$0xff]
      %v2644 = vld [vmem:[%s197 + $0x100] sm:$0xff]
      %v2645 = vld [vmem:[%s197 + $0x108] sm:$0xff]
      %v2646 = vld [vmem:[%s197 + $0x110] sm:$0xff]
      %v2647 = vld [vmem:[%s197 + $0x118] sm:$0xff]
      %v2648 = vld [vmem:[%s197 + $0x120] sm:$0xff]
      %v2649 = vld [vmem:[%s197 + $0x128] sm:$0xff]
      %v2650 = vld [vmem:[%s197 + $0x130] sm:$0xff]
      %v2651 = vld [vmem:[%s197 + $0x138] sm:$0xff]
      %v2652 = vld [vmem:[%s197 + $0x140] sm:$0xf]
      %v2653 = vld [vmem:[%s197 + $0x1] sm:$0xff]
      %v2654 = vld [vmem:[%s197 + $0x9] sm:$0xff]
      %v2655 = vld [vmem:[%s197 + $0x11] sm:$0xff]
      %v2656 = vld [vmem:[%s197 + $0x19] sm:$0xff]
      %v2657 = vld [vmem:[%s197 + $0x21] sm:$0xff]
      %v2658 = vld [vmem:[%s197 + $0x29] sm:$0xff]
      %v2659 = vld [vmem:[%s197 + $0x31] sm:$0xff]
      %v2660 = vld [vmem:[%s197 + $0x39] sm:$0xff]
      %v2661 = vld [vmem:[%s197 + $0x41] sm:$0xff]
      %v2662 = vld [vmem:[%s197 + $0x49] sm:$0xff]
      %v2663 = vld [vmem:[%s197 + $0x51] sm:$0xff]
      %v2664 = vld [vmem:[%s197 + $0x59] sm:$0xff]
      %v2665 = vld [vmem:[%s197 + $0x61] sm:$0xff]
      %v2666 = vld [vmem:[%s197 + $0x69] sm:$0xff]
      %v2667 = vld [vmem:[%s197 + $0x71] sm:$0xff]
      %v2668 = vld [vmem:[%s197 + $0x79] sm:$0xff]
      %v2669 = vld [vmem:[%s197 + $0x81] sm:$0xff]
      %v2670 = vld [vmem:[%s197 + $0x89] sm:$0xff]
      %v2671 = vld [vmem:[%s197 + $0x91] sm:$0xff]
      %v2672 = vld [vmem:[%s197 + $0x99] sm:$0xff]
      %v2673 = vld [vmem:[%s197 + $0xa1] sm:$0xff]
      %v2674 = vld [vmem:[%s197 + $0xa9] sm:$0xff]
      %v2675 = vld [vmem:[%s197 + $0xb1] sm:$0xff]
      %v2676 = vld [vmem:[%s197 + $0xb9] sm:$0xff]
      %v2677 = vld [vmem:[%s197 + $0xc1] sm:$0xff]
      %v2678 = vld [vmem:[%s197 + $0xc9] sm:$0xff]
      %v2679 = vld [vmem:[%s197 + $0xd1] sm:$0xff]
      %v2680 = vld [vmem:[%s197 + $0xd9] sm:$0xff]
      %v2681 = vld [vmem:[%s197 + $0xe1] sm:$0xff]
      %v2682 = vld [vmem:[%s197 + $0xe9] sm:$0xff]
      %v2683 = vld [vmem:[%s197 + $0xf1] sm:$0xff]
      %v2684 = vld [vmem:[%s197 + $0xf9] sm:$0xff]
      %v2685 = vld [vmem:[%s197 + $0x101] sm:$0xff]
      %v2686 = vld [vmem:[%s197 + $0x109] sm:$0xff]
      %v2687 = vld [vmem:[%s197 + $0x111] sm:$0xff]
      %v2688 = vld [vmem:[%s197 + $0x119] sm:$0xff]
      %v2689 = vld [vmem:[%s197 + $0x121] sm:$0xff]
      %v2690 = vld [vmem:[%s197 + $0x129] sm:$0xff]
      %v2691 = vld [vmem:[%s197 + $0x131] sm:$0xff]
      %v2692 = vld [vmem:[%s197 + $0x139] sm:$0xff]
      %v2693 = vld [vmem:[%s197 + $0x141] sm:$0xf]
      %v2694 = vld [vmem:[%s197 + $0x2] sm:$0xff]
      %v2695 = vld [vmem:[%s197 + $0xa] sm:$0xff]
      %v2696 = vld [vmem:[%s197 + $0x12] sm:$0xff]
      %v2697 = vld [vmem:[%s197 + $0x1a] sm:$0xff]
      %v2698 = vld [vmem:[%s197 + $0x22] sm:$0xff]
      %v2699 = vld [vmem:[%s197 + $0x2a] sm:$0xff]
      %v2700 = vld [vmem:[%s197 + $0x32] sm:$0xff]
      %v2701 = vld [vmem:[%s197 + $0x3a] sm:$0xff]
      %v2702 = vld [vmem:[%s197 + $0x42] sm:$0xff]
      %v2703 = vld [vmem:[%s197 + $0x4a] sm:$0xff]
      %v2704 = vld [vmem:[%s197 + $0x52] sm:$0xff]
      %v2705 = vld [vmem:[%s197 + $0x5a] sm:$0xff]
      %v2706 = vld [vmem:[%s197 + $0x62] sm:$0xff]
      %v2707 = vld [vmem:[%s197 + $0x6a] sm:$0xff]
      %v2708 = vld [vmem:[%s197 + $0x72] sm:$0xff]
      %v2709 = vld [vmem:[%s197 + $0x7a] sm:$0xff]
      %v2710 = vld [vmem:[%s197 + $0x82] sm:$0xff]
      %v2711 = vld [vmem:[%s197 + $0x8a] sm:$0xff]
      %v2712 = vld [vmem:[%s197 + $0x92] sm:$0xff]
      %v2713 = vld [vmem:[%s197 + $0x9a] sm:$0xff]
      %v2714 = vld [vmem:[%s197 + $0xa2] sm:$0xff]
      %v2715 = vld [vmem:[%s197 + $0xaa] sm:$0xff]
      %v2716 = vld [vmem:[%s197 + $0xb2] sm:$0xff]
      %v2717 = vld [vmem:[%s197 + $0xba] sm:$0xff]
      %v2718 = vld [vmem:[%s197 + $0xc2] sm:$0xff]
      %v2719 = vld [vmem:[%s197 + $0xca] sm:$0xff]
      %v2720 = vld [vmem:[%s197 + $0xd2] sm:$0xff]
      %v2721 = vld [vmem:[%s197 + $0xda] sm:$0xff]
      %v2722 = vld [vmem:[%s197 + $0xe2] sm:$0xff]
      %v2723 = vld [vmem:[%s197 + $0xea] sm:$0xff]
      %v2724 = vld [vmem:[%s197 + $0xf2] sm:$0xff]
      %v2725 = vld [vmem:[%s197 + $0xfa] sm:$0xff]
      %v2726 = vld [vmem:[%s197 + $0x102] sm:$0xff]
      %v2727 = vld [vmem:[%s197 + $0x10a] sm:$0xff]
      %v2728 = vld [vmem:[%s197 + $0x112] sm:$0xff]
      %v2729 = vld [vmem:[%s197 + $0x11a] sm:$0xff]
      %v2730 = vld [vmem:[%s197 + $0x122] sm:$0xff]
      %v2731 = vld [vmem:[%s197 + $0x12a] sm:$0xff]
      %v2732 = vld [vmem:[%s197 + $0x132] sm:$0xff]
      %v2733 = vld [vmem:[%s197 + $0x13a] sm:$0xff]
      %v2734 = vld [vmem:[%s197 + $0x142] sm:$0xf]
      %v2735 = vld [vmem:[%s197 + $0x142] sm:$0xff]
      %v2736 = vld [vmem:[%s197 + $0x14a] sm:$0xff]
      %v2737 = vld [vmem:[%s197 + $0x152] sm:$0xf]
      %v2738 = vld [vmem:[%s197 + $0x13] sm:$0xff]
      %v2739 = vld [vmem:[%s197 + $0x1b] sm:$0xff]
      %v2740 = vld [vmem:[%s197 + $0x23] sm:$0xff]
      %v2741 = vld [vmem:[%s197 + $0x2b] sm:$0xff]
      %v2742 = vld [vmem:[%s197 + $0x33] sm:$0xff]
      %v2743 = vld [vmem:[%s197 + $0x3b] sm:$0xff]
      %v2744 = vld [vmem:[%s197 + $0x43] sm:$0xff]
      %v2745 = vld [vmem:[%s197 + $0x4b] sm:$0xff]
      %v2746 = vld [vmem:[%s197 + $0x53] sm:$0xff]
      %v2747 = vld [vmem:[%s197 + $0x5b] sm:$0xff]
      %v2748 = vld [vmem:[%s197 + $0x63] sm:$0xff]
      %v2749 = vld [vmem:[%s197 + $0x6b] sm:$0xff]
      %v2750 = vld [vmem:[%s197 + $0x73] sm:$0xff]
      %v2751 = vld [vmem:[%s197 + $0x7b] sm:$0xff]
      %v2752 = vld [vmem:[%s197 + $0x83] sm:$0xff]
      %v2753 = vld [vmem:[%s197 + $0x8b] sm:$0xff]
      %v2754 = vld [vmem:[%s197 + $0x93] sm:$0xff]
      %v2755 = vld [vmem:[%s197 + $0x9b] sm:$0xff]
      %v2756 = vld [vmem:[%s197 + $0xa3] sm:$0xff]
      %v2757 = vld [vmem:[%s197 + $0xab] sm:$0xff]
      %v2758 = vld [vmem:[%s197 + $0xb3] sm:$0xff]
      %v2759 = vld [vmem:[%s197 + $0xbb] sm:$0xff]
      %v2760 = vld [vmem:[%s197 + $0xc3] sm:$0xff]
      %v2761 = vld [vmem:[%s197 + $0xcb] sm:$0xff]
      %v2762 = vld [vmem:[%s197 + $0xd3] sm:$0xff]
      %v2763 = vld [vmem:[%s197 + $0xdb] sm:$0xff]
      %v2764 = vld [vmem:[%s197 + $0xe3] sm:$0xff]
      %v2765 = vld [vmem:[%s197 + $0xeb] sm:$0xff]
      %v2766 = vld [vmem:[%s197 + $0xf3] sm:$0xff]
      %v2767 = vld [vmem:[%s197 + $0xfb] sm:$0xff]
      %v2768 = vld [vmem:[%s197 + $0x103] sm:$0xff]
      %v2769 = vld [vmem:[%s197 + $0x10b] sm:$0xff]
      %v2770 = vld [vmem:[%s197 + $0x113] sm:$0xff]
      %v2771 = vld [vmem:[%s197 + $0x11b] sm:$0xff]
      %v2772 = vld [vmem:[%s197 + $0x123] sm:$0xff]
      %v2773 = vld [vmem:[%s197 + $0x12b] sm:$0xff]
      %v2774 = vld [vmem:[%s197 + $0x133] sm:$0xff]
      %v2775 = vld [vmem:[%s197 + $0x13b] sm:$0xff]
      %v2776 = vld [vmem:[%s197 + $0x143] sm:$0xff]
      %v2777 = vld [vmem:[%s197 + $0x14b] sm:$0xff]
      %v2778 = vld [vmem:[%s197 + $0x153] sm:$0xf]
      %v2779 = vld [vmem:[%s197 + $0x14] sm:$0xff]
      %v2780 = vld [vmem:[%s197 + $0x1c] sm:$0xff]
      %v2781 = vld [vmem:[%s197 + $0x24] sm:$0xff]
      %v2782 = vld [vmem:[%s197 + $0x2c] sm:$0xff]
      %v2783 = vld [vmem:[%s197 + $0x34] sm:$0xff]
      %v2784 = vld [vmem:[%s197 + $0x3c] sm:$0xff]
      %v2785 = vld [vmem:[%s197 + $0x44] sm:$0xff]
      %v2786 = vld [vmem:[%s197 + $0x4c] sm:$0xff]
      %v2787 = vld [vmem:[%s197 + $0x54] sm:$0xff]
      %v2788 = vld [vmem:[%s197 + $0x5c] sm:$0xff]
      %v2789 = vld [vmem:[%s197 + $0x64] sm:$0xff]
      %v2790 = vld [vmem:[%s197 + $0x6c] sm:$0xff]
      %v2791 = vld [vmem:[%s197 + $0x74] sm:$0xff]
      %v2792 = vld [vmem:[%s197 + $0x7c] sm:$0xff]
      %v2793 = vld [vmem:[%s197 + $0x84] sm:$0xff]
      %v2794 = vld [vmem:[%s197 + $0x8c] sm:$0xff]
      %v2795 = vld [vmem:[%s197 + $0x94] sm:$0xff]
      %v2796 = vld [vmem:[%s197 + $0x9c] sm:$0xff]
      %v2797 = vld [vmem:[%s197 + $0xa4] sm:$0xff]
      %v2798 = vld [vmem:[%s197 + $0xac] sm:$0xff]
      %v2799 = vld [vmem:[%s197 + $0xb4] sm:$0xff]
      %v2800 = vld [vmem:[%s197 + $0xbc] sm:$0xff]
      %v2801 = vld [vmem:[%s197 + $0xc4] sm:$0xff]
      %v2802 = vld [vmem:[%s197 + $0xcc] sm:$0xff]
      %v2803 = vld [vmem:[%s197 + $0xd4] sm:$0xff]
      %v2804 = vld [vmem:[%s197 + $0xdc] sm:$0xff]
      %v2805 = vld [vmem:[%s197 + $0xe4] sm:$0xff]
      %v2806 = vld [vmem:[%s197 + $0xec] sm:$0xff]
      %v2807 = vld [vmem:[%s197 + $0xf4] sm:$0xff]
      %v2808 = vld [vmem:[%s197 + $0xfc] sm:$0xff]
      %v2809 = vld [vmem:[%s197 + $0x104] sm:$0xff]
      %v2810 = vld [vmem:[%s197 + $0x10c] sm:$0xff]
      %v2811 = vld [vmem:[%s197 + $0x114] sm:$0xff]
      %v2812 = vld [vmem:[%s197 + $0x11c] sm:$0xff]
      %v2813 = vld [vmem:[%s197 + $0x124] sm:$0xff]
      %v2814 = vld [vmem:[%s197 + $0x12c] sm:$0xff]
      %v2815 = vld [vmem:[%s197 + $0x134] sm:$0xff]
      %v2816 = vld [vmem:[%s197 + $0x13c] sm:$0xff]
      %v2817 = vld [vmem:[%s197 + $0x144] sm:$0xff]
      %v2818 = vld [vmem:[%s197 + $0x14c] sm:$0xff]
      %v2819 = vld [vmem:[%s197 + $0x154] sm:$0xf]
      %v2820 = vld [vmem:[%s197 + $0x154] sm:$0xff]
      %v2821 = vld [vmem:[%s197 + $0x15c] sm:$0xff]
      %v2822 = vld [vmem:[%s197 + $0x164] sm:$0xf]
      %v2823 = vld [vmem:[%s197 + $0x25] sm:$0xff]
      %v2824 = vld [vmem:[%s197 + $0x2d] sm:$0xff]
      %v2825 = vld [vmem:[%s197 + $0x35] sm:$0xff]
      %v2826 = vld [vmem:[%s197 + $0x3d] sm:$0xff]
      %v2827 = vld [vmem:[%s197 + $0x45] sm:$0xff]
      %v2828 = vld [vmem:[%s197 + $0x4d] sm:$0xff]
      %v2829 = vld [vmem:[%s197 + $0x55] sm:$0xff]
      %v2830 = vld [vmem:[%s197 + $0x5d] sm:$0xff]
      %v2831 = vld [vmem:[%s197 + $0x65] sm:$0xff]
      %v2832 = vld [vmem:[%s197 + $0x6d] sm:$0xff]
      %v2833 = vld [vmem:[%s197 + $0x75] sm:$0xff]
      %v2834 = vld [vmem:[%s197 + $0x7d] sm:$0xff]
      %v2835 = vld [vmem:[%s197 + $0x85] sm:$0xff]
      %v2836 = vld [vmem:[%s197 + $0x8d] sm:$0xff]
      %v2837 = vld [vmem:[%s197 + $0x95] sm:$0xff]
      %v2838 = vld [vmem:[%s197 + $0x9d] sm:$0xff]
      %v2839 = vld [vmem:[%s197 + $0xa5] sm:$0xff]
      %v2840 = vld [vmem:[%s197 + $0xad] sm:$0xff]
      %v2841 = vld [vmem:[%s197 + $0xb5] sm:$0xff]
      %v2842 = vld [vmem:[%s197 + $0xbd] sm:$0xff]
      %v2843 = vld [vmem:[%s197 + $0xc5] sm:$0xff]
      %v2844 = vld [vmem:[%s197 + $0xcd] sm:$0xff]
      %v2845 = vld [vmem:[%s197 + $0xd5] sm:$0xff]
      %v2846 = vld [vmem:[%s197 + $0xdd] sm:$0xff]
      %v2847 = vld [vmem:[%s197 + $0xe5] sm:$0xff]
      %v2848 = vld [vmem:[%s197 + $0xed] sm:$0xff]
      %v2849 = vld [vmem:[%s197 + $0xf5] sm:$0xff]
      %v2850 = vld [vmem:[%s197 + $0xfd] sm:$0xff]
      %v2851 = vld [vmem:[%s197 + $0x105] sm:$0xff]
      %v2852 = vld [vmem:[%s197 + $0x10d] sm:$0xff]
      %v2853 = vld [vmem:[%s197 + $0x115] sm:$0xff]
      %v2854 = vld [vmem:[%s197 + $0x11d] sm:$0xff]
      %v2855 = vld [vmem:[%s197 + $0x125] sm:$0xff]
      %v2856 = vld [vmem:[%s197 + $0x12d] sm:$0xff]
      %v2857 = vld [vmem:[%s197 + $0x135] sm:$0xff]
      %v2858 = vld [vmem:[%s197 + $0x13d] sm:$0xff]
      %v2859 = vld [vmem:[%s197 + $0x145] sm:$0xff]
      %v2860 = vld [vmem:[%s197 + $0x14d] sm:$0xff]
      %v2861 = vld [vmem:[%s197 + $0x155] sm:$0xff]
      %v2862 = vld [vmem:[%s197 + $0x15d] sm:$0xff]
      %v2863 = vld [vmem:[%s197 + $0x165] sm:$0xf]
      %v2864 = vld [vmem:[%s197 + $0x26] sm:$0xff]
      %v2865 = vld [vmem:[%s197 + $0x2e] sm:$0xff]
      %v2866 = vld [vmem:[%s197 + $0x36] sm:$0xff]
      %v2867 = vld [vmem:[%s197 + $0x3e] sm:$0xff]
      %v2868 = vld [vmem:[%s197 + $0x46] sm:$0xff]
      %v2869 = vld [vmem:[%s197 + $0x4e] sm:$0xff]
      %v2870 = vld [vmem:[%s197 + $0x56] sm:$0xff]
      %v2871 = vld [vmem:[%s197 + $0x5e] sm:$0xff]
      %v2872 = vld [vmem:[%s197 + $0x66] sm:$0xff]
      %v2873 = vld [vmem:[%s197 + $0x6e] sm:$0xff]
      %v2874 = vld [vmem:[%s197 + $0x76] sm:$0xff]
      %v2875 = vld [vmem:[%s197 + $0x7e] sm:$0xff]
      %v2876 = vld [vmem:[%s197 + $0x86] sm:$0xff]
      %v2877 = vld [vmem:[%s197 + $0x8e] sm:$0xff]
      %v2878 = vld [vmem:[%s197 + $0x96] sm:$0xff]
      %v2879 = vld [vmem:[%s197 + $0x9e] sm:$0xff]
      %v2880 = vld [vmem:[%s197 + $0xa6] sm:$0xff]
      %v2881 = vld [vmem:[%s197 + $0xae] sm:$0xff]
      %v2882 = vld [vmem:[%s197 + $0xb6] sm:$0xff]
      %v2883 = vld [vmem:[%s197 + $0xbe] sm:$0xff]
      %v2884 = vld [vmem:[%s197 + $0xc6] sm:$0xff]
      %v2885 = vld [vmem:[%s197 + $0xce] sm:$0xff]
      %v2886 = vld [vmem:[%s197 + $0xd6] sm:$0xff]
      %v2887 = vld [vmem:[%s197 + $0xde] sm:$0xff]
      %v2888 = vld [vmem:[%s197 + $0xe6] sm:$0xff]
      %v2889 = vld [vmem:[%s197 + $0xee] sm:$0xff]
      %v2890 = vld [vmem:[%s197 + $0xf6] sm:$0xff]
      %v2891 = vld [vmem:[%s197 + $0xfe] sm:$0xff]
      %v2892 = vld [vmem:[%s197 + $0x106] sm:$0xff]
      %v2893 = vld [vmem:[%s197 + $0x10e] sm:$0xff]
      %v2894 = vld [vmem:[%s197 + $0x116] sm:$0xff]
      %v2895 = vld [vmem:[%s197 + $0x11e] sm:$0xff]
      %v2896 = vld [vmem:[%s197 + $0x126] sm:$0xff]
      %v2897 = vld [vmem:[%s197 + $0x12e] sm:$0xff]
      %v2898 = vld [vmem:[%s197 + $0x136] sm:$0xff]
      %v2899 = vld [vmem:[%s197 + $0x13e] sm:$0xff]
      %v2900 = vld [vmem:[%s197 + $0x146] sm:$0xff]
      %v2901 = vld [vmem:[%s197 + $0x14e] sm:$0xff]
      %v2902 = vld [vmem:[%s197 + $0x156] sm:$0xff]
      %v2903 = vld [vmem:[%s197 + $0x15e] sm:$0xff]
      %v2904 = vld [vmem:[%s197 + $0x166] sm:$0xf]
      %s2905 = scalar_lea.vmem %s2, 1152
      %v2906 = vld [vmem:[%s2905] sm:$0xff]
      %v2907 = vld [vmem:[%s2905 + $0x8] sm:$0xff]
      %v2908 = vld [vmem:[%s2905 + $0x10] sm:$0xff]
      %v2909 = vld [vmem:[%s2905 + $0x18] sm:$0xff]
      %v2910 = vld [vmem:[%s2905 + $0x20] sm:$0xff]
      %v2911 = vld [vmem:[%s2905 + $0x28] sm:$0xff]
      %v2912 = vld [vmem:[%s2905 + $0x30] sm:$0xff]
      %v2913 = vld [vmem:[%s2905 + $0x38] sm:$0xff]
      %v2914 = vld [vmem:[%s2905 + $0x40] sm:$0xff]
      %v2915 = vld [vmem:[%s2905 + $0x48] sm:$0xff]
      %v2916 = vld [vmem:[%s2905 + $0x50] sm:$0xff]
      %v2917 = vld [vmem:[%s2905 + $0x58] sm:$0xff]
      %v2918 = vld [vmem:[%s2905 + $0x60] sm:$0xff]
      %v2919 = vld [vmem:[%s2905 + $0x68] sm:$0xff]
      %v2920 = vld [vmem:[%s2905 + $0x70] sm:$0xff]
      %v2921 = vld [vmem:[%s2905 + $0x78] sm:$0xff]
      %v2922 = vld [vmem:[%s2905 + $0x80] sm:$0xff]
      %v2923 = vld [vmem:[%s2905 + $0x88] sm:$0xff]
      %v2924 = vld [vmem:[%s2905 + $0x90] sm:$0xff]
      %v2925 = vld [vmem:[%s2905 + $0x98] sm:$0xff]
      %v2926 = vld [vmem:[%s2905 + $0xa0] sm:$0xff]
      %v2927 = vld [vmem:[%s2905 + $0xa8] sm:$0xff]
      %v2928 = vld [vmem:[%s2905 + $0xb0] sm:$0xff]
      %v2929 = vld [vmem:[%s2905 + $0xb8] sm:$0xff]
      %v2930 = vld [vmem:[%s2905 + $0xc0] sm:$0xff]
      %v2931 = vld [vmem:[%s2905 + $0xc8] sm:$0xff]
      %v2932 = vld [vmem:[%s2905 + $0xd0] sm:$0xff]
      %v2933 = vld [vmem:[%s2905 + $0xd8] sm:$0xff]
      %v2934 = vld [vmem:[%s2905 + $0xe0] sm:$0xff]
      %v2935 = vld [vmem:[%s2905 + $0xe8] sm:$0xff]
      %v2936 = vld [vmem:[%s2905 + $0xf0] sm:$0xff]
      %v2937 = vld [vmem:[%s2905 + $0xf8] sm:$0xff]
      %v2938 = vld [vmem:[%s2905 + $0x100] sm:$0xff]
      %v2939 = vld [vmem:[%s2905 + $0x108] sm:$0xff]
      %v2940 = vld [vmem:[%s2905 + $0x110] sm:$0xff]
      %v2941 = vld [vmem:[%s2905 + $0x118] sm:$0xff]
      %v2942 = vld [vmem:[%s2905 + $0x120] sm:$0xff]
      %v2943 = vld [vmem:[%s2905 + $0x128] sm:$0xff]
      %v2944 = vld [vmem:[%s2905 + $0x130] sm:$0xff]
      %v2945 = vld [vmem:[%s2905 + $0x138] sm:$0xff]
      %v2946 = vld [vmem:[%s2905 + $0x140] sm:$0xff]
      %v2947 = vld [vmem:[%s2905 + $0x148] sm:$0xff]
      %v2948 = vld [vmem:[%s2905 + $0x150] sm:$0xff]
      %v2949 = vld [vmem:[%s2905 + $0x158] sm:$0xff]
      %v2950 = vld [vmem:[%s2905 + $0x160] sm:$0xff]
      %v2951 = vld [vmem:[%s2905 + $0x168] sm:$0xff]
      %v2952 = vld [vmem:[%s2905 + $0x170] sm:$0xff]
      %v2953 = vld [vmem:[%s2905 + $0x178] sm:$0xff]
      %v2954 = vld [vmem:[%s2905 + $0x180] sm:$0xff]
      %v2955 = vld [vmem:[%s2905 + $0x188] sm:$0xff]
      %v2956 = vld [vmem:[%s2905 + $0x190] sm:$0xff]
      %v2957 = vld [vmem:[%s2905 + $0x198] sm:$0xff]
      %v2958 = vld [vmem:[%s2905 + $0x1a0] sm:$0xff]
      %v2959 = vld [vmem:[%s2905 + $0x1a8] sm:$0xff]
      %v2960 = vld [vmem:[%s2905 + $0x1b0] sm:$0xff]
      %v2961 = vld [vmem:[%s2905 + $0x1b8] sm:$0xff]
      %v2962 = vld [vmem:[%s2905 + $0x1c0] sm:$0xff]
      %v2963 = vld [vmem:[%s2905 + $0x1c8] sm:$0xff]
      %v2964 = vld [vmem:[%s2905 + $0x1d0] sm:$0xff]
      %v2965 = vld [vmem:[%s2905 + $0x1d8] sm:$0xff]
      %v2966 = vld [vmem:[%s2905 + $0x1e0] sm:$0xff]
      %v2967 = vld [vmem:[%s2905 + $0x1e8] sm:$0xff]
      %v2968 = vld [vmem:[%s2905 + $0x1f0] sm:$0xff]
      %v2969 = vld [vmem:[%s2905 + $0x1f8] sm:$0xff]
      %v2970 = vld [vmem:[%s2905 + $0x200] sm:$0xff]
      %v2971 = vld [vmem:[%s2905 + $0x208] sm:$0xff]
      %v2972 = vld [vmem:[%s2905 + $0x210] sm:$0xff]
      %v2973 = vld [vmem:[%s2905 + $0x218] sm:$0xff]
      %v2974 = vld [vmem:[%s2905 + $0x220] sm:$0xff]
      %v2975 = vld [vmem:[%s2905 + $0x228] sm:$0xff]
      %v2976 = vld [vmem:[%s2905 + $0x230] sm:$0xff]
      %v2977 = vld [vmem:[%s2905 + $0x238] sm:$0xff]
      %v2978 = vld [vmem:[%s2905 + $0x240] sm:$0xff]
      %v2979 = vld [vmem:[%s2905 + $0x248] sm:$0xff]
      %v2980 = vld [vmem:[%s2905 + $0x250] sm:$0xff]
      %v2981 = vld [vmem:[%s2905 + $0x258] sm:$0xff]
      %v2982 = vld [vmem:[%s2905 + $0x260] sm:$0xff]
      %v2983 = vld [vmem:[%s2905 + $0x268] sm:$0xff]
      %v2984 = vld [vmem:[%s2905 + $0x270] sm:$0xff]
      %v2985 = vld [vmem:[%s2905 + $0x278] sm:$0xff]
      %v2986 = vld [vmem:[%s2905 + $0x280] sm:$0xff]
      %v2987 = vld [vmem:[%s2905 + $0x288] sm:$0xff]
      %v2988 = vld [vmem:[%s2905 + $0x290] sm:$0xff]
      %v2989 = vld [vmem:[%s2905 + $0x298] sm:$0xff]
      %v2990 = vld [vmem:[%s2905 + $0x2a0] sm:$0xff]
      %v2991 = vld [vmem:[%s2905 + $0x2a8] sm:$0xff]
      %v2992 = vld [vmem:[%s2905 + $0x2b0] sm:$0xff]
      %v2993 = vld [vmem:[%s2905 + $0x2b8] sm:$0xff]
      %v2994 = vld [vmem:[%s2905 + $0x2c0] sm:$0xff]
      %v2995 = vld [vmem:[%s2905 + $0x2c8] sm:$0xff]
      %v2996 = vld [vmem:[%s2905 + $0x2d0] sm:$0xff]
      %v2997 = vld [vmem:[%s2905 + $0x2d8] sm:$0xff]
      %v2998 = vld [vmem:[%s2905 + $0x2e0] sm:$0xff]
      %v2999 = vld [vmem:[%s2905 + $0x2e8] sm:$0xff]
      %v3000 = vld [vmem:[%s2905 + $0x2f0] sm:$0xff]
      %v3001 = vld [vmem:[%s2905 + $0x2f8] sm:$0xff]
      %v3002 = vld [vmem:[%s2905 + $0x300] sm:$0xff]
      %v3003 = vld [vmem:[%s2905 + $0x308] sm:$0xff]
      %v3004 = vld [vmem:[%s2905 + $0x310] sm:$0xff]
      %v3005 = vld [vmem:[%s2905 + $0x318] sm:$0xff]
      %v3006 = vld [vmem:[%s2905 + $0x320] sm:$0xff]
      %v3007 = vld [vmem:[%s2905 + $0x328] sm:$0xff]
      %v3008 = vld [vmem:[%s2905 + $0x330] sm:$0xff]
      %v3009 = vld [vmem:[%s2905 + $0x338] sm:$0xff]
      %v3010 = vld [vmem:[%s2905 + $0x340] sm:$0xff]
      %v3011 = vld [vmem:[%s2905 + $0x348] sm:$0xff]
      %v3012 = vld [vmem:[%s2905 + $0x350] sm:$0xff]
      %v3013 = vld [vmem:[%s2905 + $0x358] sm:$0xff]
      %v3014 = vld [vmem:[%s2905 + $0x360] sm:$0xff]
      %v3015 = vld [vmem:[%s2905 + $0x368] sm:$0xff]
      %v3016 = vld [vmem:[%s2905 + $0x370] sm:$0xff]
      %v3017 = vld [vmem:[%s2905 + $0x378] sm:$0xff]
      %v3018 = vld [vmem:[%s2905 + $0x380] sm:$0xff]
      %v3019 = vld [vmem:[%s2905 + $0x388] sm:$0xff]
      %v3020 = vld [vmem:[%s2905 + $0x390] sm:$0xff]
      %v3021 = vld [vmem:[%s2905 + $0x398] sm:$0xff]
      %v3022 = vld [vmem:[%s2905 + $0x3a0] sm:$0xff]
      %v3023 = vld [vmem:[%s2905 + $0x3a8] sm:$0xff]
      %v3024 = vld [vmem:[%s2905 + $0x3b0] sm:$0xff]
      %v3025 = vld [vmem:[%s2905 + $0x3b8] sm:$0xff]
      %v3026 = vld [vmem:[%s2905 + $0x3c0] sm:$0xff]
      %v3027 = vld [vmem:[%s2905 + $0x3c8] sm:$0xff]
      %v3028 = vld [vmem:[%s2905 + $0x3d0] sm:$0xff]
      %v3029 = vld [vmem:[%s2905 + $0x3d8] sm:$0xff]
      %v3030 = vld [vmem:[%s2905 + $0x3e0] sm:$0xff]
      %v3031 = vld [vmem:[%s2905 + $0x3e8] sm:$0xff]
      %v3032 = vld [vmem:[%s2905 + $0x3f0] sm:$0xff]
      %v3033 = vld [vmem:[%s2905 + $0x3f8] sm:$0xff]
      %v3034 = vld [vmem:[%s2905 + $0x400] sm:$0xff]
      %v3035 = vld [vmem:[%s2905 + $0x408] sm:$0xff]
      %v3036 = vld [vmem:[%s2905 + $0x410] sm:$0xff]
      %v3037 = vld [vmem:[%s2905 + $0x418] sm:$0xff]
      %v3038 = vld [vmem:[%s2905 + $0x420] sm:$0xff]
      %v3039 = vld [vmem:[%s2905 + $0x428] sm:$0xff]
      %v3040 = vld [vmem:[%s2905 + $0x430] sm:$0xff]
      %v3041 = vld [vmem:[%s2905 + $0x438] sm:$0xff]
      %v3042 = vld [vmem:[%s2905 + $0x440] sm:$0xff]
      %v3043 = vld [vmem:[%s2905 + $0x448] sm:$0xff]
      %v3044 = vld [vmem:[%s2905 + $0x450] sm:$0xff]
      %v3045 = vld [vmem:[%s2905 + $0x458] sm:$0xff]
      %v3046 = vld [vmem:[%s2905 + $0x460] sm:$0xff]
      %v3047 = vld [vmem:[%s2905 + $0x468] sm:$0xff]
      %v3048 = vld [vmem:[%s2905 + $0x470] sm:$0xff]
      %v3049 = vld [vmem:[%s2905 + $0x478] sm:$0xff]
      %s3050 = scalar_lea.vmem %s3, 1
      %v3051 = vld [vmem:[%s3050] sm:$0x1]
      %v3053 = vlaneseq
      %v3054 = vshrl.u32 %v3053, 7
      %v3055 = vsub.s32 0, %v3054
      %v3056 = vrot.slane %v3051, %v3055
      %3058 = vmatprep.subr.mxu0 0.0
      %3059 = vmatpush1.msra.mxu0 %v2906
      %3060 = vmatprep.subr.mxu0 0.0
      %3061 = vmatpush1.msra.mxu0 %v2907
      %3062 = vmatprep.subr.mxu0 0.0
      %3063 = vmatpush1.msra.mxu0 %v2908
      %3064 = vmatprep.subr.mxu0 0.0
      %3065 = vmatpush1.msra.mxu0 %v2909
      %3066 = vmatprep.subr.mxu0 0.0
      %3067 = vmatpush1.msra.mxu0 %v2910
      %3068 = vmatprep.subr.mxu0 0.0
      %3069 = vmatpush1.msra.mxu0 %v2911
      %3070 = vmatprep.subr.mxu0 0.0
      %3071 = vmatpush1.msra.mxu0 %v2912
      %3072 = vmatprep.subr.mxu0 0.0
      %3073 = vmatpush1.msra.mxu0 %v2913
      %3074 = vmatprep.subr.mxu0 0.0
      %3075 = vmatpush1.msra.mxu0 %v2914
      %3076 = vmatprep.subr.mxu0 0.0
      %3077 = vmatpush1.msra.mxu0 %v2915
      %3078 = vmatprep.subr.mxu0 0.0
      %3079 = vmatpush1.msra.mxu0 %v2916
      %3080 = vmatprep.subr.mxu0 0.0
      %3081 = vmatpush1.msra.mxu0 %v2917
      %3082 = vmatprep.subr.mxu0 0.0
      %3083 = vmatpush1.msra.mxu0 %v2918
      %3084 = vmatprep.subr.mxu0 0.0
      %3085 = vmatpush1.msra.mxu0 %v2919
      %3086 = vmatprep.subr.mxu0 0.0
      %3087 = vmatpush1.msra.mxu0 %v2920
      %3088 = vmatprep.subr.mxu0 0.0
      %3089 = vmatpush1.msra.mxu0 %v2921
      %3090 = vmatprep.subr.mxu0 0.0
      %3091 = vmatpush1.msra.mxu0 %v2922
      %3092 = vmatprep.subr.mxu0 0.0
      %3093 = vmatpush1.msra.mxu0 %v2923
      %3094 = vmatprep.subr.mxu0 0.0
      %3095 = vmatpush1.msra.mxu0 %v2924
      %3096 = vmatprep.subr.mxu0 0.0
      %3097 = vmatpush1.msra.mxu0 %v2925
      %3098 = vmatprep.subr.mxu0 0.0
      %3099 = vmatpush1.msra.mxu0 %v2926
      %3100 = vmatprep.subr.mxu0 0.0
      %3101 = vmatpush1.msra.mxu0 %v2927
      %3102 = vmatprep.subr.mxu0 0.0
      %3103 = vmatpush1.msra.mxu0 %v2928
      %3104 = vmatprep.subr.mxu0 0.0
      %3105 = vmatpush1.msra.mxu0 %v2929
      %3106 = vmatprep.subr.mxu0 0.0
      %3107 = vmatpush1.msra.mxu0 %v2930
      %3108 = vmatprep.subr.mxu0 0.0
      %3109 = vmatpush1.msra.mxu0 %v2931
      %3110 = vmatprep.subr.mxu0 0.0
      %3111 = vmatpush1.msra.mxu0 %v2932
      %3112 = vmatprep.subr.mxu0 0.0
      %3113 = vmatpush1.msra.mxu0 %v2933
      %3114 = vmatprep.subr.mxu0 0.0
      %3115 = vmatpush1.msra.mxu0 %v2934
      %3116 = vmatprep.subr.mxu0 0.0
      %3117 = vmatpush1.msra.mxu0 %v2935
      %3118 = vmatprep.subr.mxu0 0.0
      %3119 = vmatpush1.msra.mxu0 %v2936
      %3120 = vmatprep.subr.mxu0 0.0
      %3121 = vmatpush1.msra.mxu0 %v2937
      %3122 = vmatprep.mubr.f32.mxu0 %v2653
      %3123 = vmatmul.mubr.f32.gmra.mrb[0].mxu0 %v2612
      %v3124 = vpop.f32.mrb[0].mxu0
      %v3125 = vadd.f32 %v3056, %v3124
      %v3126 = vpop.f32.mrb[0].mxu0
      %3127 = vmatprep.mubr.f32.mxu0 %v2654
      %3128 = vmatmul.mubr.f32.gmra.mrb[0].mxu0 %v2613
      %v3129 = vpop.f32.mrb[0].mxu0
      %v3130 = vadd.f32 %v3056, %v3129
      %v3131 = vpop.f32.mrb[0].mxu0
      %3132 = vmatprep.mubr.f32.mxu0 %v2655
      %3133 = vmatmul.mubr.f32.gmra.mrb[0].mxu0 %v2614
      %v3134 = vpop.f32.mrb[0].mxu0
      %v3135 = vadd.f32 %v3056, %v3134
      %v3136 = vpop.f32.mrb[0].mxu0
      %3137 = vmatprep.mubr.f32.mxu0 %v2656
      %3138 = vmatmul.mubr.f32.gmra.mrb[0].mxu0 %v2615
      %v3139 = vpop.f32.mrb[0].mxu0
      %v3140 = vadd.f32 %v3056, %v3139
      %v3141 = vpop.f32.mrb[0].mxu0
      %3142 = vmatprep.mubr.f32.mxu0 %v2657
      %3143 = vmatmul.mubr.f32.gmra.mrb[0].mxu0 %v2616
      %v3144 = vpop.f32.mrb[0].mxu0
      %v3145 = vadd.f32 %v3056, %v3144
      %v3146 = vpop.f32.mrb[0].mxu0
      %3147 = vmatprep.mubr.f32.mxu0 %v2658
      %3148 = vmatmul.mubr.f32.gmra.mrb[0].mxu0 %v2617
      %v3149 = vpop.f32.mrb[0].mxu0
      %v3150 = vadd.f32 %v3056, %v3149
      %v3151 = vpop.f32.mrb[0].mxu0
      %3152 = vmatprep.mubr.f32.mxu0 %v2659
      %3153 = vmatmul.mubr.f32.gmra.mrb[0].mxu0 %v2618
      %v3154 = vpop.f32.mrb[0].mxu0
      %v3155 = vadd.f32 %v3056, %v3154
      %v3156 = vpop.f32.mrb[0].mxu0
      %3157 = vmatprep.mubr.f32.mxu0 %v2660
      %3158 = vmatmul.mubr.f32.gmra.mrb[0].mxu0 %v2619
      %v3159 = vpop.f32.mrb[0].mxu0
      %v3160 = vadd.f32 %v3056, %v3159
      %v3161 = vpop.f32.mrb[0].mxu0
      %3162 = vmatprep.mubr.f32.mxu0 %v2661
      %3163 = vmatmul.mubr.f32.gmra.mrb[0].mxu0 %v2620
      %v3164 = vpop.f32.mrb[0].mxu0
      %v3165 = vadd.f32 %v3056, %v3164
      %v3166 = vpop.f32.mrb[0].mxu0
      %3167 = vmatprep.mubr.f32.mxu0 %v2662
      %3168 = vmatmul.mubr.f32.gmra.mrb[0].mxu0 %v2621
      %v3169 = vpop.f32.mrb[0].mxu0
      %v3170 = vadd.f32 %v3056, %v3169
      %v3171 = vpop.f32.mrb[0].mxu0
      %3172 = vmatprep.mubr.f32.mxu0 %v2663
      %3173 = vmatmul.mubr.f32.gmra.mrb[0].mxu0 %v2622
      %v3174 = vpop.f32.mrb[0].mxu0
      %v3175 = vadd.f32 %v3056, %v3174
      %v3176 = vpop.f32.mrb[0].mxu0
      %3177 = vmatprep.mubr.f32.mxu0 %v2664
      %3178 = vmatmul.mubr.f32.gmra.mrb[0].mxu0 %v2623
      %v3179 = vpop.f32.mrb[0].mxu0
      %v3180 = vadd.f32 %v3056, %v3179
      %v3181 = vpop.f32.mrb[0].mxu0
      %3182 = vmatprep.mubr.f32.mxu0 %v2665
      %3183 = vmatmul.mubr.f32.gmra.mrb[0].mxu0 %v2624
      %v3184 = vpop.f32.mrb[0].mxu0
      %v3185 = vadd.f32 %v3056, %v3184
      %v3186 = vpop.f32.mrb[0].mxu0
      %3187 = vmatprep.mubr.f32.mxu0 %v2666
      %3188 = vmatmul.mubr.f32.gmra.mrb[0].mxu0 %v2625
      %v3189 = vpop.f32.mrb[0].mxu0
      %v3190 = vadd.f32 %v3056, %v3189
      %v3191 = vpop.f32.mrb[0].mxu0
      %3192 = vmatprep.mubr.f32.mxu0 %v2667
      %3193 = vmatmul.mubr.f32.gmra.mrb[0].mxu0 %v2626
      %v3194 = vpop.f32.mrb[0].mxu0
      %v3195 = vadd.f32 %v3056, %v3194
      %v3196 = vpop.f32.mrb[0].mxu0
      %3197 = vmatprep.mubr.f32.mxu0 %v2668
      %3198 = vmatmul.mubr.f32.gmra.mrb[0].mxu0 %v2627
      %v3199 = vpop.f32.mrb[0].mxu0
      %v3200 = vadd.f32 %v3056, %v3199
      %v3201 = vpop.f32.mrb[0].mxu0
      %3202 = vmatprep.mubr.f32.mxu0 %v2669
      %3203 = vmatmul.mubr.f32.gmra.mrb[0].mxu0 %v2628
      %v3204 = vpop.f32.mrb[0].mxu0
      %v3205 = vadd.f32 %v3056, %v3204
      %v3206 = vpop.f32.mrb[0].mxu0
      %3207 = vmatprep.mubr.f32.mxu0 %v2670
      %3208 = vmatmul.mubr.f32.gmra.mrb[0].mxu0 %v2629
      %v3209 = vpop.f32.mrb[0].mxu0
      %v3210 = vadd.f32 %v3056, %v3209
      %v3211 = vpop.f32.mrb[0].mxu0
      %3212 = vmatprep.mubr.f32.mxu0 %v2671
      %3213 = vmatmul.mubr.f32.gmra.mrb[0].mxu0 %v2630
      %v3214 = vpop.f32.mrb[0].mxu0
      %v3215 = vadd.f32 %v3056, %v3214
      %v3216 = vpop.f32.mrb[0].mxu0
      %3217 = vmatprep.mubr.f32.mxu0 %v2672
      %3218 = vmatmul.mubr.f32.gmra.mrb[0].mxu0 %v2631
      %v3219 = vpop.f32.mrb[0].mxu0
      %v3220 = vadd.f32 %v3056, %v3219
      %v3221 = vpop.f32.mrb[0].mxu0
      %3222 = vmatprep.mubr.f32.mxu0 %v2673
      %3223 = vmatmul.mubr.f32.gmra.mrb[0].mxu0 %v2632
      %v3224 = vpop.f32.mrb[0].mxu0
      %v3225 = vadd.f32 %v3056, %v3224
      %v3226 = vpop.f32.mrb[0].mxu0
      %3227 = vmatprep.mubr.f32.mxu0 %v2674
      %3228 = vmatmul.mubr.f32.gmra.mrb[0].mxu0 %v2633
      %v3229 = vpop.f32.mrb[0].mxu0
      %v3230 = vadd.f32 %v3056, %v3229
      %v3231 = vpop.f32.mrb[0].mxu0
      %3232 = vmatprep.mubr.f32.mxu0 %v2675
      %3233 = vmatmul.mubr.f32.gmra.mrb[0].mxu0 %v2634
      %v3234 = vpop.f32.mrb[0].mxu0
      %v3235 = vadd.f32 %v3056, %v3234
      %v3236 = vpop.f32.mrb[0].mxu0
      %3237 = vmatprep.mubr.f32.mxu0 %v2676
      %3238 = vmatmul.mubr.f32.gmra.mrb[0].mxu0 %v2635
      %v3239 = vpop.f32.mrb[0].mxu0
      %v3240 = vadd.f32 %v3056, %v3239
      %v3241 = vpop.f32.mrb[0].mxu0
      %3242 = vmatprep.mubr.f32.mxu0 %v2677
      %3243 = vmatmul.mubr.f32.gmra.mrb[0].mxu0 %v2636
      %v3244 = vpop.f32.mrb[0].mxu0
      %v3245 = vadd.f32 %v3056, %v3244
      %v3246 = vpop.f32.mrb[0].mxu0
      %3247 = vmatprep.mubr.f32.mxu0 %v2678
      %3248 = vmatmul.mubr.f32.gmra.mrb[0].mxu0 %v2637
      %v3249 = vpop.f32.mrb[0].mxu0
      %v3250 = vadd.f32 %v3056, %v3249
      %v3251 = vpop.f32.mrb[0].mxu0
      %3252 = vmatprep.mubr.f32.mxu0 %v2679
      %3253 = vmatmul.mubr.f32.gmra.mrb[0].mxu0 %v2638
      %v3254 = vpop.f32.mrb[0].mxu0
      %v3255 = vadd.f32 %v3056, %v3254
      %v3256 = vpop.f32.mrb[0].mxu0
      %3257 = vmatprep.mubr.f32.mxu0 %v2680
      %3258 = vmatmul.mubr.f32.gmra.mrb[0].mxu0 %v2639
      %v3259 = vpop.f32.mrb[0].mxu0
      %v3260 = vadd.f32 %v3056, %v3259
      %v3261 = vpop.f32.mrb[0].mxu0
      %3262 = vmatprep.mubr.f32.mxu0 %v2681
      %3263 = vmatmul.mubr.f32.gmra.mrb[0].mxu0 %v2640
      %v3264 = vpop.f32.mrb[0].mxu0
      %v3265 = vadd.f32 %v3056, %v3264
      %v3266 = vpop.f32.mrb[0].mxu0
      %3267 = vmatprep.mubr.f32.mxu0 %v2682
      %3268 = vmatmul.mubr.f32.gmra.mrb[0].mxu0 %v2641
      %v3269 = vpop.f32.mrb[0].mxu0
      %v3270 = vadd.f32 %v3056, %v3269
      %v3271 = vpop.f32.mrb[0].mxu0
      %3272 = vmatprep.mubr.f32.mxu0 %v2683
      %3273 = vmatmul.mubr.f32.gmra.mrb[0].mxu0 %v2642
      %v3274 = vpop.f32.mrb[0].mxu0
      %v3275 = vadd.f32 %v3056, %v3274
      %v3276 = vpop.f32.mrb[0].mxu0
      %3277 = vmatprep.mubr.f32.mxu0 %v2684
      %3278 = vmatmul.mubr.f32.gmra.mrb[0].mxu0 %v2643
      %v3279 = vpop.f32.mrb[0].mxu0
      %v3280 = vadd.f32 %v3056, %v3279
      %v3281 = vpop.f32.mrb[0].mxu0
      %3282 = vmatprep.mubr.f32.mxu0 %v2685
      %3283 = vmatmul.mubr.f32.gmra.mrb[0].mxu0 %v2644
      %v3284 = vpop.f32.mrb[0].mxu0
      %v3285 = vadd.f32 %v3056, %v3284
      %v3286 = vpop.f32.mrb[0].mxu0
      %3287 = vmatprep.mubr.f32.mxu0 %v2686
      %3288 = vmatmul.mubr.f32.gmra.mrb[0].mxu0 %v2645
      %v3289 = vpop.f32.mrb[0].mxu0
      %v3290 = vadd.f32 %v3056, %v3289
      %v3291 = vpop.f32.mrb[0].mxu0
      %3292 = vmatprep.mubr.f32.mxu0 %v2687
      %3293 = vmatmul.mubr.f32.gmra.mrb[0].mxu0 %v2646
      %v3294 = vpop.f32.mrb[0].mxu0
      %v3295 = vadd.f32 %v3056, %v3294
      %v3296 = vpop.f32.mrb[0].mxu0
      %3297 = vmatprep.mubr.f32.mxu0 %v2688
      %3298 = vmatmul.mubr.f32.gmra.mrb[0].mxu0 %v2647
      %v3299 = vpop.f32.mrb[0].mxu0
      %v3300 = vadd.f32 %v3056, %v3299
      %v3301 = vpop.f32.mrb[0].mxu0
      %3302 = vmatprep.mubr.f32.mxu0 %v2689
      %3303 = vmatmul.mubr.f32.gmra.mrb[0].mxu0 %v2648
      %v3304 = vpop.f32.mrb[0].mxu0
      %v3305 = vadd.f32 %v3056, %v3304
      %v3306 = vpop.f32.mrb[0].mxu0
      %3307 = vmatprep.mubr.f32.mxu0 %v2690
      %3308 = vmatmul.mubr.f32.gmra.mrb[0].mxu0 %v2649
      %v3309 = vpop.f32.mrb[0].mxu0
      %v3310 = vadd.f32 %v3056, %v3309
      %v3311 = vpop.f32.mrb[0].mxu0
      %3312 = vmatprep.mubr.f32.mxu0 %v2691
      %3313 = vmatmul.mubr.f32.gmra.mrb[0].mxu0 %v2650
      %v3314 = vpop.f32.mrb[0].mxu0
      %v3315 = vadd.f32 %v3056, %v3314
      %v3316 = vpop.f32.mrb[0].mxu0
      %3317 = vmatprep.mubr.f32.mxu0 %v2692
      %3318 = vmatmul.mubr.f32.gmra.mrb[0].mxu0 %v2651
      %v3319 = vpop.f32.mrb[0].mxu0
      %v3320 = vadd.f32 %v3056, %v3319
      %v3321 = vpop.f32.mrb[0].mxu0
      %3322 = vmatprep.mubr.f32.mxu0 %v2693
      %3323 = vmatmul.mubr.f32.gmra.mrb[0].mxu0 %v2652
      %v3324 = vpop.f32.mrb[0].mxu0
      %v3325 = vadd.f32 %v3056, %v3324
      %v3326 = vpop.f32.mrb[0].mxu0
      %3327 = vdwg.mxu0
      %3328 = vmatprep.subr.mxu0 0.0
      %3329 = vmatpush1.msra.mxu0 %v2938
      %3330 = vmatprep.subr.mxu0 0.0
      %3331 = vmatpush1.msra.mxu0 %v2939
      %3332 = vmatprep.subr.mxu0 0.0
      %3333 = vmatpush1.msra.mxu0 %v2940
      %3334 = vmatprep.subr.mxu0 0.0
      %3335 = vmatpush1.msra.mxu0 %v2941
      %3336 = vmatprep.subr.mxu0 0.0
      %3337 = vmatpush1.msra.mxu0 %v2942
      %3338 = vmatprep.subr.mxu0 0.0
      %3339 = vmatpush1.msra.mxu0 %v2943
      %3340 = vmatprep.subr.mxu0 0.0
      %3341 = vmatpush1.msra.mxu0 %v2944
      %3342 = vmatprep.subr.mxu0 0.0
      %3343 = vmatpush1.msra.mxu0 %v2945
      %3344 = vmatprep.subr.mxu0 0.0
      %3345 = vmatpush1.msra.mxu0 %v2946
      %3346 = vmatprep.subr.mxu0 0.0
      %3347 = vmatpush1.msra.mxu0 %v2947
      %3348 = vmatprep.subr.mxu0 0.0
      %3349 = vmatpush1.msra.mxu0 %v2948
      %3350 = vmatprep.subr.mxu0 0.0
      %3351 = vmatpush1.msra.mxu0 %v2949
      %3352 = vmatprep.subr.mxu0 0.0
      %3353 = vmatpush1.msra.mxu0 %v2950
      %3354 = vmatprep.subr.mxu0 0.0
      %3355 = vmatpush1.msra.mxu0 %v2951
      %3356 = vmatprep.subr.mxu0 0.0
      %3357 = vmatpush1.msra.mxu0 %v2952
      %3358 = vmatprep.subr.mxu0 0.0
      %3359 = vmatpush1.msra.mxu0 %v2953
      %3360 = vmatprep.subr.mxu0 0.0
      %3361 = vmatpush1.msra.mxu0 %v2954
      %3362 = vmatprep.subr.mxu0 0.0
      %3363 = vmatpush1.msra.mxu0 %v2955
      %3364 = vmatprep.subr.mxu0 0.0
      %3365 = vmatpush1.msra.mxu0 %v2956
      %3366 = vmatprep.subr.mxu0 0.0
      %3367 = vmatpush1.msra.mxu0 %v2957
      %3368 = vmatprep.subr.mxu0 0.0
      %3369 = vmatpush1.msra.mxu0 %v2958
      %3370 = vmatprep.subr.mxu0 0.0
      %3371 = vmatpush1.msra.mxu0 %v2959
      %3372 = vmatprep.subr.mxu0 0.0
      %3373 = vmatpush1.msra.mxu0 %v2960
      %3374 = vmatprep.subr.mxu0 0.0
      %3375 = vmatpush1.msra.mxu0 %v2961
      %3376 = vmatprep.subr.mxu0 0.0
      %3377 = vmatpush1.msra.mxu0 %v2962
      %3378 = vmatprep.subr.mxu0 0.0
      %3379 = vmatpush1.msra.mxu0 %v2963
      %3380 = vmatprep.subr.mxu0 0.0
      %3381 = vmatpush1.msra.mxu0 %v2964
      %3382 = vmatprep.subr.mxu0 0.0
      %3383 = vmatpush1.msra.mxu0 %v2965
      %3384 = vmatprep.subr.mxu0 0.0
      %3385 = vmatpush1.msra.mxu0 %v2966
      %3386 = vmatprep.subr.mxu0 0.0
      %3387 = vmatpush1.msra.mxu0 %v2967
      %3388 = vmatprep.subr.mxu0 0.0
      %3389 = vmatpush1.msra.mxu0 %v2968
      %3390 = vmatprep.subr.mxu0 0.0
      %3391 = vmatpush1.msra.mxu0 %v2969
      %3392 = vmatprep.mubr.f32.mxu0 %v2696
      %3393 = vmatmul.mubr.f32.gmra.mrb[0].mxu0 %v2694
      %v3394 = vpop.f32.mrb[0].mxu0
      %v3395 = vadd.f32 %v3125, %v3394
      %v3396 = vpop.f32.mrb[0].mxu0
      %3397 = vmatprep.mubr.f32.mxu0 %v2697
      %3398 = vmatmul.mubr.f32.gmra.mrb[0].mxu0 %v2695
      %v3399 = vpop.f32.mrb[0].mxu0
      %v3400 = vadd.f32 %v3130, %v3399
      %v3401 = vpop.f32.mrb[0].mxu0
      %3402 = vmatprep.mubr.f32.mxu0 %v2698
      %3403 = vmatmul.mubr.f32.gmra.mrb[0].mxu0 %v2696
      %v3404 = vpop.f32.mrb[0].mxu0
      %v3405 = vadd.f32 %v3135, %v3404
      %v3406 = vpop.f32.mrb[0].mxu0
      %3407 = vmatprep.mubr.f32.mxu0 %v2699
      %3408 = vmatmul.mubr.f32.gmra.mrb[0].mxu0 %v2697
      %v3409 = vpop.f32.mrb[0].mxu0
      %v3410 = vadd.f32 %v3140, %v3409
      %v3411 = vpop.f32.mrb[0].mxu0
      %3412 = vmatprep.mubr.f32.mxu0 %v2700
      %3413 = vmatmul.mubr.f32.gmra.mrb[0].mxu0 %v2698
      %v3414 = vpop.f32.mrb[0].mxu0
      %v3415 = vadd.f32 %v3145, %v3414
      %v3416 = vpop.f32.mrb[0].mxu0
      %3417 = vmatprep.mubr.f32.mxu0 %v2701
      %3418 = vmatmul.mubr.f32.gmra.mrb[0].mxu0 %v2699
      %v3419 = vpop.f32.mrb[0].mxu0
      %v3420 = vadd.f32 %v3150, %v3419
      %v3421 = vpop.f32.mrb[0].mxu0
      %3422 = vmatprep.mubr.f32.mxu0 %v2702
      %3423 = vmatmul.mubr.f32.gmra.mrb[0].mxu0 %v2700
      %v3424 = vpop.f32.mrb[0].mxu0
      %v3425 = vadd.f32 %v3155, %v3424
      %v3426 = vpop.f32.mrb[0].mxu0
      %3427 = vmatprep.mubr.f32.mxu0 %v2703
      %3428 = vmatmul.mubr.f32.gmra.mrb[0].mxu0 %v2701
      %v3429 = vpop.f32.mrb[0].mxu0
      %v3430 = vadd.f32 %v3160, %v3429
      %v3431 = vpop.f32.mrb[0].mxu0
      %3432 = vmatprep.mubr.f32.mxu0 %v2704
      %3433 = vmatmul.mubr.f32.gmra.mrb[0].mxu0 %v2702
      %v3434 = vpop.f32.mrb[0].mxu0
      %v3435 = vadd.f32 %v3165, %v3434
      %v3436 = vpop.f32.mrb[0].mxu0
      %3437 = vmatprep.mubr.f32.mxu0 %v2705
      %3438 = vmatmul.mubr.f32.gmra.mrb[0].mxu0 %v2703
      %v3439 = vpop.f32.mrb[0].mxu0
      %v3440 = vadd.f32 %v3170, %v3439
      %v3441 = vpop.f32.mrb[0].mxu0
      %3442 = vmatprep.mubr.f32.mxu0 %v2706
      %3443 = vmatmul.mubr.f32.gmra.mrb[0].mxu0 %v2704
      %v3444 = vpop.f32.mrb[0].mxu0
      %v3445 = vadd.f32 %v3175, %v3444
      %v3446 = vpop.f32.mrb[0].mxu0
      %3447 = vmatprep.mubr.f32.mxu0 %v2707
      %3448 = vmatmul.mubr.f32.gmra.mrb[0].mxu0 %v2705
      %v3449 = vpop.f32.mrb[0].mxu0
      %v3450 = vadd.f32 %v3180, %v3449
      %v3451 = vpop.f32.mrb[0].mxu0
      %3452 = vmatprep.mubr.f32.mxu0 %v2708
      %3453 = vmatmul.mubr.f32.gmra.mrb[0].mxu0 %v2706
      %v3454 = vpop.f32.mrb[0].mxu0
      %v3455 = vadd.f32 %v3185, %v3454
      %v3456 = vpop.f32.mrb[0].mxu0
      %3457 = vmatprep.mubr.f32.mxu0 %v2709
      %3458 = vmatmul.mubr.f32.gmra.mrb[0].mxu0 %v2707
      %v3459 = vpop.f32.mrb[0].mxu0
      %v3460 = vadd.f32 %v3190, %v3459
      %v3461 = vpop.f32.mrb[0].mxu0
      %3462 = vmatprep.mubr.f32.mxu0 %v2710
      %3463 = vmatmul.mubr.f32.gmra.mrb[0].mxu0 %v2708
      %v3464 = vpop.f32.mrb[0].mxu0
      %v3465 = vadd.f32 %v3195, %v3464
      %v3466 = vpop.f32.mrb[0].mxu0
      %3467 = vmatprep.mubr.f32.mxu0 %v2711
      %3468 = vmatmul.mubr.f32.gmra.mrb[0].mxu0 %v2709
      %v3469 = vpop.f32.mrb[0].mxu0
      %v3470 = vadd.f32 %v3200, %v3469
      %v3471 = vpop.f32.mrb[0].mxu0
      %3472 = vmatprep.mubr.f32.mxu0 %v2712
      %3473 = vmatmul.mubr.f32.gmra.mrb[0].mxu0 %v2710
      %v3474 = vpop.f32.mrb[0].mxu0
      %v3475 = vadd.f32 %v3205, %v3474
      %v3476 = vpop.f32.mrb[0].mxu0
      %3477 = vmatprep.mubr.f32.mxu0 %v2713
      %3478 = vmatmul.mubr.f32.gmra.mrb[0].mxu0 %v2711
      %v3479 = vpop.f32.mrb[0].mxu0
      %v3480 = vadd.f32 %v3210, %v3479
      %v3481 = vpop.f32.mrb[0].mxu0
      %3482 = vmatprep.mubr.f32.mxu0 %v2714
      %3483 = vmatmul.mubr.f32.gmra.mrb[0].mxu0 %v2712
      %v3484 = vpop.f32.mrb[0].mxu0
      %v3485 = vadd.f32 %v3215, %v3484
      %v3486 = vpop.f32.mrb[0].mxu0
      %3487 = vmatprep.mubr.f32.mxu0 %v2715
      %3488 = vmatmul.mubr.f32.gmra.mrb[0].mxu0 %v2713
      %v3489 = vpop.f32.mrb[0].mxu0
      %v3490 = vadd.f32 %v3220, %v3489
      %v3491 = vpop.f32.mrb[0].mxu0
      %3492 = vmatprep.mubr.f32.mxu0 %v2716
      %3493 = vmatmul.mubr.f32.gmra.mrb[0].mxu0 %v2714
      %v3494 = vpop.f32.mrb[0].mxu0
      %v3495 = vadd.f32 %v3225, %v3494
      %v3496 = vpop.f32.mrb[0].mxu0
      %3497 = vmatprep.mubr.f32.mxu0 %v2717
      %3498 = vmatmul.mubr.f32.gmra.mrb[0].mxu0 %v2715
      %v3499 = vpop.f32.mrb[0].mxu0
      %v3500 = vadd.f32 %v3230, %v3499
      %v3501 = vpop.f32.mrb[0].mxu0
      %3502 = vmatprep.mubr.f32.mxu0 %v2718
      %3503 = vmatmul.mubr.f32.gmra.mrb[0].mxu0 %v2716
      %v3504 = vpop.f32.mrb[0].mxu0
      %v3505 = vadd.f32 %v3235, %v3504
      %v3506 = vpop.f32.mrb[0].mxu0
      %3507 = vmatprep.mubr.f32.mxu0 %v2719
      %3508 = vmatmul.mubr.f32.gmra.mrb[0].mxu0 %v2717
      %v3509 = vpop.f32.mrb[0].mxu0
      %v3510 = vadd.f32 %v3240, %v3509
      %v3511 = vpop.f32.mrb[0].mxu0
      %3512 = vmatprep.mubr.f32.mxu0 %v2720
      %3513 = vmatmul.mubr.f32.gmra.mrb[0].mxu0 %v2718
      %v3514 = vpop.f32.mrb[0].mxu0
      %v3515 = vadd.f32 %v3245, %v3514
      %v3516 = vpop.f32.mrb[0].mxu0
      %3517 = vmatprep.mubr.f32.mxu0 %v2721
      %3518 = vmatmul.mubr.f32.gmra.mrb[0].mxu0 %v2719
      %v3519 = vpop.f32.mrb[0].mxu0
      %v3520 = vadd.f32 %v3250, %v3519
      %v3521 = vpop.f32.mrb[0].mxu0
      %3522 = vmatprep.mubr.f32.mxu0 %v2722
      %3523 = vmatmul.mubr.f32.gmra.mrb[0].mxu0 %v2720
      %v3524 = vpop.f32.mrb[0].mxu0
      %v3525 = vadd.f32 %v3255, %v3524
      %v3526 = vpop.f32.mrb[0].mxu0
      %3527 = vmatprep.mubr.f32.mxu0 %v2723
      %3528 = vmatmul.mubr.f32.gmra.mrb[0].mxu0 %v2721
      %v3529 = vpop.f32.mrb[0].mxu0
      %v3530 = vadd.f32 %v3260, %v3529
      %v3531 = vpop.f32.mrb[0].mxu0
      %3532 = vmatprep.mubr.f32.mxu0 %v2724
      %3533 = vmatmul.mubr.f32.gmra.mrb[0].mxu0 %v2722
      %v3534 = vpop.f32.mrb[0].mxu0
      %v3535 = vadd.f32 %v3265, %v3534
      %v3536 = vpop.f32.mrb[0].mxu0
      %3537 = vmatprep.mubr.f32.mxu0 %v2725
      %3538 = vmatmul.mubr.f32.gmra.mrb[0].mxu0 %v2723
      %v3539 = vpop.f32.mrb[0].mxu0
      %v3540 = vadd.f32 %v3270, %v3539
      %v3541 = vpop.f32.mrb[0].mxu0
      %3542 = vmatprep.mubr.f32.mxu0 %v2726
      %3543 = vmatmul.mubr.f32.gmra.mrb[0].mxu0 %v2724
      %v3544 = vpop.f32.mrb[0].mxu0
      %v3545 = vadd.f32 %v3275, %v3544
      %v3546 = vpop.f32.mrb[0].mxu0
      %3547 = vmatprep.mubr.f32.mxu0 %v2727
      %3548 = vmatmul.mubr.f32.gmra.mrb[0].mxu0 %v2725
      %v3549 = vpop.f32.mrb[0].mxu0
      %v3550 = vadd.f32 %v3280, %v3549
      %v3551 = vpop.f32.mrb[0].mxu0
      %3552 = vmatprep.mubr.f32.mxu0 %v2728
      %3553 = vmatmul.mubr.f32.gmra.mrb[0].mxu0 %v2726
      %v3554 = vpop.f32.mrb[0].mxu0
      %v3555 = vadd.f32 %v3285, %v3554
      %v3556 = vpop.f32.mrb[0].mxu0
      %3557 = vmatprep.mubr.f32.mxu0 %v2729
      %3558 = vmatmul.mubr.f32.gmra.mrb[0].mxu0 %v2727
      %v3559 = vpop.f32.mrb[0].mxu0
      %v3560 = vadd.f32 %v3290, %v3559
      %v3561 = vpop.f32.mrb[0].mxu0
      %3562 = vmatprep.mubr.f32.mxu0 %v2730
      %3563 = vmatmul.mubr.f32.gmra.mrb[0].mxu0 %v2728
      %v3564 = vpop.f32.mrb[0].mxu0
      %v3565 = vadd.f32 %v3295, %v3564
      %v3566 = vpop.f32.mrb[0].mxu0
      %3567 = vmatprep.mubr.f32.mxu0 %v2731
      %3568 = vmatmul.mubr.f32.gmra.mrb[0].mxu0 %v2729
      %v3569 = vpop.f32.mrb[0].mxu0
      %v3570 = vadd.f32 %v3300, %v3569
      %v3571 = vpop.f32.mrb[0].mxu0
      %3572 = vmatprep.mubr.f32.mxu0 %v2732
      %3573 = vmatmul.mubr.f32.gmra.mrb[0].mxu0 %v2730
      %v3574 = vpop.f32.mrb[0].mxu0
      %v3575 = vadd.f32 %v3305, %v3574
      %v3576 = vpop.f32.mrb[0].mxu0
      %3577 = vmatprep.mubr.f32.mxu0 %v2733
      %3578 = vmatmul.mubr.f32.gmra.mrb[0].mxu0 %v2731
      %v3579 = vpop.f32.mrb[0].mxu0
      %v3580 = vadd.f32 %v3310, %v3579
      %v3581 = vpop.f32.mrb[0].mxu0
      %3582 = vmatprep.mubr.f32.mxu0 %v2735
      %3583 = vmatmul.mubr.f32.gmra.mrb[0].mxu0 %v2732
      %v3584 = vpop.f32.mrb[0].mxu0
      %v3585 = vadd.f32 %v3315, %v3584
      %v3586 = vpop.f32.mrb[0].mxu0
      %3587 = vmatprep.mubr.f32.mxu0 %v2736
      %3588 = vmatmul.mubr.f32.gmra.mrb[0].mxu0 %v2733
      %v3589 = vpop.f32.mrb[0].mxu0
      %v3590 = vadd.f32 %v3320, %v3589
      %v3591 = vpop.f32.mrb[0].mxu0
      %3592 = vmatprep.mubr.f32.mxu0 %v2737
      %3593 = vmatmul.mubr.f32.gmra.mrb[0].mxu0 %v2734
      %v3594 = vpop.f32.mrb[0].mxu0
      %v3595 = vadd.f32 %v3325, %v3594
      %v3596 = vpop.f32.mrb[0].mxu0
      %3597 = vdwg.mxu0
      %3598 = vmatprep.subr.mxu0 0.0
      %3599 = vmatpush1.msra.mxu0 %v2970
      %3600 = vmatprep.subr.mxu0 0.0
      %3601 = vmatpush1.msra.mxu0 %v2971
      %3602 = vmatprep.subr.mxu0 0.0
      %3603 = vmatpush1.msra.mxu0 %v2972
      %3604 = vmatprep.subr.mxu0 0.0
      %3605 = vmatpush1.msra.mxu0 %v2973
      %3606 = vmatprep.subr.mxu0 0.0
      %3607 = vmatpush1.msra.mxu0 %v2974
      %3608 = vmatprep.subr.mxu0 0.0
      %3609 = vmatpush1.msra.mxu0 %v2975
      %3610 = vmatprep.subr.mxu0 0.0
      %3611 = vmatpush1.msra.mxu0 %v2976
      %3612 = vmatprep.subr.mxu0 0.0
      %3613 = vmatpush1.msra.mxu0 %v2977
      %3614 = vmatprep.subr.mxu0 0.0
      %3615 = vmatpush1.msra.mxu0 %v2978
      %3616 = vmatprep.subr.mxu0 0.0
      %3617 = vmatpush1.msra.mxu0 %v2979
      %3618 = vmatprep.subr.mxu0 0.0
      %3619 = vmatpush1.msra.mxu0 %v2980
      %3620 = vmatprep.subr.mxu0 0.0
      %3621 = vmatpush1.msra.mxu0 %v2981
      %3622 = vmatprep.subr.mxu0 0.0
      %3623 = vmatpush1.msra.mxu0 %v2982
      %3624 = vmatprep.subr.mxu0 0.0
      %3625 = vmatpush1.msra.mxu0 %v2983
      %3626 = vmatprep.subr.mxu0 0.0
      %3627 = vmatpush1.msra.mxu0 %v2984
      %3628 = vmatprep.subr.mxu0 0.0
      %3629 = vmatpush1.msra.mxu0 %v2985
      %3630 = vmatprep.subr.mxu0 0.0
      %3631 = vmatpush1.msra.mxu0 %v2986
      %3632 = vmatprep.subr.mxu0 0.0
      %3633 = vmatpush1.msra.mxu0 %v2987
      %3634 = vmatprep.subr.mxu0 0.0
      %3635 = vmatpush1.msra.mxu0 %v2988
      %3636 = vmatprep.subr.mxu0 0.0
      %3637 = vmatpush1.msra.mxu0 %v2989
      %3638 = vmatprep.subr.mxu0 0.0
      %3639 = vmatpush1.msra.mxu0 %v2990
      %3640 = vmatprep.subr.mxu0 0.0
      %3641 = vmatpush1.msra.mxu0 %v2991
      %3642 = vmatprep.subr.mxu0 0.0
      %3643 = vmatpush1.msra.mxu0 %v2992
      %3644 = vmatprep.subr.mxu0 0.0
      %3645 = vmatpush1.msra.mxu0 %v2993
      %3646 = vmatprep.subr.mxu0 0.0
      %3647 = vmatpush1.msra.mxu0 %v2994
      %3648 = vmatprep.subr.mxu0 0.0
      %3649 = vmatpush1.msra.mxu0 %v2995
      %3650 = vmatprep.subr.mxu0 0.0
      %3651 = vmatpush1.msra.mxu0 %v2996
      %3652 = vmatprep.subr.mxu0 0.0
      %3653 = vmatpush1.msra.mxu0 %v2997
      %3654 = vmatprep.subr.mxu0 0.0
      %3655 = vmatpush1.msra.mxu0 %v2998
      %3656 = vmatprep.subr.mxu0 0.0
      %3657 = vmatpush1.msra.mxu0 %v2999
      %3658 = vmatprep.subr.mxu0 0.0
      %3659 = vmatpush1.msra.mxu0 %v3000
      %3660 = vmatprep.subr.mxu0 0.0
      %3661 = vmatpush1.msra.mxu0 %v3001
      %3662 = vmatprep.mubr.f32.mxu0 %v2779
      %3663 = vmatmul.mubr.f32.gmra.mrb[0].mxu0 %v2738
      %v3664 = vpop.f32.mrb[0].mxu0
      %v3665 = vadd.f32 %v3395, %v3664
      %v3666 = vpop.f32.mrb[0].mxu0
      %3667 = vmatprep.mubr.f32.mxu0 %v2780
      %3668 = vmatmul.mubr.f32.gmra.mrb[0].mxu0 %v2739
      %v3669 = vpop.f32.mrb[0].mxu0
      %v3670 = vadd.f32 %v3400, %v3669
      %v3671 = vpop.f32.mrb[0].mxu0
      %3672 = vmatprep.mubr.f32.mxu0 %v2781
      %3673 = vmatmul.mubr.f32.gmra.mrb[0].mxu0 %v2740
      %v3674 = vpop.f32.mrb[0].mxu0
      %v3675 = vadd.f32 %v3405, %v3674
      %v3676 = vpop.f32.mrb[0].mxu0
      %3677 = vmatprep.mubr.f32.mxu0 %v2782
      %3678 = vmatmul.mubr.f32.gmra.mrb[0].mxu0 %v2741
      %v3679 = vpop.f32.mrb[0].mxu0
      %v3680 = vadd.f32 %v3410, %v3679
      %v3681 = vpop.f32.mrb[0].mxu0
      %3682 = vmatprep.mubr.f32.mxu0 %v2783
      %3683 = vmatmul.mubr.f32.gmra.mrb[0].mxu0 %v2742
      %v3684 = vpop.f32.mrb[0].mxu0
      %v3685 = vadd.f32 %v3415, %v3684
      %v3686 = vpop.f32.mrb[0].mxu0
      %3687 = vmatprep.mubr.f32.mxu0 %v2784
      %3688 = vmatmul.mubr.f32.gmra.mrb[0].mxu0 %v2743
      %v3689 = vpop.f32.mrb[0].mxu0
      %v3690 = vadd.f32 %v3420, %v3689
      %v3691 = vpop.f32.mrb[0].mxu0
      %3692 = vmatprep.mubr.f32.mxu0 %v2785
      %3693 = vmatmul.mubr.f32.gmra.mrb[0].mxu0 %v2744
      %v3694 = vpop.f32.mrb[0].mxu0
      %v3695 = vadd.f32 %v3425, %v3694
      %v3696 = vpop.f32.mrb[0].mxu0
      %3697 = vmatprep.mubr.f32.mxu0 %v2786
      %3698 = vmatmul.mubr.f32.gmra.mrb[0].mxu0 %v2745
      %v3699 = vpop.f32.mrb[0].mxu0
      %v3700 = vadd.f32 %v3430, %v3699
      %v3701 = vpop.f32.mrb[0].mxu0
      %3702 = vmatprep.mubr.f32.mxu0 %v2787
      %3703 = vmatmul.mubr.f32.gmra.mrb[0].mxu0 %v2746
      %v3704 = vpop.f32.mrb[0].mxu0
      %v3705 = vadd.f32 %v3435, %v3704
      %v3706 = vpop.f32.mrb[0].mxu0
      %3707 = vmatprep.mubr.f32.mxu0 %v2788
      %3708 = vmatmul.mubr.f32.gmra.mrb[0].mxu0 %v2747
      %v3709 = vpop.f32.mrb[0].mxu0
      %v3710 = vadd.f32 %v3440, %v3709
      %v3711 = vpop.f32.mrb[0].mxu0
      %3712 = vmatprep.mubr.f32.mxu0 %v2789
      %3713 = vmatmul.mubr.f32.gmra.mrb[0].mxu0 %v2748
      %v3714 = vpop.f32.mrb[0].mxu0
      %v3715 = vadd.f32 %v3445, %v3714
      %v3716 = vpop.f32.mrb[0].mxu0
      %3717 = vmatprep.mubr.f32.mxu0 %v2790
      %3718 = vmatmul.mubr.f32.gmra.mrb[0].mxu0 %v2749
      %v3719 = vpop.f32.mrb[0].mxu0
      %v3720 = vadd.f32 %v3450, %v3719
      %v3721 = vpop.f32.mrb[0].mxu0
      %3722 = vmatprep.mubr.f32.mxu0 %v2791
      %3723 = vmatmul.mubr.f32.gmra.mrb[0].mxu0 %v2750
      %v3724 = vpop.f32.mrb[0].mxu0
      %v3725 = vadd.f32 %v3455, %v3724
      %v3726 = vpop.f32.mrb[0].mxu0
      %3727 = vmatprep.mubr.f32.mxu0 %v2792
      %3728 = vmatmul.mubr.f32.gmra.mrb[0].mxu0 %v2751
      %v3729 = vpop.f32.mrb[0].mxu0
      %v3730 = vadd.f32 %v3460, %v3729
      %v3731 = vpop.f32.mrb[0].mxu0
      %3732 = vmatprep.mubr.f32.mxu0 %v2793
      %3733 = vmatmul.mubr.f32.gmra.mrb[0].mxu0 %v2752
      %v3734 = vpop.f32.mrb[0].mxu0
      %v3735 = vadd.f32 %v3465, %v3734
      %v3736 = vpop.f32.mrb[0].mxu0
      %3737 = vmatprep.mubr.f32.mxu0 %v2794
      %3738 = vmatmul.mubr.f32.gmra.mrb[0].mxu0 %v2753
      %v3739 = vpop.f32.mrb[0].mxu0
      %v3740 = vadd.f32 %v3470, %v3739
      %v3741 = vpop.f32.mrb[0].mxu0
      %3742 = vmatprep.mubr.f32.mxu0 %v2795
      %3743 = vmatmul.mubr.f32.gmra.mrb[0].mxu0 %v2754
      %v3744 = vpop.f32.mrb[0].mxu0
      %v3745 = vadd.f32 %v3475, %v3744
      %v3746 = vpop.f32.mrb[0].mxu0
      %3747 = vmatprep.mubr.f32.mxu0 %v2796
      %3748 = vmatmul.mubr.f32.gmra.mrb[0].mxu0 %v2755
      %v3749 = vpop.f32.mrb[0].mxu0
      %v3750 = vadd.f32 %v3480, %v3749
      %v3751 = vpop.f32.mrb[0].mxu0
      %3752 = vmatprep.mubr.f32.mxu0 %v2797
      %3753 = vmatmul.mubr.f32.gmra.mrb[0].mxu0 %v2756
      %v3754 = vpop.f32.mrb[0].mxu0
      %v3755 = vadd.f32 %v3485, %v3754
      %v3756 = vpop.f32.mrb[0].mxu0
      %3757 = vmatprep.mubr.f32.mxu0 %v2798
      %3758 = vmatmul.mubr.f32.gmra.mrb[0].mxu0 %v2757
      %v3759 = vpop.f32.mrb[0].mxu0
      %v3760 = vadd.f32 %v3490, %v3759
      %v3761 = vpop.f32.mrb[0].mxu0
      %3762 = vmatprep.mubr.f32.mxu0 %v2799
      %3763 = vmatmul.mubr.f32.gmra.mrb[0].mxu0 %v2758
      %v3764 = vpop.f32.mrb[0].mxu0
      %v3765 = vadd.f32 %v3495, %v3764
      %v3766 = vpop.f32.mrb[0].mxu0
      %3767 = vmatprep.mubr.f32.mxu0 %v2800
      %3768 = vmatmul.mubr.f32.gmra.mrb[0].mxu0 %v2759
      %v3769 = vpop.f32.mrb[0].mxu0
      %v3770 = vadd.f32 %v3500, %v3769
      %v3771 = vpop.f32.mrb[0].mxu0
      %3772 = vmatprep.mubr.f32.mxu0 %v2801
      %3773 = vmatmul.mubr.f32.gmra.mrb[0].mxu0 %v2760
      %v3774 = vpop.f32.mrb[0].mxu0
      %v3775 = vadd.f32 %v3505, %v3774
      %v3776 = vpop.f32.mrb[0].mxu0
      %3777 = vmatprep.mubr.f32.mxu0 %v2802
      %3778 = vmatmul.mubr.f32.gmra.mrb[0].mxu0 %v2761
      %v3779 = vpop.f32.mrb[0].mxu0
      %v3780 = vadd.f32 %v3510, %v3779
      %v3781 = vpop.f32.mrb[0].mxu0
      %3782 = vmatprep.mubr.f32.mxu0 %v2803
      %3783 = vmatmul.mubr.f32.gmra.mrb[0].mxu0 %v2762
      %v3784 = vpop.f32.mrb[0].mxu0
      %v3785 = vadd.f32 %v3515, %v3784
      %v3786 = vpop.f32.mrb[0].mxu0
      %3787 = vmatprep.mubr.f32.mxu0 %v2804
      %3788 = vmatmul.mubr.f32.gmra.mrb[0].mxu0 %v2763
      %v3789 = vpop.f32.mrb[0].mxu0
      %v3790 = vadd.f32 %v3520, %v3789
      %v3791 = vpop.f32.mrb[0].mxu0
      %3792 = vmatprep.mubr.f32.mxu0 %v2805
      %3793 = vmatmul.mubr.f32.gmra.mrb[0].mxu0 %v2764
      %v3794 = vpop.f32.mrb[0].mxu0
      %v3795 = vadd.f32 %v3525, %v3794
      %v3796 = vpop.f32.mrb[0].mxu0
      %3797 = vmatprep.mubr.f32.mxu0 %v2806
      %3798 = vmatmul.mubr.f32.gmra.mrb[0].mxu0 %v2765
      %v3799 = vpop.f32.mrb[0].mxu0
      %v3800 = vadd.f32 %v3530, %v3799
      %v3801 = vpop.f32.mrb[0].mxu0
      %3802 = vmatprep.mubr.f32.mxu0 %v2807
      %3803 = vmatmul.mubr.f32.gmra.mrb[0].mxu0 %v2766
      %v3804 = vpop.f32.mrb[0].mxu0
      %v3805 = vadd.f32 %v3535, %v3804
      %v3806 = vpop.f32.mrb[0].mxu0
      %3807 = vmatprep.mubr.f32.mxu0 %v2808
      %3808 = vmatmul.mubr.f32.gmra.mrb[0].mxu0 %v2767
      %v3809 = vpop.f32.mrb[0].mxu0
      %v3810 = vadd.f32 %v3540, %v3809
      %v3811 = vpop.f32.mrb[0].mxu0
      %3812 = vmatprep.mubr.f32.mxu0 %v2809
      %3813 = vmatmul.mubr.f32.gmra.mrb[0].mxu0 %v2768
      %v3814 = vpop.f32.mrb[0].mxu0
      %v3815 = vadd.f32 %v3545, %v3814
      %v3816 = vpop.f32.mrb[0].mxu0
      %3817 = vmatprep.mubr.f32.mxu0 %v2810
      %3818 = vmatmul.mubr.f32.gmra.mrb[0].mxu0 %v2769
      %v3819 = vpop.f32.mrb[0].mxu0
      %v3820 = vadd.f32 %v3550, %v3819
      %v3821 = vpop.f32.mrb[0].mxu0
      %3822 = vmatprep.mubr.f32.mxu0 %v2811
      %3823 = vmatmul.mubr.f32.gmra.mrb[0].mxu0 %v2770
      %v3824 = vpop.f32.mrb[0].mxu0
      %v3825 = vadd.f32 %v3555, %v3824
      %v3826 = vpop.f32.mrb[0].mxu0
      %3827 = vmatprep.mubr.f32.mxu0 %v2812
      %3828 = vmatmul.mubr.f32.gmra.mrb[0].mxu0 %v2771
      %v3829 = vpop.f32.mrb[0].mxu0
      %v3830 = vadd.f32 %v3560, %v3829
      %v3831 = vpop.f32.mrb[0].mxu0
      %3832 = vmatprep.mubr.f32.mxu0 %v2813
      %3833 = vmatmul.mubr.f32.gmra.mrb[0].mxu0 %v2772
      %v3834 = vpop.f32.mrb[0].mxu0
      %v3835 = vadd.f32 %v3565, %v3834
      %v3836 = vpop.f32.mrb[0].mxu0
      %3837 = vmatprep.mubr.f32.mxu0 %v2814
      %3838 = vmatmul.mubr.f32.gmra.mrb[0].mxu0 %v2773
      %v3839 = vpop.f32.mrb[0].mxu0
      %v3840 = vadd.f32 %v3570, %v3839
      %v3841 = vpop.f32.mrb[0].mxu0
      %3842 = vmatprep.mubr.f32.mxu0 %v2815
      %3843 = vmatmul.mubr.f32.gmra.mrb[0].mxu0 %v2774
      %v3844 = vpop.f32.mrb[0].mxu0
      %v3845 = vadd.f32 %v3575, %v3844
      %v3846 = vpop.f32.mrb[0].mxu0
      %3847 = vmatprep.mubr.f32.mxu0 %v2816
      %3848 = vmatmul.mubr.f32.gmra.mrb[0].mxu0 %v2775
      %v3849 = vpop.f32.mrb[0].mxu0
      %v3850 = vadd.f32 %v3580, %v3849
      %v3851 = vpop.f32.mrb[0].mxu0
      %3852 = vmatprep.mubr.f32.mxu0 %v2817
      %3853 = vmatmul.mubr.f32.gmra.mrb[0].mxu0 %v2776
      %v3854 = vpop.f32.mrb[0].mxu0
      %v3855 = vadd.f32 %v3585, %v3854
      %v3856 = vpop.f32.mrb[0].mxu0
      %3857 = vmatprep.mubr.f32.mxu0 %v2818
      %3858 = vmatmul.mubr.f32.gmra.mrb[0].mxu0 %v2777
      %v3859 = vpop.f32.mrb[0].mxu0
      %v3860 = vadd.f32 %v3590, %v3859
      %v3861 = vpop.f32.mrb[0].mxu0
      %3862 = vmatprep.mubr.f32.mxu0 %v2819
      %3863 = vmatmul.mubr.f32.gmra.mrb[0].mxu0 %v2778
      %v3864 = vpop.f32.mrb[0].mxu0
      %v3865 = vadd.f32 %v3595, %v3864
      %v3866 = vpop.f32.mrb[0].mxu0
      %3867 = vdwg.mxu0
      %3868 = vmatprep.subr.mxu0 0.0
      %3869 = vmatpush1.msra.mxu0 %v3002
      %3870 = vmatprep.subr.mxu0 0.0
      %3871 = vmatpush1.msra.mxu0 %v3003
      %3872 = vmatprep.subr.mxu0 0.0
      %3873 = vmatpush1.msra.mxu0 %v3004
      %3874 = vmatprep.subr.mxu0 0.0
      %3875 = vmatpush1.msra.mxu0 %v3005
      %3876 = vmatprep.subr.mxu0 0.0
      %3877 = vmatpush1.msra.mxu0 %v3006
      %3878 = vmatprep.subr.mxu0 0.0
      %3879 = vmatpush1.msra.mxu0 %v3007
      %3880 = vmatprep.subr.mxu0 0.0
      %3881 = vmatpush1.msra.mxu0 %v3008
      %3882 = vmatprep.subr.mxu0 0.0
      %3883 = vmatpush1.msra.mxu0 %v3009
      %3884 = vmatprep.subr.mxu0 0.0
      %3885 = vmatpush1.msra.mxu0 %v3010
      %3886 = vmatprep.subr.mxu0 0.0
      %3887 = vmatpush1.msra.mxu0 %v3011
      %3888 = vmatprep.subr.mxu0 0.0
      %3889 = vmatpush1.msra.mxu0 %v3012
      %3890 = vmatprep.subr.mxu0 0.0
      %3891 = vmatpush1.msra.mxu0 %v3013
      %3892 = vmatprep.subr.mxu0 0.0
      %3893 = vmatpush1.msra.mxu0 %v3014
      %3894 = vmatprep.subr.mxu0 0.0
      %3895 = vmatpush1.msra.mxu0 %v3015
      %3896 = vmatprep.subr.mxu0 0.0
      %3897 = vmatpush1.msra.mxu0 %v3016
      %3898 = vmatprep.subr.mxu0 0.0
      %3899 = vmatpush1.msra.mxu0 %v3017
      %3900 = vmatprep.subr.mxu0 0.0
      %3901 = vmatpush1.msra.mxu0 %v3018
      %3902 = vmatprep.subr.mxu0 0.0
      %3903 = vmatpush1.msra.mxu0 %v3019
      %3904 = vmatprep.subr.mxu0 0.0
      %3905 = vmatpush1.msra.mxu0 %v3020
      %3906 = vmatprep.subr.mxu0 0.0
      %3907 = vmatpush1.msra.mxu0 %v3021
      %3908 = vmatprep.subr.mxu0 0.0
      %3909 = vmatpush1.msra.mxu0 %v3022
      %3910 = vmatprep.subr.mxu0 0.0
      %3911 = vmatpush1.msra.mxu0 %v3023
      %3912 = vmatprep.subr.mxu0 0.0
      %3913 = vmatpush1.msra.mxu0 %v3024
      %3914 = vmatprep.subr.mxu0 0.0
      %3915 = vmatpush1.msra.mxu0 %v3025
      %3916 = vmatprep.subr.mxu0 0.0
      %3917 = vmatpush1.msra.mxu0 %v3026
      %3918 = vmatprep.subr.mxu0 0.0
      %3919 = vmatpush1.msra.mxu0 %v3027
      %3920 = vmatprep.subr.mxu0 0.0
      %3921 = vmatpush1.msra.mxu0 %v3028
      %3922 = vmatprep.subr.mxu0 0.0
      %3923 = vmatpush1.msra.mxu0 %v3029
      %3924 = vmatprep.subr.mxu0 0.0
      %3925 = vmatpush1.msra.mxu0 %v3030
      %3926 = vmatprep.subr.mxu0 0.0
      %3927 = vmatpush1.msra.mxu0 %v3031
      %3928 = vmatprep.subr.mxu0 0.0
      %3929 = vmatpush1.msra.mxu0 %v3032
      %3930 = vmatprep.subr.mxu0 0.0
      %3931 = vmatpush1.msra.mxu0 %v3033
      %3932 = vmatprep.mubr.f32.mxu0 %v2823
      %3933 = vmatmul.mubr.f32.gmra.mrb[0].mxu0 %v2781
      %v3934 = vpop.f32.mrb[0].mxu0
      %v3935 = vadd.f32 %v3665, %v3934
      %v3936 = vpop.f32.mrb[0].mxu0
      %3937 = vmatprep.mubr.f32.mxu0 %v2824
      %3938 = vmatmul.mubr.f32.gmra.mrb[0].mxu0 %v2782
      %v3939 = vpop.f32.mrb[0].mxu0
      %v3940 = vadd.f32 %v3670, %v3939
      %v3941 = vpop.f32.mrb[0].mxu0
      %3942 = vmatprep.mubr.f32.mxu0 %v2825
      %3943 = vmatmul.mubr.f32.gmra.mrb[0].mxu0 %v2783
      %v3944 = vpop.f32.mrb[0].mxu0
      %v3945 = vadd.f32 %v3675, %v3944
      %v3946 = vpop.f32.mrb[0].mxu0
      %3947 = vmatprep.mubr.f32.mxu0 %v2826
      %3948 = vmatmul.mubr.f32.gmra.mrb[0].mxu0 %v2784
      %v3949 = vpop.f32.mrb[0].mxu0
      %v3950 = vadd.f32 %v3680, %v3949
      %v3951 = vpop.f32.mrb[0].mxu0
      %3952 = vmatprep.mubr.f32.mxu0 %v2827
      %3953 = vmatmul.mubr.f32.gmra.mrb[0].mxu0 %v2785
      %v3954 = vpop.f32.mrb[0].mxu0
      %v3955 = vadd.f32 %v3685, %v3954
      %v3956 = vpop.f32.mrb[0].mxu0
      %3957 = vmatprep.mubr.f32.mxu0 %v2828
      %3958 = vmatmul.mubr.f32.gmra.mrb[0].mxu0 %v2786
      %v3959 = vpop.f32.mrb[0].mxu0
      %v3960 = vadd.f32 %v3690, %v3959
      %v3961 = vpop.f32.mrb[0].mxu0
      %3962 = vmatprep.mubr.f32.mxu0 %v2829
      %3963 = vmatmul.mubr.f32.gmra.mrb[0].mxu0 %v2787
      %v3964 = vpop.f32.mrb[0].mxu0
      %v3965 = vadd.f32 %v3695, %v3964
      %v3966 = vpop.f32.mrb[0].mxu0
      %3967 = vmatprep.mubr.f32.mxu0 %v2830
      %3968 = vmatmul.mubr.f32.gmra.mrb[0].mxu0 %v2788
      %v3969 = vpop.f32.mrb[0].mxu0
      %v3970 = vadd.f32 %v3700, %v3969
      %v3971 = vpop.f32.mrb[0].mxu0
      %3972 = vmatprep.mubr.f32.mxu0 %v2831
      %3973 = vmatmul.mubr.f32.gmra.mrb[0].mxu0 %v2789
      %v3974 = vpop.f32.mrb[0].mxu0
      %v3975 = vadd.f32 %v3705, %v3974
      %v3976 = vpop.f32.mrb[0].mxu0
      %3977 = vmatprep.mubr.f32.mxu0 %v2832
      %3978 = vmatmul.mubr.f32.gmra.mrb[0].mxu0 %v2790
      %v3979 = vpop.f32.mrb[0].mxu0
      %v3980 = vadd.f32 %v3710, %v3979
      %v3981 = vpop.f32.mrb[0].mxu0
      %3982 = vmatprep.mubr.f32.mxu0 %v2833
      %3983 = vmatmul.mubr.f32.gmra.mrb[0].mxu0 %v2791
      %v3984 = vpop.f32.mrb[0].mxu0
      %v3985 = vadd.f32 %v3715, %v3984
      %v3986 = vpop.f32.mrb[0].mxu0
      %3987 = vmatprep.mubr.f32.mxu0 %v2834
      %3988 = vmatmul.mubr.f32.gmra.mrb[0].mxu0 %v2792
      %v3989 = vpop.f32.mrb[0].mxu0
      %v3990 = vadd.f32 %v3720, %v3989
      %v3991 = vpop.f32.mrb[0].mxu0
      %3992 = vmatprep.mubr.f32.mxu0 %v2835
      %3993 = vmatmul.mubr.f32.gmra.mrb[0].mxu0 %v2793
      %v3994 = vpop.f32.mrb[0].mxu0
      %v3995 = vadd.f32 %v3725, %v3994
      %v3996 = vpop.f32.mrb[0].mxu0
      %3997 = vmatprep.mubr.f32.mxu0 %v2836
      %3998 = vmatmul.mubr.f32.gmra.mrb[0].mxu0 %v2794
      %v3999 = vpop.f32.mrb[0].mxu0
      %v4000 = vadd.f32 %v3730, %v3999
      %v4001 = vpop.f32.mrb[0].mxu0
      %4002 = vmatprep.mubr.f32.mxu0 %v2837
      %4003 = vmatmul.mubr.f32.gmra.mrb[0].mxu0 %v2795
      %v4004 = vpop.f32.mrb[0].mxu0
      %v4005 = vadd.f32 %v3735, %v4004
      %v4006 = vpop.f32.mrb[0].mxu0
      %4007 = vmatprep.mubr.f32.mxu0 %v2838
      %4008 = vmatmul.mubr.f32.gmra.mrb[0].mxu0 %v2796
      %v4009 = vpop.f32.mrb[0].mxu0
      %v4010 = vadd.f32 %v3740, %v4009
      %v4011 = vpop.f32.mrb[0].mxu0
      %4012 = vmatprep.mubr.f32.mxu0 %v2839
      %4013 = vmatmul.mubr.f32.gmra.mrb[0].mxu0 %v2797
      %v4014 = vpop.f32.mrb[0].mxu0
      %v4015 = vadd.f32 %v3745, %v4014
      %v4016 = vpop.f32.mrb[0].mxu0
      %4017 = vmatprep.mubr.f32.mxu0 %v2840
      %4018 = vmatmul.mubr.f32.gmra.mrb[0].mxu0 %v2798
      %v4019 = vpop.f32.mrb[0].mxu0
      %v4020 = vadd.f32 %v3750, %v4019
      %v4021 = vpop.f32.mrb[0].mxu0
      %4022 = vmatprep.mubr.f32.mxu0 %v2841
      %4023 = vmatmul.mubr.f32.gmra.mrb[0].mxu0 %v2799
      %v4024 = vpop.f32.mrb[0].mxu0
      %v4025 = vadd.f32 %v3755, %v4024
      %v4026 = vpop.f32.mrb[0].mxu0
      %4027 = vmatprep.mubr.f32.mxu0 %v2842
      %4028 = vmatmul.mubr.f32.gmra.mrb[0].mxu0 %v2800
      %v4029 = vpop.f32.mrb[0].mxu0
      %v4030 = vadd.f32 %v3760, %v4029
      %v4031 = vpop.f32.mrb[0].mxu0
      %4032 = vmatprep.mubr.f32.mxu0 %v2843
      %4033 = vmatmul.mubr.f32.gmra.mrb[0].mxu0 %v2801
      %v4034 = vpop.f32.mrb[0].mxu0
      %v4035 = vadd.f32 %v3765, %v4034
      %v4036 = vpop.f32.mrb[0].mxu0
      %4037 = vmatprep.mubr.f32.mxu0 %v2844
      %4038 = vmatmul.mubr.f32.gmra.mrb[0].mxu0 %v2802
      %v4039 = vpop.f32.mrb[0].mxu0
      %v4040 = vadd.f32 %v3770, %v4039
      %v4041 = vpop.f32.mrb[0].mxu0
      %4042 = vmatprep.mubr.f32.mxu0 %v2845
      %4043 = vmatmul.mubr.f32.gmra.mrb[0].mxu0 %v2803
      %v4044 = vpop.f32.mrb[0].mxu0
      %v4045 = vadd.f32 %v3775, %v4044
      %v4046 = vpop.f32.mrb[0].mxu0
      %4047 = vmatprep.mubr.f32.mxu0 %v2846
      %4048 = vmatmul.mubr.f32.gmra.mrb[0].mxu0 %v2804
      %v4049 = vpop.f32.mrb[0].mxu0
      %v4050 = vadd.f32 %v3780, %v4049
      %v4051 = vpop.f32.mrb[0].mxu0
      %4052 = vmatprep.mubr.f32.mxu0 %v2847
      %4053 = vmatmul.mubr.f32.gmra.mrb[0].mxu0 %v2805
      %v4054 = vpop.f32.mrb[0].mxu0
      %v4055 = vadd.f32 %v3785, %v4054
      %v4056 = vpop.f32.mrb[0].mxu0
      %4057 = vmatprep.mubr.f32.mxu0 %v2848
      %4058 = vmatmul.mubr.f32.gmra.mrb[0].mxu0 %v2806
      %v4059 = vpop.f32.mrb[0].mxu0
      %v4060 = vadd.f32 %v3790, %v4059
      %v4061 = vpop.f32.mrb[0].mxu0
      %4062 = vmatprep.mubr.f32.mxu0 %v2849
      %4063 = vmatmul.mubr.f32.gmra.mrb[0].mxu0 %v2807
      %v4064 = vpop.f32.mrb[0].mxu0
      %v4065 = vadd.f32 %v3795, %v4064
      %v4066 = vpop.f32.mrb[0].mxu0
      %4067 = vmatprep.mubr.f32.mxu0 %v2850
      %4068 = vmatmul.mubr.f32.gmra.mrb[0].mxu0 %v2808
      %v4069 = vpop.f32.mrb[0].mxu0
      %v4070 = vadd.f32 %v3800, %v4069
      %v4071 = vpop.f32.mrb[0].mxu0
      %4072 = vmatprep.mubr.f32.mxu0 %v2851
      %4073 = vmatmul.mubr.f32.gmra.mrb[0].mxu0 %v2809
      %v4074 = vpop.f32.mrb[0].mxu0
      %v4075 = vadd.f32 %v3805, %v4074
      %v4076 = vpop.f32.mrb[0].mxu0
      %4077 = vmatprep.mubr.f32.mxu0 %v2852
      %4078 = vmatmul.mubr.f32.gmra.mrb[0].mxu0 %v2810
      %v4079 = vpop.f32.mrb[0].mxu0
      %v4080 = vadd.f32 %v3810, %v4079
      %v4081 = vpop.f32.mrb[0].mxu0
      %4082 = vmatprep.mubr.f32.mxu0 %v2853
      %4083 = vmatmul.mubr.f32.gmra.mrb[0].mxu0 %v2811
      %v4084 = vpop.f32.mrb[0].mxu0
      %v4085 = vadd.f32 %v3815, %v4084
      %v4086 = vpop.f32.mrb[0].mxu0
      %4087 = vmatprep.mubr.f32.mxu0 %v2854
      %4088 = vmatmul.mubr.f32.gmra.mrb[0].mxu0 %v2812
      %v4089 = vpop.f32.mrb[0].mxu0
      %v4090 = vadd.f32 %v3820, %v4089
      %v4091 = vpop.f32.mrb[0].mxu0
      %4092 = vmatprep.mubr.f32.mxu0 %v2855
      %4093 = vmatmul.mubr.f32.gmra.mrb[0].mxu0 %v2813
      %v4094 = vpop.f32.mrb[0].mxu0
      %v4095 = vadd.f32 %v3825, %v4094
      %v4096 = vpop.f32.mrb[0].mxu0
      %4097 = vmatprep.mubr.f32.mxu0 %v2856
      %4098 = vmatmul.mubr.f32.gmra.mrb[0].mxu0 %v2814
      %v4099 = vpop.f32.mrb[0].mxu0
      %v4100 = vadd.f32 %v3830, %v4099
      %v4101 = vpop.f32.mrb[0].mxu0
      %4102 = vmatprep.mubr.f32.mxu0 %v2857
      %4103 = vmatmul.mubr.f32.gmra.mrb[0].mxu0 %v2815
      %v4104 = vpop.f32.mrb[0].mxu0
      %v4105 = vadd.f32 %v3835, %v4104
      %v4106 = vpop.f32.mrb[0].mxu0
      %4107 = vmatprep.mubr.f32.mxu0 %v2858
      %4108 = vmatmul.mubr.f32.gmra.mrb[0].mxu0 %v2816
      %v4109 = vpop.f32.mrb[0].mxu0
      %v4110 = vadd.f32 %v3840, %v4109
      %v4111 = vpop.f32.mrb[0].mxu0
      %4112 = vmatprep.mubr.f32.mxu0 %v2859
      %4113 = vmatmul.mubr.f32.gmra.mrb[0].mxu0 %v2817
      %v4114 = vpop.f32.mrb[0].mxu0
      %v4115 = vadd.f32 %v3845, %v4114
      %v4116 = vpop.f32.mrb[0].mxu0
      %4117 = vmatprep.mubr.f32.mxu0 %v2860
      %4118 = vmatmul.mubr.f32.gmra.mrb[0].mxu0 %v2818
      %v4119 = vpop.f32.mrb[0].mxu0
      %v4120 = vadd.f32 %v3850, %v4119
      %v4121 = vpop.f32.mrb[0].mxu0
      %4122 = vmatprep.mubr.f32.mxu0 %v2861
      %4123 = vmatmul.mubr.f32.gmra.mrb[0].mxu0 %v2820
      %v4124 = vpop.f32.mrb[0].mxu0
      %v4125 = vadd.f32 %v3855, %v4124
      %v4126 = vpop.f32.mrb[0].mxu0
      %4127 = vmatprep.mubr.f32.mxu0 %v2862
      %4128 = vmatmul.mubr.f32.gmra.mrb[0].mxu0 %v2821
      %v4129 = vpop.f32.mrb[0].mxu0
      %v4130 = vadd.f32 %v3860, %v4129
      %v4131 = vpop.f32.mrb[0].mxu0
      %4132 = vmatprep.mubr.f32.mxu0 %v2863
      %4133 = vmatmul.mubr.f32.gmra.mrb[0].mxu0 %v2822
      %v4134 = vpop.f32.mrb[0].mxu0
      %v4135 = vadd.f32 %v3865, %v4134
      %v4136 = vpop.f32.mrb[0].mxu0
      %4137 = vdwg.mxu0
      %4138 = vmatprep.subr.mxu0 0.0
      %4139 = vmatpush1.msra.mxu0 %v3034
      %4140 = vmatprep.subr.mxu0 0.0
      %4141 = vmatpush1.msra.mxu0 %v3035
      %4142 = vmatprep.subr.mxu0 0.0
      %4143 = vmatpush1.msra.mxu0 %v3036
      %4144 = vmatprep.subr.mxu0 0.0
      %4145 = vmatpush1.msra.mxu0 %v3037
      %4146 = vmatprep.subr.mxu0 0.0
      %4147 = vmatpush1.msra.mxu0 %v3038
      %4148 = vmatprep.subr.mxu0 0.0
      %4149 = vmatpush1.msra.mxu0 %v3039
      %4150 = vmatprep.subr.mxu0 0.0
      %4151 = vmatpush1.msra.mxu0 %v3040
      %4152 = vmatprep.subr.mxu0 0.0
      %4153 = vmatpush1.msra.mxu0 %v3041
      %4154 = vmatprep.subr.mxu0 0.0
      %4155 = vmatpush1.msra.mxu0 %v3042
      %4156 = vmatprep.subr.mxu0 0.0
      %4157 = vmatpush1.msra.mxu0 %v3043
      %4158 = vmatprep.subr.mxu0 0.0
      %4159 = vmatpush1.msra.mxu0 %v3044
      %4160 = vmatprep.subr.mxu0 0.0
      %4161 = vmatpush1.msra.mxu0 %v3045
      %4162 = vmatprep.subr.mxu0 0.0
      %4163 = vmatpush1.msra.mxu0 %v3046
      %4164 = vmatprep.subr.mxu0 0.0
      %4165 = vmatpush1.msra.mxu0 %v3047
      %4166 = vmatprep.subr.mxu0 0.0
      %4167 = vmatpush1.msra.mxu0 %v3048
      %4168 = vmatprep.subr.mxu0 0.0
      %4169 = vmatpush1.msra.mxu0 %v3049
      %4170 = vmatprep.subr.mxu0 0.0
      %4171 = vmatpush1.msra.mxu0 0.0
      %4172 = vmatprep.subr.mxu0 0.0
      %4173 = vmatpush1.msra.mxu0 0.0
      %4174 = vmatprep.subr.mxu0 0.0
      %4175 = vmatpush1.msra.mxu0 0.0
      %4176 = vmatprep.subr.mxu0 0.0
      %4177 = vmatpush1.msra.mxu0 0.0
      %4178 = vmatprep.subr.mxu0 0.0
      %4179 = vmatpush1.msra.mxu0 0.0
      %4180 = vmatprep.subr.mxu0 0.0
      %4181 = vmatpush1.msra.mxu0 0.0
      %4182 = vmatprep.subr.mxu0 0.0
      %4183 = vmatpush1.msra.mxu0 0.0
      %4184 = vmatprep.subr.mxu0 0.0
      %4185 = vmatpush1.msra.mxu0 0.0
      %4186 = vmatprep.subr.mxu0 0.0
      %4187 = vmatpush1.msra.mxu0 0.0
      %4188 = vmatprep.subr.mxu0 0.0
      %4189 = vmatpush1.msra.mxu0 0.0
      %4190 = vmatprep.subr.mxu0 0.0
      %4191 = vmatpush1.msra.mxu0 0.0
      %4192 = vmatprep.subr.mxu0 0.0
      %4193 = vmatpush1.msra.mxu0 0.0
      %4194 = vmatprep.subr.mxu0 0.0
      %4195 = vmatpush1.msra.mxu0 0.0
      %4196 = vmatprep.subr.mxu0 0.0
      %4197 = vmatpush1.msra.mxu0 0.0
      %4198 = vmatprep.subr.mxu0 0.0
      %4199 = vmatpush1.msra.mxu0 0.0
      %4200 = vmatprep.subr.mxu0 0.0
      %4201 = vmatpush1.msra.mxu0 0.0
      %4202 = vmatprep.mubr.f32.mxu0 0.0
      %4203 = vmatmul.mubr.f32.gmra.mrb[0].mxu0 %v2864
      %v4204 = vpop.f32.mrb[0].mxu0
      %v4205 = vadd.f32 %v3935, %v4204
      %v4206 = vpop.f32.mrb[0].mxu0
      %4207 = vmatprep.mubr.f32.mxu0 0.0
      %4208 = vmatmul.mubr.f32.gmra.mrb[0].mxu0 %v2865
      %v4209 = vpop.f32.mrb[0].mxu0
      %v4210 = vadd.f32 %v3940, %v4209
      %v4211 = vpop.f32.mrb[0].mxu0
      %4212 = vmatprep.mubr.f32.mxu0 0.0
      %4213 = vmatmul.mubr.f32.gmra.mrb[0].mxu0 %v2866
      %v4214 = vpop.f32.mrb[0].mxu0
      %v4215 = vadd.f32 %v3945, %v4214
      %v4216 = vpop.f32.mrb[0].mxu0
      %4217 = vmatprep.mubr.f32.mxu0 0.0
      %4218 = vmatmul.mubr.f32.gmra.mrb[0].mxu0 %v2867
      %v4219 = vpop.f32.mrb[0].mxu0
      %v4220 = vadd.f32 %v3950, %v4219
      %v4221 = vpop.f32.mrb[0].mxu0
      %4222 = vmatprep.mubr.f32.mxu0 0.0
      %4223 = vmatmul.mubr.f32.gmra.mrb[0].mxu0 %v2868
      %v4224 = vpop.f32.mrb[0].mxu0
      %v4225 = vadd.f32 %v3955, %v4224
      %v4226 = vpop.f32.mrb[0].mxu0
      %4227 = vmatprep.mubr.f32.mxu0 0.0
      %4228 = vmatmul.mubr.f32.gmra.mrb[0].mxu0 %v2869
      %v4229 = vpop.f32.mrb[0].mxu0
      %v4230 = vadd.f32 %v3960, %v4229
      %v4231 = vpop.f32.mrb[0].mxu0
      %4232 = vmatprep.mubr.f32.mxu0 0.0
      %4233 = vmatmul.mubr.f32.gmra.mrb[0].mxu0 %v2870
      %v4234 = vpop.f32.mrb[0].mxu0
      %v4235 = vadd.f32 %v3965, %v4234
      %v4236 = vpop.f32.mrb[0].mxu0
      %4237 = vmatprep.mubr.f32.mxu0 0.0
      %4238 = vmatmul.mubr.f32.gmra.mrb[0].mxu0 %v2871
      %v4239 = vpop.f32.mrb[0].mxu0
      %v4240 = vadd.f32 %v3970, %v4239
      %v4241 = vpop.f32.mrb[0].mxu0
      %4242 = vmatprep.mubr.f32.mxu0 0.0
      %4243 = vmatmul.mubr.f32.gmra.mrb[0].mxu0 %v2872
      %v4244 = vpop.f32.mrb[0].mxu0
      %v4245 = vadd.f32 %v3975, %v4244
      %v4246 = vpop.f32.mrb[0].mxu0
      %4247 = vmatprep.mubr.f32.mxu0 0.0
      %4248 = vmatmul.mubr.f32.gmra.mrb[0].mxu0 %v2873
      %v4249 = vpop.f32.mrb[0].mxu0
      %v4250 = vadd.f32 %v3980, %v4249
      %v4251 = vpop.f32.mrb[0].mxu0
      %4252 = vmatprep.mubr.f32.mxu0 0.0
      %4253 = vmatmul.mubr.f32.gmra.mrb[0].mxu0 %v2874
      %v4254 = vpop.f32.mrb[0].mxu0
      %v4255 = vadd.f32 %v3985, %v4254
      %v4256 = vpop.f32.mrb[0].mxu0
      %4257 = vmatprep.mubr.f32.mxu0 0.0
      %4258 = vmatmul.mubr.f32.gmra.mrb[0].mxu0 %v2875
      %v4259 = vpop.f32.mrb[0].mxu0
      %v4260 = vadd.f32 %v3990, %v4259
      %v4261 = vpop.f32.mrb[0].mxu0
      %4262 = vmatprep.mubr.f32.mxu0 0.0
      %4263 = vmatmul.mubr.f32.gmra.mrb[0].mxu0 %v2876
      %v4264 = vpop.f32.mrb[0].mxu0
      %v4265 = vadd.f32 %v3995, %v4264
      %v4266 = vpop.f32.mrb[0].mxu0
      %4267 = vmatprep.mubr.f32.mxu0 0.0
      %4268 = vmatmul.mubr.f32.gmra.mrb[0].mxu0 %v2877
      %v4269 = vpop.f32.mrb[0].mxu0
      %v4270 = vadd.f32 %v4000, %v4269
      %v4271 = vpop.f32.mrb[0].mxu0
      %4272 = vmatprep.mubr.f32.mxu0 0.0
      %4273 = vmatmul.mubr.f32.gmra.mrb[0].mxu0 %v2878
      %v4274 = vpop.f32.mrb[0].mxu0
      %v4275 = vadd.f32 %v4005, %v4274
      %v4276 = vpop.f32.mrb[0].mxu0
      %4277 = vmatprep.mubr.f32.mxu0 0.0
      %4278 = vmatmul.mubr.f32.gmra.mrb[0].mxu0 %v2879
      %v4279 = vpop.f32.mrb[0].mxu0
      %v4280 = vadd.f32 %v4010, %v4279
      %v4281 = vpop.f32.mrb[0].mxu0
      %4282 = vmatprep.mubr.f32.mxu0 0.0
      %4283 = vmatmul.mubr.f32.gmra.mrb[0].mxu0 %v2880
      %v4284 = vpop.f32.mrb[0].mxu0
      %v4285 = vadd.f32 %v4015, %v4284
      %v4286 = vpop.f32.mrb[0].mxu0
      %4287 = vmatprep.mubr.f32.mxu0 0.0
      %4288 = vmatmul.mubr.f32.gmra.mrb[0].mxu0 %v2881
      %v4289 = vpop.f32.mrb[0].mxu0
      %v4290 = vadd.f32 %v4020, %v4289
      %v4291 = vpop.f32.mrb[0].mxu0
      %4292 = vmatprep.mubr.f32.mxu0 0.0
      %4293 = vmatmul.mubr.f32.gmra.mrb[0].mxu0 %v2882
      %v4294 = vpop.f32.mrb[0].mxu0
      %v4295 = vadd.f32 %v4025, %v4294
      %v4296 = vpop.f32.mrb[0].mxu0
      %4297 = vmatprep.mubr.f32.mxu0 0.0
      %4298 = vmatmul.mubr.f32.gmra.mrb[0].mxu0 %v2883
      %v4299 = vpop.f32.mrb[0].mxu0
      %v4300 = vadd.f32 %v4030, %v4299
      %v4301 = vpop.f32.mrb[0].mxu0
      %4302 = vmatprep.mubr.f32.mxu0 0.0
      %4303 = vmatmul.mubr.f32.gmra.mrb[0].mxu0 %v2884
      %v4304 = vpop.f32.mrb[0].mxu0
      %v4305 = vadd.f32 %v4035, %v4304
      %v4306 = vpop.f32.mrb[0].mxu0
      %4307 = vmatprep.mubr.f32.mxu0 0.0
      %4308 = vmatmul.mubr.f32.gmra.mrb[0].mxu0 %v2885
      %v4309 = vpop.f32.mrb[0].mxu0
      %v4310 = vadd.f32 %v4040, %v4309
      %v4311 = vpop.f32.mrb[0].mxu0
      %4312 = vmatprep.mubr.f32.mxu0 0.0
      %4313 = vmatmul.mubr.f32.gmra.mrb[0].mxu0 %v2886
      %v4314 = vpop.f32.mrb[0].mxu0
      %v4315 = vadd.f32 %v4045, %v4314
      %v4316 = vpop.f32.mrb[0].mxu0
      %4317 = vmatprep.mubr.f32.mxu0 0.0
      %4318 = vmatmul.mubr.f32.gmra.mrb[0].mxu0 %v2887
      %v4319 = vpop.f32.mrb[0].mxu0
      %v4320 = vadd.f32 %v4050, %v4319
      %v4321 = vpop.f32.mrb[0].mxu0
      %4322 = vmatprep.mubr.f32.mxu0 0.0
      %4323 = vmatmul.mubr.f32.gmra.mrb[0].mxu0 %v2888
      %v4324 = vpop.f32.mrb[0].mxu0
      %v4325 = vadd.f32 %v4055, %v4324
      %v4326 = vpop.f32.mrb[0].mxu0
      %4327 = vmatprep.mubr.f32.mxu0 0.0
      %4328 = vmatmul.mubr.f32.gmra.mrb[0].mxu0 %v2889
      %v4329 = vpop.f32.mrb[0].mxu0
      %v4330 = vadd.f32 %v4060, %v4329
      %v4331 = vpop.f32.mrb[0].mxu0
      %4332 = vmatprep.mubr.f32.mxu0 0.0
      %4333 = vmatmul.mubr.f32.gmra.mrb[0].mxu0 %v2890
      %v4334 = vpop.f32.mrb[0].mxu0
      %v4335 = vadd.f32 %v4065, %v4334
      %v4336 = vpop.f32.mrb[0].mxu0
      %4337 = vmatprep.mubr.f32.mxu0 0.0
      %4338 = vmatmul.mubr.f32.gmra.mrb[0].mxu0 %v2891
      %v4339 = vpop.f32.mrb[0].mxu0
      %v4340 = vadd.f32 %v4070, %v4339
      %v4341 = vpop.f32.mrb[0].mxu0
      %4342 = vmatprep.mubr.f32.mxu0 0.0
      %4343 = vmatmul.mubr.f32.gmra.mrb[0].mxu0 %v2892
      %v4344 = vpop.f32.mrb[0].mxu0
      %v4345 = vadd.f32 %v4075, %v4344
      %v4346 = vpop.f32.mrb[0].mxu0
      %4347 = vmatprep.mubr.f32.mxu0 0.0
      %4348 = vmatmul.mubr.f32.gmra.mrb[0].mxu0 %v2893
      %v4349 = vpop.f32.mrb[0].mxu0
      %v4350 = vadd.f32 %v4080, %v4349
      %v4351 = vpop.f32.mrb[0].mxu0
      %4352 = vmatprep.mubr.f32.mxu0 0.0
      %4353 = vmatmul.mubr.f32.gmra.mrb[0].mxu0 %v2894
      %v4354 = vpop.f32.mrb[0].mxu0
      %v4355 = vadd.f32 %v4085, %v4354
      %v4356 = vpop.f32.mrb[0].mxu0
      %4357 = vmatprep.mubr.f32.mxu0 0.0
      %4358 = vmatmul.mubr.f32.gmra.mrb[0].mxu0 %v2895
      %v4359 = vpop.f32.mrb[0].mxu0
      %v4360 = vadd.f32 %v4090, %v4359
      %v4361 = vpop.f32.mrb[0].mxu0
      %4362 = vmatprep.mubr.f32.mxu0 0.0
      %4363 = vmatmul.mubr.f32.gmra.mrb[0].mxu0 %v2896
      %v4364 = vpop.f32.mrb[0].mxu0
      %v4365 = vadd.f32 %v4095, %v4364
      %v4366 = vpop.f32.mrb[0].mxu0
      %4367 = vmatprep.mubr.f32.mxu0 0.0
      %4368 = vmatmul.mubr.f32.gmra.mrb[0].mxu0 %v2897
      %v4369 = vpop.f32.mrb[0].mxu0
      %v4370 = vadd.f32 %v4100, %v4369
      %v4371 = vpop.f32.mrb[0].mxu0
      %4372 = vmatprep.mubr.f32.mxu0 0.0
      %4373 = vmatmul.mubr.f32.gmra.mrb[0].mxu0 %v2898
      %v4374 = vpop.f32.mrb[0].mxu0
      %v4375 = vadd.f32 %v4105, %v4374
      %v4376 = vpop.f32.mrb[0].mxu0
      %4377 = vmatprep.mubr.f32.mxu0 0.0
      %4378 = vmatmul.mubr.f32.gmra.mrb[0].mxu0 %v2899
      %v4379 = vpop.f32.mrb[0].mxu0
      %v4380 = vadd.f32 %v4110, %v4379
      %v4381 = vpop.f32.mrb[0].mxu0
      %4382 = vmatprep.mubr.f32.mxu0 0.0
      %4383 = vmatmul.mubr.f32.gmra.mrb[0].mxu0 %v2900
      %v4384 = vpop.f32.mrb[0].mxu0
      %v4385 = vadd.f32 %v4115, %v4384
      %v4386 = vpop.f32.mrb[0].mxu0
      %4387 = vmatprep.mubr.f32.mxu0 0.0
      %4388 = vmatmul.mubr.f32.gmra.mrb[0].mxu0 %v2901
      %v4389 = vpop.f32.mrb[0].mxu0
      %v4390 = vadd.f32 %v4120, %v4389
      %v4391 = vpop.f32.mrb[0].mxu0
      %4392 = vmatprep.mubr.f32.mxu0 0.0
      %4393 = vmatmul.mubr.f32.gmra.mrb[0].mxu0 %v2902
      %v4394 = vpop.f32.mrb[0].mxu0
      %v4395 = vadd.f32 %v4125, %v4394
      %v4396 = vpop.f32.mrb[0].mxu0
      %4397 = vmatprep.mubr.f32.mxu0 0.0
      %4398 = vmatmul.mubr.f32.gmra.mrb[0].mxu0 %v2903
      %v4399 = vpop.f32.mrb[0].mxu0
      %v4400 = vadd.f32 %v4130, %v4399
      %v4401 = vpop.f32.mrb[0].mxu0
      %4402 = vmatprep.mubr.f32.mxu0 0.0
      %4403 = vmatmul.mubr.f32.gmra.mrb[0].mxu0 %v2904
      %v4404 = vpop.f32.mrb[0].mxu0
      %v4405 = vadd.f32 %v4135, %v4404
      %v4406 = vpop.f32.mrb[0].mxu0
      %4407 = vdwg.mxu0
      %vm4408 = vcmp.ge.f32.partialorder %v4205, 0.0
      %vm4409 = vcmp.ge.f32.partialorder %v4210, 0.0
      %vm4410 = vcmp.ge.f32.partialorder %v4215, 0.0
      %vm4411 = vcmp.ge.f32.partialorder %v4220, 0.0
      %vm4412 = vcmp.ge.f32.partialorder %v4225, 0.0
      %vm4413 = vcmp.ge.f32.partialorder %v4230, 0.0
      %vm4414 = vcmp.ge.f32.partialorder %v4235, 0.0
      %vm4415 = vcmp.ge.f32.partialorder %v4240, 0.0
      %vm4416 = vcmp.ge.f32.partialorder %v4245, 0.0
      %vm4417 = vcmp.ge.f32.partialorder %v4250, 0.0
      %vm4418 = vcmp.ge.f32.partialorder %v4255, 0.0
      %vm4419 = vcmp.ge.f32.partialorder %v4260, 0.0
      %vm4420 = vcmp.ge.f32.partialorder %v4265, 0.0
      %vm4421 = vcmp.ge.f32.partialorder %v4270, 0.0
      %vm4422 = vcmp.ge.f32.partialorder %v4275, 0.0
      %vm4423 = vcmp.ge.f32.partialorder %v4280, 0.0
      %vm4424 = vcmp.ge.f32.partialorder %v4285, 0.0
      %vm4425 = vcmp.ge.f32.partialorder %v4290, 0.0
      %vm4426 = vcmp.ge.f32.partialorder %v4295, 0.0
      %vm4427 = vcmp.ge.f32.partialorder %v4300, 0.0
      %vm4428 = vcmp.ge.f32.partialorder %v4305, 0.0
      %vm4429 = vcmp.ge.f32.partialorder %v4310, 0.0
      %vm4430 = vcmp.ge.f32.partialorder %v4315, 0.0
      %vm4431 = vcmp.ge.f32.partialorder %v4320, 0.0
      %vm4432 = vcmp.ge.f32.partialorder %v4325, 0.0
      %vm4433 = vcmp.ge.f32.partialorder %v4330, 0.0
      %vm4434 = vcmp.ge.f32.partialorder %v4335, 0.0
      %vm4435 = vcmp.ge.f32.partialorder %v4340, 0.0
      %vm4436 = vcmp.ge.f32.partialorder %v4345, 0.0
      %vm4437 = vcmp.ge.f32.partialorder %v4350, 0.0
      %vm4438 = vcmp.ge.f32.partialorder %v4355, 0.0
      %vm4439 = vcmp.ge.f32.partialorder %v4360, 0.0
      %vm4440 = vcmp.ge.f32.partialorder %v4365, 0.0
      %vm4441 = vcmp.ge.f32.partialorder %v4370, 0.0
      %vm4442 = vcmp.ge.f32.partialorder %v4375, 0.0
      %vm4443 = vcmp.ge.f32.partialorder %v4380, 0.0
      %vm4444 = vcmp.ge.f32.partialorder %v4385, 0.0
      %vm4445 = vcmp.ge.f32.partialorder %v4390, 0.0
      %vm4446 = vcmp.ge.f32.partialorder %v4395, 0.0
      %vm4447 = vcmp.ge.f32.partialorder %v4400, 0.0
      %vm4448 = vcmp.ge.f32.partialorder %v4405, 0.0
      %v4449 = vmul.f32 %v4205, 0.1
      %v4450 = vmul.f32 %v4210, 0.1
      %v4451 = vmul.f32 %v4215, 0.1
      %v4452 = vmul.f32 %v4220, 0.1
      %v4453 = vmul.f32 %v4225, 0.1
      %v4454 = vmul.f32 %v4230, 0.1
      %v4455 = vmul.f32 %v4235, 0.1
      %v4456 = vmul.f32 %v4240, 0.1
      %v4457 = vmul.f32 %v4245, 0.1
      %v4458 = vmul.f32 %v4250, 0.1
      %v4459 = vmul.f32 %v4255, 0.1
      %v4460 = vmul.f32 %v4260, 0.1
      %v4461 = vmul.f32 %v4265, 0.1
      %v4462 = vmul.f32 %v4270, 0.1
      %v4463 = vmul.f32 %v4275, 0.1
      %v4464 = vmul.f32 %v4280, 0.1
      %v4465 = vmul.f32 %v4285, 0.1
      %v4466 = vmul.f32 %v4290, 0.1
      %v4467 = vmul.f32 %v4295, 0.1
      %v4468 = vmul.f32 %v4300, 0.1
      %v4469 = vmul.f32 %v4305, 0.1
      %v4470 = vmul.f32 %v4310, 0.1
      %v4471 = vmul.f32 %v4315, 0.1
      %v4472 = vmul.f32 %v4320, 0.1
      %v4473 = vmul.f32 %v4325, 0.1
      %v4474 = vmul.f32 %v4330, 0.1
      %v4475 = vmul.f32 %v4335, 0.1
      %v4476 = vmul.f32 %v4340, 0.1
      %v4477 = vmul.f32 %v4345, 0.1
      %v4478 = vmul.f32 %v4350, 0.1
      %v4479 = vmul.f32 %v4355, 0.1
      %v4480 = vmul.f32 %v4360, 0.1
      %v4481 = vmul.f32 %v4365, 0.1
      %v4482 = vmul.f32 %v4370, 0.1
      %v4483 = vmul.f32 %v4375, 0.1
      %v4484 = vmul.f32 %v4380, 0.1
      %v4485 = vmul.f32 %v4385, 0.1
      %v4486 = vmul.f32 %v4390, 0.1
      %v4487 = vmul.f32 %v4395, 0.1
      %v4488 = vmul.f32 %v4400, 0.1
      %v4489 = vmul.f32 %v4405, 0.1
      %v4490 = vsel %vm4408, %v4205, %v4449
      %v4491 = vsel %vm4409, %v4210, %v4450
      %v4492 = vsel %vm4410, %v4215, %v4451
      %v4493 = vsel %vm4411, %v4220, %v4452
      %v4494 = vsel %vm4412, %v4225, %v4453
      %v4495 = vsel %vm4413, %v4230, %v4454
      %v4496 = vsel %vm4414, %v4235, %v4455
      %v4497 = vsel %vm4415, %v4240, %v4456
      %v4498 = vsel %vm4416, %v4245, %v4457
      %v4499 = vsel %vm4417, %v4250, %v4458
      %v4500 = vsel %vm4418, %v4255, %v4459
      %v4501 = vsel %vm4419, %v4260, %v4460
      %v4502 = vsel %vm4420, %v4265, %v4461
      %v4503 = vsel %vm4421, %v4270, %v4462
      %v4504 = vsel %vm4422, %v4275, %v4463
      %v4505 = vsel %vm4423, %v4280, %v4464
      %v4506 = vsel %vm4424, %v4285, %v4465
      %v4507 = vsel %vm4425, %v4290, %v4466
      %v4508 = vsel %vm4426, %v4295, %v4467
      %v4509 = vsel %vm4427, %v4300, %v4468
      %v4510 = vsel %vm4428, %v4305, %v4469
      %v4511 = vsel %vm4429, %v4310, %v4470
      %v4512 = vsel %vm4430, %v4315, %v4471
      %v4513 = vsel %vm4431, %v4320, %v4472
      %v4514 = vsel %vm4432, %v4325, %v4473
      %v4515 = vsel %vm4433, %v4330, %v4474
      %v4516 = vsel %vm4434, %v4335, %v4475
      %v4517 = vsel %vm4435, %v4340, %v4476
      %v4518 = vsel %vm4436, %v4345, %v4477
      %v4519 = vsel %vm4437, %v4350, %v4478
      %v4520 = vsel %vm4438, %v4355, %v4479
      %v4521 = vsel %vm4439, %v4360, %v4480
      %v4522 = vsel %vm4440, %v4365, %v4481
      %v4523 = vsel %vm4441, %v4370, %v4482
      %v4524 = vsel %vm4442, %v4375, %v4483
      %v4525 = vsel %vm4443, %v4380, %v4484
      %v4526 = vsel %vm4444, %v4385, %v4485
      %v4527 = vsel %vm4445, %v4390, %v4486
      %v4528 = vsel %vm4446, %v4395, %v4487
      %v4529 = vsel %vm4447, %v4400, %v4488
      %v4530 = vsel %vm4448, %v4405, %v4489
      %v4531 = vmul.f32 %v4490, %v2287
      %v4532 = vmul.f32 %v4491, %v2292
      %v4533 = vmul.f32 %v4492, %v2297
      %v4534 = vmul.f32 %v4493, %v2302
      %v4535 = vmul.f32 %v4494, %v2307
      %v4536 = vmul.f32 %v4495, %v2312
      %v4537 = vmul.f32 %v4496, %v2317
      %v4538 = vmul.f32 %v4497, %v2322
      %v4539 = vmul.f32 %v4498, %v2327
      %v4540 = vmul.f32 %v4499, %v2332
      %v4541 = vmul.f32 %v4500, %v2337
      %v4542 = vmul.f32 %v4501, %v2342
      %v4543 = vmul.f32 %v4502, %v2347
      %v4544 = vmul.f32 %v4503, %v2352
      %v4545 = vmul.f32 %v4504, %v2357
      %v4546 = vmul.f32 %v4505, %v2362
      %v4547 = vmul.f32 %v4506, %v2367
      %v4548 = vmul.f32 %v4507, %v2372
      %v4549 = vmul.f32 %v4508, %v2377
      %v4550 = vmul.f32 %v4509, %v2382
      %v4551 = vmul.f32 %v4510, %v2387
      %v4552 = vmul.f32 %v4511, %v2392
      %v4553 = vmul.f32 %v4512, %v2397
      %v4554 = vmul.f32 %v4513, %v2402
      %v4555 = vmul.f32 %v4514, %v2407
      %v4556 = vmul.f32 %v4515, %v2412
      %v4557 = vmul.f32 %v4516, %v2417
      %v4558 = vmul.f32 %v4517, %v2422
      %v4559 = vmul.f32 %v4518, %v2427
      %v4560 = vmul.f32 %v4519, %v2432
      %v4561 = vmul.f32 %v4520, %v2437
      %v4562 = vmul.f32 %v4521, %v2442
      %v4563 = vmul.f32 %v4522, %v2447
      %v4564 = vmul.f32 %v4523, %v2452
      %v4565 = vmul.f32 %v4524, %v2457
      %v4566 = vmul.f32 %v4525, %v2462
      %v4567 = vmul.f32 %v4526, %v2467
      %v4568 = vmul.f32 %v4527, %v2472
      %v4569 = vmul.f32 %v4528, %v2477
      %v4570 = vmul.f32 %v4529, %v2482
      %v4571 = vmul.f32 %v4530, %v2487
      %v4572 = vadd.f32 %v2738, %v4531
      %v4573 = vadd.f32 %v2739, %v4532
      %v4574 = vadd.f32 %v2740, %v4533
      %v4575 = vadd.f32 %v2741, %v4534
      %v4576 = vadd.f32 %v2742, %v4535
      %v4577 = vadd.f32 %v2743, %v4536
      %v4578 = vadd.f32 %v2744, %v4537
      %v4579 = vadd.f32 %v2745, %v4538
      %v4580 = vadd.f32 %v2746, %v4539
      %v4581 = vadd.f32 %v2747, %v4540
      %v4582 = vadd.f32 %v2748, %v4541
      %v4583 = vadd.f32 %v2749, %v4542
      %v4584 = vadd.f32 %v2750, %v4543
      %v4585 = vadd.f32 %v2751, %v4544
      %v4586 = vadd.f32 %v2752, %v4545
      %v4587 = vadd.f32 %v2753, %v4546
      %v4588 = vadd.f32 %v2754, %v4547
      %v4589 = vadd.f32 %v2755, %v4548
      %v4590 = vadd.f32 %v2756, %v4549
      %v4591 = vadd.f32 %v2757, %v4550
      %v4592 = vadd.f32 %v2758, %v4551
      %v4593 = vadd.f32 %v2759, %v4552
      %v4594 = vadd.f32 %v2760, %v4553
      %v4595 = vadd.f32 %v2761, %v4554
      %v4596 = vadd.f32 %v2762, %v4555
      %v4597 = vadd.f32 %v2763, %v4556
      %v4598 = vadd.f32 %v2764, %v4557
      %v4599 = vadd.f32 %v2765, %v4558
      %v4600 = vadd.f32 %v2766, %v4559
      %v4601 = vadd.f32 %v2767, %v4560
      %v4602 = vadd.f32 %v2768, %v4561
      %v4603 = vadd.f32 %v2769, %v4562
      %v4604 = vadd.f32 %v2770, %v4563
      %v4605 = vadd.f32 %v2771, %v4564
      %v4606 = vadd.f32 %v2772, %v4565
      %v4607 = vadd.f32 %v2773, %v4566
      %v4608 = vadd.f32 %v2774, %v4567
      %v4609 = vadd.f32 %v2775, %v4568
      %v4610 = vadd.f32 %v2776, %v4569
      %v4611 = vadd.f32 %v2777, %v4570
      %v4612 = vadd.f32 %v2778, %v4571
      %4613 = vst [vmem:[%s197 + $0x13] sm:$0xff] %v4572
      %4614 = vst [vmem:[%s197 + $0x1b] sm:$0xff] %v4573
      %4615 = vst [vmem:[%s197 + $0x23] sm:$0xff] %v4574
      %4616 = vst [vmem:[%s197 + $0x2b] sm:$0xff] %v4575
      %4617 = vst [vmem:[%s197 + $0x33] sm:$0xff] %v4576
      %4618 = vst [vmem:[%s197 + $0x3b] sm:$0xff] %v4577
      %4619 = vst [vmem:[%s197 + $0x43] sm:$0xff] %v4578
      %4620 = vst [vmem:[%s197 + $0x4b] sm:$0xff] %v4579
      %4621 = vst [vmem:[%s197 + $0x53] sm:$0xff] %v4580
      %4622 = vst [vmem:[%s197 + $0x5b] sm:$0xff] %v4581
      %4623 = vst [vmem:[%s197 + $0x63] sm:$0xff] %v4582
      %4624 = vst [vmem:[%s197 + $0x6b] sm:$0xff] %v4583
      %4625 = vst [vmem:[%s197 + $0x73] sm:$0xff] %v4584
      %4626 = vst [vmem:[%s197 + $0x7b] sm:$0xff] %v4585
      %4627 = vst [vmem:[%s197 + $0x83] sm:$0xff] %v4586
      %4628 = vst [vmem:[%s197 + $0x8b] sm:$0xff] %v4587
      %4629 = vst [vmem:[%s197 + $0x93] sm:$0xff] %v4588
      %4630 = vst [vmem:[%s197 + $0x9b] sm:$0xff] %v4589
      %4631 = vst [vmem:[%s197 + $0xa3] sm:$0xff] %v4590
      %4632 = vst [vmem:[%s197 + $0xab] sm:$0xff] %v4591
      %4633 = vst [vmem:[%s197 + $0xb3] sm:$0xff] %v4592
      %4634 = vst [vmem:[%s197 + $0xbb] sm:$0xff] %v4593
      %4635 = vst [vmem:[%s197 + $0xc3] sm:$0xff] %v4594
      %4636 = vst [vmem:[%s197 + $0xcb] sm:$0xff] %v4595
      %4637 = vst [vmem:[%s197 + $0xd3] sm:$0xff] %v4596
      %4638 = vst [vmem:[%s197 + $0xdb] sm:$0xff] %v4597
      %4639 = vst [vmem:[%s197 + $0xe3] sm:$0xff] %v4598
      %4640 = vst [vmem:[%s197 + $0xeb] sm:$0xff] %v4599
      %4641 = vst [vmem:[%s197 + $0xf3] sm:$0xff] %v4600
      %4642 = vst [vmem:[%s197 + $0xfb] sm:$0xff] %v4601
      %4643 = vst [vmem:[%s197 + $0x103] sm:$0xff] %v4602
      %4644 = vst [vmem:[%s197 + $0x10b] sm:$0xff] %v4603
      %4645 = vst [vmem:[%s197 + $0x113] sm:$0xff] %v4604
      %4646 = vst [vmem:[%s197 + $0x11b] sm:$0xff] %v4605
      %4647 = vst [vmem:[%s197 + $0x123] sm:$0xff] %v4606
      %4648 = vst [vmem:[%s197 + $0x12b] sm:$0xff] %v4607
      %4649 = vst [vmem:[%s197 + $0x133] sm:$0xff] %v4608
      %4650 = vst [vmem:[%s197 + $0x13b] sm:$0xff] %v4609
      %4651 = vst [vmem:[%s197 + $0x143] sm:$0xff] %v4610
      %4652 = vst [vmem:[%s197 + $0x14b] sm:$0xff] %v4611
      %4653 = vst [vmem:[%s197 + $0x153] sm:$0xf] %v4612
      %p4654 = scmp.lt.s32.totalorder %s15, 1
      %s4655 = scalar_select %p4654, %s15, 1
      %s4656 = smul.addr %s4655, 46
      %s4657 = smul.addr %s4656, 8
      %s4658 = scalar_lea.vmem %s4, %s4657
      // Predicated region
      $region37: #{densenet_forward.1} parent=35 // pred_check
        %p4659 = pneg %p122
      $region38: #{densenet_forward.1} parent=35 // pred_check_branch
        %4661 = sbr.rel (%p4659) target = $region40
      $region39: #{densenet_forward.1} parent=35 // pred_region
        _
      $region40: #{densenet_forward.1} parent=35 // pred_fallthru
        _
    $region36: #{densenet_forward.1} parent=5 // pred_fallthru
      _
    %p4662 = scmp.le.s32.totalorder 2, %s10
    // Predicated region
    $region41: #{densenet_forward.1} parent=5 // pred_check
      %p4663 = pneg %p4662
    $region42: #{densenet_forward.1} parent=5 // pred_check_branch
      %4665 = sbr.rel (%p4663) target = $region44
    $region43: #{densenet_forward.1} parent=5 // pred_region
      %s4666 = ssub.s32 %s10, 2
      // Predicated region
      $region45: #{densenet_forward.1} parent=43 // pred_check
        %p4667 = pneg %p128
      $region46: #{densenet_forward.1} parent=43 // pred_check_branch
        %4669 = sbr.rel (%p4667) target = $region48
      $region47: #{densenet_forward.1} parent=43 // pred_region
        %p4670 = scmp.lt.s32.totalorder %s16, 1
        %s4671 = scalar_select %p4670, %s16, 1
        %s4672 = smul.addr %s4671, 46
        %s4673 = smul.addr %s4672, 8
        %s4674 = scalar_lea.vmem %s4, %s4673
      $region48: #{densenet_forward.1} parent=43 // pred_fallthru
        _
    $region44: #{densenet_forward.1} parent=5 // pred_fallthru
      _
  $region6: #{densenet_forward.1} parent=0 // loop_footer
    %s14 = sadd.s32 1, %s10
  $region7: #{densenet_forward.1} parent=0 // loop_footer_branch
    %9 = sbr.rel target = $region3
  $region8: #{densenet_forward.1} parent=0 // loop_exit
    _

</llo_original>
